<compile_context>
chip_gen: v7x
topology: tpu7x:2x2x1
jax: 0.10.0
libtpu: 0.0.40
codegen_flags: <defaults>
</compile_context>

<pallas_src>
import jax
import jax.numpy as jnp
from jax.experimental import pallas as pl
from jax.experimental.pallas import tpu as pltpu

INPUT_SIZE = 10
HIDDEN_SIZE = 20
NUM_LAYERS = 3
OUT_SIZE = 10


def _lstm_fc_kernel(x_ref,                      # (T*B, I) time-major, flattened
                    wih0_ref, whh0_ref, b0_ref,  # layer 0: (I,4H), (H,4H), (1,4H)
                    w1_ref, b1_ref,              # layer 1: stacked (2H,4H), (1,4H)
                    w2_ref, b2_ref,              # layer 2: stacked (2H,4H), (1,4H)
                    fcw_ref, fcb_ref,            # (H, OUT), (1, OUT)
                    out_ref):                    # (B, OUT)
    """3-layer stacked LSTM over the full sequence + final Linear on last hidden."""
    TB, _ = x_ref.shape
    H = whh0_ref.shape[0]
    B, O = out_ref.shape
    T = TB // B

    # ---- Hoisted, loop-invariant work -------------------------------------
    # Layer-0 input projection for ALL timesteps in one MXU call instead of T tiny ones.
    xproj0 = jnp.dot(x_ref[...], wih0_ref[...],
                     preferred_element_type=jnp.float32)          # (T*B, 4H)

    # Load weights once.
    whh0 = whh0_ref[...]
    w1 = w1_ref[...]
    w2 = w2_ref[...]
    fcw = fcw_ref[...]

    # Pre-broadcast biases once (JAX does not CSE broadcast_in_dim across the
    # unrolled cells, so doing it inside the loop would emit 24 broadcasts).
    b0 = jnp.broadcast_to(b0_ref[...], (B, 4 * H))
    b1 = jnp.broadcast_to(b1_ref[...], (B, 4 * H))
    b2 = jnp.broadcast_to(b2_ref[...], (B, 4 * H))
    fcb = jnp.broadcast_to(fcb_ref[...], (B, O))

    def activate(gates, c):
        # Only 2 EUP round-trips per cell: sigmoid/tanh on the full (B, 4H) value,
        # then slice i/f/o from the sigmoid result and g from the tanh result.
        s = jax.nn.sigmoid(gates)
        tg = jnp.tanh(gates)
        i = s[:, 0 * H:1 * H]
        f = s[:, 1 * H:2 * H]
        g = tg[:, 2 * H:3 * H]
        o = s[:, 3 * H:4 * H]
        c_new = f * c + i * g
        h_new = o * jnp.tanh(c_new)
        return h_new, c_new

    zeros = jnp.zeros((B, H), jnp.float32)
    h0 = h1 = h2 = zeros
    c0 = c1 = c2 = zeros

    # T is small and static -> fully unrolled time loop, stacked layers per step.
    for t in range(T):
        # Layer 0: x-projection precomputed; one matmul (h @ Whh) per cell.
        gates0 = xproj0[t * B:(t + 1) * B, :] \
            + jnp.dot(h0, whh0, preferred_element_type=jnp.float32) + b0
        h0, c0 = activate(gates0, c0)

        # Layer 1: single fused matmul [x_t, h] @ [Wih; Whh].
        gates1 = jnp.dot(jnp.concatenate([h0, h1], axis=1), w1,
                         preferred_element_type=jnp.float32) + b1
        h1, c1 = activate(gates1, c1)

        # Layer 2: single fused matmul.
        gates2 = jnp.dot(jnp.concatenate([h1, h2], axis=1), w2,
                         preferred_element_type=jnp.float32) + b2
        h2, c2 = activate(gates2, c2)

    # fc(out[:, -1, :]) == fc(top-layer hidden at the last timestep)
    out_ref[...] = jnp.dot(h2, fcw, preferred_element_type=jnp.float32) + fcb


def lstm_fc_forward(x, params):
    """x: (B, T, input_size) f32. params: dict in the kernel layout (see init_params)."""
    B, T, I = x.shape
    # Time-major then flattened so the layer-0 projection is one lane-dense matmul.
    x_flat = jnp.transpose(x, (1, 0, 2)).reshape(T * B, I)

    inputs = [
        x_flat,
        params["wih0"], params["whh0"], params["b0"],
        params["w1"], params["b1"],
        params["w2"], params["b2"],
        params["fcw"], params["fcb"],
    ]
    vmem = pl.BlockSpec(memory_space=pltpu.MemorySpace.VMEM)
    return pl.pallas_call(
        _lstm_fc_kernel,
        out_shape=jax.ShapeDtypeStruct((B, OUT_SIZE), jnp.float32),
        in_specs=[vmem] * len(inputs),
        out_specs=vmem,
    )(*inputs)


def init_params(key):
    """Deterministic init mimicking PyTorch's uniform(-1/sqrt(H), 1/sqrt(H)).

    Kernel layout:
      - wih0:(I,4H), whh0:(H,4H)                       (layer 0 kept separate; its
        input projection is hoisted out of the recurrence)
      - w1, w2: (2H,4H) = vstack(Wih_l, Whh_l)         (fused per-cell matmul)
      - b{l}: (1,4H) = b_ih + b_hh                     (fused biases)
      - fcw: (H, OUT), fcb: (1, OUT)
    """
    k = 1.0 / jnp.sqrt(jnp.float32(HIDDEN_SIZE))
    keys = jax.random.split(key, 16)
    u = lambda kk, shape: jax.random.uniform(kk, shape, jnp.float32, -k, k)

    params = {}
    in_sizes = [INPUT_SIZE, HIDDEN_SIZE, HIDDEN_SIZE]
    ki = 0
    for l in range(NUM_LAYERS):
        wih = u(keys[ki], (in_sizes[l], 4 * HIDDEN_SIZE)); ki += 1
        whh = u(keys[ki], (HIDDEN_SIZE, 4 * HIDDEN_SIZE)); ki += 1
        b_ih = u(keys[ki], (1, 4 * HIDDEN_SIZE)); ki += 1
        b_hh = u(keys[ki], (1, 4 * HIDDEN_SIZE)); ki += 1
        if l == 0:
            params["wih0"] = wih
            params["whh0"] = whh
        else:
            params[f"w{l}"] = jnp.concatenate([wih, whh], axis=0)  # (2H, 4H)
        params[f"b{l}"] = b_ih + b_hh
    params["fcw"] = u(keys[ki], (HIDDEN_SIZE, OUT_SIZE)); ki += 1
    params["fcb"] = u(keys[ki], (1, OUT_SIZE)); ki += 1
    return params


def reference_forward(x, params):
    """Pure-JAX reference of the same stacked LSTM + Linear (for validation)."""
    B, T, _ = x.shape
    H = HIDDEN_SIZE
    # Recover per-layer weights from the kernel layout.
    wih = [params["wih0"], params["w1"][:H], params["w2"][:H]]
    whh = [params["whh0"], params["w1"][H:], params["w2"][H:]]
    bias = [params["b0"], params["b1"], params["b2"]]

    h = [jnp.zeros((B, H), jnp.float32) for _ in range(NUM_LAYERS)]
    c = [jnp.zeros((B, H), jnp.float32) for _ in range(NUM_LAYERS)]
    for t in range(T):
        layer_in = x[:, t, :]
        for l in range(NUM_LAYERS):
            gates = layer_in @ wih[l] + h[l] @ whh[l] + bias[l]
            i = jax.nn.sigmoid(gates[:, 0 * H:1 * H])
            f = jax.nn.sigmoid(gates[:, 1 * H:2 * H])
            g = jnp.tanh(gates[:, 2 * H:3 * H])
            o = jax.nn.sigmoid(gates[:, 3 * H:4 * H])
            c[l] = f * c[l] + i * g
            h[l] = o * jnp.tanh(c[l])
            layer_in = h[l]
    return h[-1] @ params["fcw"] + params["fcb"]


if __name__ == "__main__":
    key = jax.random.PRNGKey(0)
    k_param, k_x = jax.random.split(key)

    batch, seq = 2, 8
    x = jax.random.normal(k_x, (batch, seq, INPUT_SIZE), jnp.float32)
    params = init_params(k_param)

    out = jax.block_until_ready(lstm_fc_forward(x, params))
    ref = reference_forward(x, params)

    assert out.shape == (batch, OUT_SIZE)
    assert jnp.allclose(out, ref, atol=1e-4, rtol=1e-4), "mismatch vs pure-JAX reference"
    print("KERNEL_OK")
</pallas_src>

<mosaic_0001>
module attributes {stable_mosaic.version = 11 : i64} {
  func.func @_lstm_fc_kernel(%arg0: memref<16x10xf32, #tpu.memory_space<vmem>>, %arg1: memref<10x80xf32, #tpu.memory_space<vmem>>, %arg2: memref<20x80xf32, #tpu.memory_space<vmem>>, %arg3: memref<1x80xf32, #tpu.memory_space<vmem>>, %arg4: memref<40x80xf32, #tpu.memory_space<vmem>>, %arg5: memref<1x80xf32, #tpu.memory_space<vmem>>, %arg6: memref<40x80xf32, #tpu.memory_space<vmem>>, %arg7: memref<1x80xf32, #tpu.memory_space<vmem>>, %arg8: memref<20x10xf32, #tpu.memory_space<vmem>>, %arg9: memref<1x10xf32, #tpu.memory_space<vmem>>, %arg10: memref<2x10xf32, #tpu.memory_space<vmem>>) attributes {dimension_semantics = [], scalar_prefetch = 0 : i64, scratch_operands = 0 : i64, tpu.core_type = #tpu.core_type<tc>} {
    %c0 = arith.constant 0 : index
    %c0_0 = arith.constant 0 : index
    %0 = vector.load %arg0[%c0, %c0_0] : memref<16x10xf32, #tpu.memory_space<vmem>>, vector<16x10xf32>
    %c0_1 = arith.constant 0 : index
    %c0_2 = arith.constant 0 : index
    %1 = vector.load %arg1[%c0_1, %c0_2] : memref<10x80xf32, #tpu.memory_space<vmem>>, vector<10x80xf32>
    %cst = arith.constant dense<0.000000e+00> : vector<16x80xf32>
    %2 = tpu.matmul %0, %1, %cst {dimension_numbers = #tpu.dot_dimension_numbers<[1], [0], [0], [1], [0, 0, 1, 1], [], []>} : vector<16x10xf32>, vector<10x80xf32>, vector<16x80xf32> -> vector<16x80xf32>
    %c0_3 = arith.constant 0 : index
    %c0_4 = arith.constant 0 : index
    %3 = vector.load %arg2[%c0_3, %c0_4] : memref<20x80xf32, #tpu.memory_space<vmem>>, vector<20x80xf32>
    %c0_5 = arith.constant 0 : index
    %c0_6 = arith.constant 0 : index
    %4 = vector.load %arg4[%c0_5, %c0_6] : memref<40x80xf32, #tpu.memory_space<vmem>>, vector<40x80xf32>
    %c0_7 = arith.constant 0 : index
    %c0_8 = arith.constant 0 : index
    %5 = vector.load %arg6[%c0_7, %c0_8] : memref<40x80xf32, #tpu.memory_space<vmem>>, vector<40x80xf32>
    %c0_9 = arith.constant 0 : index
    %c0_10 = arith.constant 0 : index
    %6 = vector.load %arg8[%c0_9, %c0_10] : memref<20x10xf32, #tpu.memory_space<vmem>>, vector<20x10xf32>
    %c0_11 = arith.constant 0 : index
    %c0_12 = arith.constant 0 : index
    %7 = vector.load %arg3[%c0_11, %c0_12] : memref<1x80xf32, #tpu.memory_space<vmem>>, vector<1x80xf32>
    %8 = vector.shape_cast %7 : vector<1x80xf32> to vector<1x80xf32>
    %9 = vector.broadcast %8 : vector<1x80xf32> to vector<2x80xf32>
    %c0_13 = arith.constant 0 : index
    %c0_14 = arith.constant 0 : index
    %10 = vector.load %arg5[%c0_13, %c0_14] : memref<1x80xf32, #tpu.memory_space<vmem>>, vector<1x80xf32>
    %11 = vector.shape_cast %10 : vector<1x80xf32> to vector<1x80xf32>
    %12 = vector.broadcast %11 : vector<1x80xf32> to vector<2x80xf32>
    %c0_15 = arith.constant 0 : index
    %c0_16 = arith.constant 0 : index
    %13 = vector.load %arg7[%c0_15, %c0_16] : memref<1x80xf32, #tpu.memory_space<vmem>>, vector<1x80xf32>
    %14 = vector.shape_cast %13 : vector<1x80xf32> to vector<1x80xf32>
    %15 = vector.broadcast %14 : vector<1x80xf32> to vector<2x80xf32>
    %c0_17 = arith.constant 0 : index
    %c0_18 = arith.constant 0 : index
    %16 = vector.load %arg9[%c0_17, %c0_18] : memref<1x10xf32, #tpu.memory_space<vmem>>, vector<1x10xf32>
    %17 = vector.shape_cast %16 : vector<1x10xf32> to vector<1x10xf32>
    %18 = vector.broadcast %17 : vector<1x10xf32> to vector<2x10xf32>
    %cst_19 = arith.constant 0.000000e+00 : f32
    %19 = vector.broadcast %cst_19 : f32 to vector<2x20xf32>
    %20 = vector.extract_strided_slice %2 {offsets = [0, 0], sizes = [2, 80], strides = [1, 1]} : vector<16x80xf32> to vector<2x80xf32>
    %cst_20 = arith.constant dense<0.000000e+00> : vector<2x80xf32>
    %21 = tpu.matmul %19, %3, %cst_20 {dimension_numbers = #tpu.dot_dimension_numbers<[1], [0], [0], [1], [0, 0, 1, 1], [], []>} : vector<2x20xf32>, vector<20x80xf32>, vector<2x80xf32> -> vector<2x80xf32>
    %22 = arith.addf %20, %21 : vector<2x80xf32>
    %23 = arith.addf %22, %9 : vector<2x80xf32>
    %24 = arith.negf %23 : vector<2x80xf32>
    %25 = math.exp %24 : vector<2x80xf32>
    %cst_21 = arith.constant 1.000000e+00 : f32
    %26 = vector.broadcast %cst_21 : f32 to vector<2x80xf32>
    %27 = arith.addf %26, %25 : vector<2x80xf32>
    %28 = arith.divf %26, %27 : vector<2x80xf32>
    %29 = math.tanh %23 : vector<2x80xf32>
    %30 = vector.extract_strided_slice %28 {offsets = [0, 0], sizes = [2, 20], strides = [1, 1]} : vector<2x80xf32> to vector<2x20xf32>
    %31 = vector.extract_strided_slice %28 {offsets = [0, 20], sizes = [2, 20], strides = [1, 1]} : vector<2x80xf32> to vector<2x20xf32>
    %32 = vector.extract_strided_slice %29 {offsets = [0, 40], sizes = [2, 20], strides = [1, 1]} : vector<2x80xf32> to vector<2x20xf32>
    %33 = vector.extract_strided_slice %28 {offsets = [0, 60], sizes = [2, 20], strides = [1, 1]} : vector<2x80xf32> to vector<2x20xf32>
    %34 = arith.mulf %31, %19 : vector<2x20xf32>
    %35 = arith.mulf %30, %32 : vector<2x20xf32>
    %36 = arith.addf %34, %35 : vector<2x20xf32>
    %37 = math.tanh %36 : vector<2x20xf32>
    %38 = arith.mulf %33, %37 : vector<2x20xf32>
    %39 = tpu.concatenate %38, %19 in 1 : vector<2x20xf32>, vector<2x20xf32> -> vector<2x40xf32>
    %cst_22 = arith.constant dense<0.000000e+00> : vector<2x80xf32>
    %40 = tpu.matmul %39, %4, %cst_22 {dimension_numbers = #tpu.dot_dimension_numbers<[1], [0], [0], [1], [0, 0, 1, 1], [], []>} : vector<2x40xf32>, vector<40x80xf32>, vector<2x80xf32> -> vector<2x80xf32>
    %41 = arith.addf %40, %12 : vector<2x80xf32>
    %42 = arith.negf %41 : vector<2x80xf32>
    %43 = math.exp %42 : vector<2x80xf32>
    %cst_23 = arith.constant 1.000000e+00 : f32
    %44 = vector.broadcast %cst_23 : f32 to vector<2x80xf32>
    %45 = arith.addf %44, %43 : vector<2x80xf32>
    %46 = arith.divf %44, %45 : vector<2x80xf32>
    %47 = math.tanh %41 : vector<2x80xf32>
    %48 = vector.extract_strided_slice %46 {offsets = [0, 0], sizes = [2, 20], strides = [1, 1]} : vector<2x80xf32> to vector<2x20xf32>
    %49 = vector.extract_strided_slice %46 {offsets = [0, 20], sizes = [2, 20], strides = [1, 1]} : vector<2x80xf32> to vector<2x20xf32>
    %50 = vector.extract_strided_slice %47 {offsets = [0, 40], sizes = [2, 20], strides = [1, 1]} : vector<2x80xf32> to vector<2x20xf32>
    %51 = vector.extract_strided_slice %46 {offsets = [0, 60], sizes = [2, 20], strides = [1, 1]} : vector<2x80xf32> to vector<2x20xf32>
    %52 = arith.mulf %49, %19 : vector<2x20xf32>
    %53 = arith.mulf %48, %50 : vector<2x20xf32>
    %54 = arith.addf %52, %53 : vector<2x20xf32>
    %55 = math.tanh %54 : vector<2x20xf32>
    %56 = arith.mulf %51, %55 : vector<2x20xf32>
    %57 = tpu.concatenate %56, %19 in 1 : vector<2x20xf32>, vector<2x20xf32> -> vector<2x40xf32>
    %cst_24 = arith.constant dense<0.000000e+00> : vector<2x80xf32>
    %58 = tpu.matmul %57, %5, %cst_24 {dimension_numbers = #tpu.dot_dimension_numbers<[1], [0], [0], [1], [0, 0, 1, 1], [], []>} : vector<2x40xf32>, vector<40x80xf32>, vector<2x80xf32> -> vector<2x80xf32>
    %59 = arith.addf %58, %15 : vector<2x80xf32>
    %60 = arith.negf %59 : vector<2x80xf32>
    %61 = math.exp %60 : vector<2x80xf32>
    %cst_25 = arith.constant 1.000000e+00 : f32
    %62 = vector.broadcast %cst_25 : f32 to vector<2x80xf32>
    %63 = arith.addf %62, %61 : vector<2x80xf32>
    %64 = arith.divf %62, %63 : vector<2x80xf32>
    %65 = math.tanh %59 : vector<2x80xf32>
    %66 = vector.extract_strided_slice %64 {offsets = [0, 0], sizes = [2, 20], strides = [1, 1]} : vector<2x80xf32> to vector<2x20xf32>
    %67 = vector.extract_strided_slice %64 {offsets = [0, 20], sizes = [2, 20], strides = [1, 1]} : vector<2x80xf32> to vector<2x20xf32>
    %68 = vector.extract_strided_slice %65 {offsets = [0, 40], sizes = [2, 20], strides = [1, 1]} : vector<2x80xf32> to vector<2x20xf32>
    %69 = vector.extract_strided_slice %64 {offsets = [0, 60], sizes = [2, 20], strides = [1, 1]} : vector<2x80xf32> to vector<2x20xf32>
    %70 = arith.mulf %67, %19 : vector<2x20xf32>
    %71 = arith.mulf %66, %68 : vector<2x20xf32>
    %72 = arith.addf %70, %71 : vector<2x20xf32>
    %73 = math.tanh %72 : vector<2x20xf32>
    %74 = arith.mulf %69, %73 : vector<2x20xf32>
    %75 = vector.extract_strided_slice %2 {offsets = [2, 0], sizes = [2, 80], strides = [1, 1]} : vector<16x80xf32> to vector<2x80xf32>
    %cst_26 = arith.constant dense<0.000000e+00> : vector<2x80xf32>
    %76 = tpu.matmul %38, %3, %cst_26 {dimension_numbers = #tpu.dot_dimension_numbers<[1], [0], [0], [1], [0, 0, 1, 1], [], []>} : vector<2x20xf32>, vector<20x80xf32>, vector<2x80xf32> -> vector<2x80xf32>
    %77 = arith.addf %75, %76 : vector<2x80xf32>
    %78 = arith.addf %77, %9 : vector<2x80xf32>
    %79 = arith.negf %78 : vector<2x80xf32>
    %80 = math.exp %79 : vector<2x80xf32>
    %cst_27 = arith.constant 1.000000e+00 : f32
    %81 = vector.broadcast %cst_27 : f32 to vector<2x80xf32>
    %82 = arith.addf %81, %80 : vector<2x80xf32>
    %83 = arith.divf %81, %82 : vector<2x80xf32>
    %84 = math.tanh %78 : vector<2x80xf32>
    %85 = vector.extract_strided_slice %83 {offsets = [0, 0], sizes = [2, 20], strides = [1, 1]} : vector<2x80xf32> to vector<2x20xf32>
    %86 = vector.extract_strided_slice %83 {offsets = [0, 20], sizes = [2, 20], strides = [1, 1]} : vector<2x80xf32> to vector<2x20xf32>
    %87 = vector.extract_strided_slice %84 {offsets = [0, 40], sizes = [2, 20], strides = [1, 1]} : vector<2x80xf32> to vector<2x20xf32>
    %88 = vector.extract_strided_slice %83 {offsets = [0, 60], sizes = [2, 20], strides = [1, 1]} : vector<2x80xf32> to vector<2x20xf32>
    %89 = arith.mulf %86, %36 : vector<2x20xf32>
    %90 = arith.mulf %85, %87 : vector<2x20xf32>
    %91 = arith.addf %89, %90 : vector<2x20xf32>
    %92 = math.tanh %91 : vector<2x20xf32>
    %93 = arith.mulf %88, %92 : vector<2x20xf32>
    %94 = tpu.concatenate %93, %56 in 1 : vector<2x20xf32>, vector<2x20xf32> -> vector<2x40xf32>
    %cst_28 = arith.constant dense<0.000000e+00> : vector<2x80xf32>
    %95 = tpu.matmul %94, %4, %cst_28 {dimension_numbers = #tpu.dot_dimension_numbers<[1], [0], [0], [1], [0, 0, 1, 1], [], []>} : vector<2x40xf32>, vector<40x80xf32>, vector<2x80xf32> -> vector<2x80xf32>
    %96 = arith.addf %95, %12 : vector<2x80xf32>
    %97 = arith.negf %96 : vector<2x80xf32>
    %98 = math.exp %97 : vector<2x80xf32>
    %cst_29 = arith.constant 1.000000e+00 : f32
    %99 = vector.broadcast %cst_29 : f32 to vector<2x80xf32>
    %100 = arith.addf %99, %98 : vector<2x80xf32>
    %101 = arith.divf %99, %100 : vector<2x80xf32>
    %102 = math.tanh %96 : vector<2x80xf32>
    %103 = vector.extract_strided_slice %101 {offsets = [0, 0], sizes = [2, 20], strides = [1, 1]} : vector<2x80xf32> to vector<2x20xf32>
    %104 = vector.extract_strided_slice %101 {offsets = [0, 20], sizes = [2, 20], strides = [1, 1]} : vector<2x80xf32> to vector<2x20xf32>
    %105 = vector.extract_strided_slice %102 {offsets = [0, 40], sizes = [2, 20], strides = [1, 1]} : vector<2x80xf32> to vector<2x20xf32>
    %106 = vector.extract_strided_slice %101 {offsets = [0, 60], sizes = [2, 20], strides = [1, 1]} : vector<2x80xf32> to vector<2x20xf32>
    %107 = arith.mulf %104, %54 : vector<2x20xf32>
    %108 = arith.mulf %103, %105 : vector<2x20xf32>
    %109 = arith.addf %107, %108 : vector<2x20xf32>
    %110 = math.tanh %109 : vector<2x20xf32>
    %111 = arith.mulf %106, %110 : vector<2x20xf32>
    %112 = tpu.concatenate %111, %74 in 1 : vector<2x20xf32>, vector<2x20xf32> -> vector<2x40xf32>
    %cst_30 = arith.constant dense<0.000000e+00> : vector<2x80xf32>
    %113 = tpu.matmul %112, %5, %cst_30 {dimension_numbers = #tpu.dot_dimension_numbers<[1], [0], [0], [1], [0, 0, 1, 1], [], []>} : vector<2x40xf32>, vector<40x80xf32>, vector<2x80xf32> -> vector<2x80xf32>
    %114 = arith.addf %113, %15 : vector<2x80xf32>
    %115 = arith.negf %114 : vector<2x80xf32>
    %116 = math.exp %115 : vector<2x80xf32>
    %cst_31 = arith.constant 1.000000e+00 : f32
    %117 = vector.broadcast %cst_31 : f32 to vector<2x80xf32>
    %118 = arith.addf %117, %116 : vector<2x80xf32>
    %119 = arith.divf %117, %118 : vector<2x80xf32>
    %120 = math.tanh %114 : vector<2x80xf32>
    %121 = vector.extract_strided_slice %119 {offsets = [0, 0], sizes = [2, 20], strides = [1, 1]} : vector<2x80xf32> to vector<2x20xf32>
    %122 = vector.extract_strided_slice %119 {offsets = [0, 20], sizes = [2, 20], strides = [1, 1]} : vector<2x80xf32> to vector<2x20xf32>
    %123 = vector.extract_strided_slice %120 {offsets = [0, 40], sizes = [2, 20], strides = [1, 1]} : vector<2x80xf32> to vector<2x20xf32>
    %124 = vector.extract_strided_slice %119 {offsets = [0, 60], sizes = [2, 20], strides = [1, 1]} : vector<2x80xf32> to vector<2x20xf32>
    %125 = arith.mulf %122, %72 : vector<2x20xf32>
    %126 = arith.mulf %121, %123 : vector<2x20xf32>
    %127 = arith.addf %125, %126 : vector<2x20xf32>
    %128 = math.tanh %127 : vector<2x20xf32>
    %129 = arith.mulf %124, %128 : vector<2x20xf32>
    %130 = vector.extract_strided_slice %2 {offsets = [4, 0], sizes = [2, 80], strides = [1, 1]} : vector<16x80xf32> to vector<2x80xf32>
    %cst_32 = arith.constant dense<0.000000e+00> : vector<2x80xf32>
    %131 = tpu.matmul %93, %3, %cst_32 {dimension_numbers = #tpu.dot_dimension_numbers<[1], [0], [0], [1], [0, 0, 1, 1], [], []>} : vector<2x20xf32>, vector<20x80xf32>, vector<2x80xf32> -> vector<2x80xf32>
    %132 = arith.addf %130, %131 : vector<2x80xf32>
    %133 = arith.addf %132, %9 : vector<2x80xf32>
    %134 = arith.negf %133 : vector<2x80xf32>
    %135 = math.exp %134 : vector<2x80xf32>
    %cst_33 = arith.constant 1.000000e+00 : f32
    %136 = vector.broadcast %cst_33 : f32 to vector<2x80xf32>
    %137 = arith.addf %136, %135 : vector<2x80xf32>
    %138 = arith.divf %136, %137 : vector<2x80xf32>
    %139 = math.tanh %133 : vector<2x80xf32>
    %140 = vector.extract_strided_slice %138 {offsets = [0, 0], sizes = [2, 20], strides = [1, 1]} : vector<2x80xf32> to vector<2x20xf32>
    %141 = vector.extract_strided_slice %138 {offsets = [0, 20], sizes = [2, 20], strides = [1, 1]} : vector<2x80xf32> to vector<2x20xf32>
    %142 = vector.extract_strided_slice %139 {offsets = [0, 40], sizes = [2, 20], strides = [1, 1]} : vector<2x80xf32> to vector<2x20xf32>
    %143 = vector.extract_strided_slice %138 {offsets = [0, 60], sizes = [2, 20], strides = [1, 1]} : vector<2x80xf32> to vector<2x20xf32>
    %144 = arith.mulf %141, %91 : vector<2x20xf32>
    %145 = arith.mulf %140, %142 : vector<2x20xf32>
    %146 = arith.addf %144, %145 : vector<2x20xf32>
    %147 = math.tanh %146 : vector<2x20xf32>
    %148 = arith.mulf %143, %147 : vector<2x20xf32>
    %149 = tpu.concatenate %148, %111 in 1 : vector<2x20xf32>, vector<2x20xf32> -> vector<2x40xf32>
    %cst_34 = arith.constant dense<0.000000e+00> : vector<2x80xf32>
    %150 = tpu.matmul %149, %4, %cst_34 {dimension_numbers = #tpu.dot_dimension_numbers<[1], [0], [0], [1], [0, 0, 1, 1], [], []>} : vector<2x40xf32>, vector<40x80xf32>, vector<2x80xf32> -> vector<2x80xf32>
    %151 = arith.addf %150, %12 : vector<2x80xf32>
    %152 = arith.negf %151 : vector<2x80xf32>
    %153 = math.exp %152 : vector<2x80xf32>
    %cst_35 = arith.constant 1.000000e+00 : f32
    %154 = vector.broadcast %cst_35 : f32 to vector<2x80xf32>
    %155 = arith.addf %154, %153 : vector<2x80xf32>
    %156 = arith.divf %154, %155 : vector<2x80xf32>
    %157 = math.tanh %151 : vector<2x80xf32>
    %158 = vector.extract_strided_slice %156 {offsets = [0, 0], sizes = [2, 20], strides = [1, 1]} : vector<2x80xf32> to vector<2x20xf32>
    %159 = vector.extract_strided_slice %156 {offsets = [0, 20], sizes = [2, 20], strides = [1, 1]} : vector<2x80xf32> to vector<2x20xf32>
    %160 = vector.extract_strided_slice %157 {offsets = [0, 40], sizes = [2, 20], strides = [1, 1]} : vector<2x80xf32> to vector<2x20xf32>
    %161 = vector.extract_strided_slice %156 {offsets = [0, 60], sizes = [2, 20], strides = [1, 1]} : vector<2x80xf32> to vector<2x20xf32>
    %162 = arith.mulf %159, %109 : vector<2x20xf32>
    %163 = arith.mulf %158, %160 : vector<2x20xf32>
    %164 = arith.addf %162, %163 : vector<2x20xf32>
    %165 = math.tanh %164 : vector<2x20xf32>
    %166 = arith.mulf %161, %165 : vector<2x20xf32>
    %167 = tpu.concatenate %166, %129 in 1 : vector<2x20xf32>, vector<2x20xf32> -> vector<2x40xf32>
    %cst_36 = arith.constant dense<0.000000e+00> : vector<2x80xf32>
    %168 = tpu.matmul %167, %5, %cst_36 {dimension_numbers = #tpu.dot_dimension_numbers<[1], [0], [0], [1], [0, 0, 1, 1], [], []>} : vector<2x40xf32>, vector<40x80xf32>, vector<2x80xf32> -> vector<2x80xf32>
    %169 = arith.addf %168, %15 : vector<2x80xf32>
    %170 = arith.negf %169 : vector<2x80xf32>
    %171 = math.exp %170 : vector<2x80xf32>
    %cst_37 = arith.constant 1.000000e+00 : f32
    %172 = vector.broadcast %cst_37 : f32 to vector<2x80xf32>
    %173 = arith.addf %172, %171 : vector<2x80xf32>
    %174 = arith.divf %172, %173 : vector<2x80xf32>
    %175 = math.tanh %169 : vector<2x80xf32>
    %176 = vector.extract_strided_slice %174 {offsets = [0, 0], sizes = [2, 20], strides = [1, 1]} : vector<2x80xf32> to vector<2x20xf32>
    %177 = vector.extract_strided_slice %174 {offsets = [0, 20], sizes = [2, 20], strides = [1, 1]} : vector<2x80xf32> to vector<2x20xf32>
    %178 = vector.extract_strided_slice %175 {offsets = [0, 40], sizes = [2, 20], strides = [1, 1]} : vector<2x80xf32> to vector<2x20xf32>
    %179 = vector.extract_strided_slice %174 {offsets = [0, 60], sizes = [2, 20], strides = [1, 1]} : vector<2x80xf32> to vector<2x20xf32>
    %180 = arith.mulf %177, %127 : vector<2x20xf32>
    %181 = arith.mulf %176, %178 : vector<2x20xf32>
    %182 = arith.addf %180, %181 : vector<2x20xf32>
    %183 = math.tanh %182 : vector<2x20xf32>
    %184 = arith.mulf %179, %183 : vector<2x20xf32>
    %185 = vector.extract_strided_slice %2 {offsets = [6, 0], sizes = [2, 80], strides = [1, 1]} : vector<16x80xf32> to vector<2x80xf32>
    %cst_38 = arith.constant dense<0.000000e+00> : vector<2x80xf32>
    %186 = tpu.matmul %148, %3, %cst_38 {dimension_numbers = #tpu.dot_dimension_numbers<[1], [0], [0], [1], [0, 0, 1, 1], [], []>} : vector<2x20xf32>, vector<20x80xf32>, vector<2x80xf32> -> vector<2x80xf32>
    %187 = arith.addf %185, %186 : vector<2x80xf32>
    %188 = arith.addf %187, %9 : vector<2x80xf32>
    %189 = arith.negf %188 : vector<2x80xf32>
    %190 = math.exp %189 : vector<2x80xf32>
    %cst_39 = arith.constant 1.000000e+00 : f32
    %191 = vector.broadcast %cst_39 : f32 to vector<2x80xf32>
    %192 = arith.addf %191, %190 : vector<2x80xf32>
    %193 = arith.divf %191, %192 : vector<2x80xf32>
    %194 = math.tanh %188 : vector<2x80xf32>
    %195 = vector.extract_strided_slice %193 {offsets = [0, 0], sizes = [2, 20], strides = [1, 1]} : vector<2x80xf32> to vector<2x20xf32>
    %196 = vector.extract_strided_slice %193 {offsets = [0, 20], sizes = [2, 20], strides = [1, 1]} : vector<2x80xf32> to vector<2x20xf32>
    %197 = vector.extract_strided_slice %194 {offsets = [0, 40], sizes = [2, 20], strides = [1, 1]} : vector<2x80xf32> to vector<2x20xf32>
    %198 = vector.extract_strided_slice %193 {offsets = [0, 60], sizes = [2, 20], strides = [1, 1]} : vector<2x80xf32> to vector<2x20xf32>
    %199 = arith.mulf %196, %146 : vector<2x20xf32>
    %200 = arith.mulf %195, %197 : vector<2x20xf32>
    %201 = arith.addf %199, %200 : vector<2x20xf32>
    %202 = math.tanh %201 : vector<2x20xf32>
    %203 = arith.mulf %198, %202 : vector<2x20xf32>
    %204 = tpu.concatenate %203, %166 in 1 : vector<2x20xf32>, vector<2x20xf32> -> vector<2x40xf32>
    %cst_40 = arith.constant dense<0.000000e+00> : vector<2x80xf32>
    %205 = tpu.matmul %204, %4, %cst_40 {dimension_numbers = #tpu.dot_dimension_numbers<[1], [0], [0], [1], [0, 0, 1, 1], [], []>} : vector<2x40xf32>, vector<40x80xf32>, vector<2x80xf32> -> vector<2x80xf32>
    %206 = arith.addf %205, %12 : vector<2x80xf32>
    %207 = arith.negf %206 : vector<2x80xf32>
    %208 = math.exp %207 : vector<2x80xf32>
    %cst_41 = arith.constant 1.000000e+00 : f32
    %209 = vector.broadcast %cst_41 : f32 to vector<2x80xf32>
    %210 = arith.addf %209, %208 : vector<2x80xf32>
    %211 = arith.divf %209, %210 : vector<2x80xf32>
    %212 = math.tanh %206 : vector<2x80xf32>
    %213 = vector.extract_strided_slice %211 {offsets = [0, 0], sizes = [2, 20], strides = [1, 1]} : vector<2x80xf32> to vector<2x20xf32>
    %214 = vector.extract_strided_slice %211 {offsets = [0, 20], sizes = [2, 20], strides = [1, 1]} : vector<2x80xf32> to vector<2x20xf32>
    %215 = vector.extract_strided_slice %212 {offsets = [0, 40], sizes = [2, 20], strides = [1, 1]} : vector<2x80xf32> to vector<2x20xf32>
    %216 = vector.extract_strided_slice %211 {offsets = [0, 60], sizes = [2, 20], strides = [1, 1]} : vector<2x80xf32> to vector<2x20xf32>
    %217 = arith.mulf %214, %164 : vector<2x20xf32>
    %218 = arith.mulf %213, %215 : vector<2x20xf32>
    %219 = arith.addf %217, %218 : vector<2x20xf32>
    %220 = math.tanh %219 : vector<2x20xf32>
    %221 = arith.mulf %216, %220 : vector<2x20xf32>
    %222 = tpu.concatenate %221, %184 in 1 : vector<2x20xf32>, vector<2x20xf32> -> vector<2x40xf32>
    %cst_42 = arith.constant dense<0.000000e+00> : vector<2x80xf32>
    %223 = tpu.matmul %222, %5, %cst_42 {dimension_numbers = #tpu.dot_dimension_numbers<[1], [0], [0], [1], [0, 0, 1, 1], [], []>} : vector<2x40xf32>, vector<40x80xf32>, vector<2x80xf32> -> vector<2x80xf32>
    %224 = arith.addf %223, %15 : vector<2x80xf32>
    %225 = arith.negf %224 : vector<2x80xf32>
    %226 = math.exp %225 : vector<2x80xf32>
    %cst_43 = arith.constant 1.000000e+00 : f32
    %227 = vector.broadcast %cst_43 : f32 to vector<2x80xf32>
    %228 = arith.addf %227, %226 : vector<2x80xf32>
    %229 = arith.divf %227, %228 : vector<2x80xf32>
    %230 = math.tanh %224 : vector<2x80xf32>
    %231 = vector.extract_strided_slice %229 {offsets = [0, 0], sizes = [2, 20], strides = [1, 1]} : vector<2x80xf32> to vector<2x20xf32>
    %232 = vector.extract_strided_slice %229 {offsets = [0, 20], sizes = [2, 20], strides = [1, 1]} : vector<2x80xf32> to vector<2x20xf32>
    %233 = vector.extract_strided_slice %230 {offsets = [0, 40], sizes = [2, 20], strides = [1, 1]} : vector<2x80xf32> to vector<2x20xf32>
    %234 = vector.extract_strided_slice %229 {offsets = [0, 60], sizes = [2, 20], strides = [1, 1]} : vector<2x80xf32> to vector<2x20xf32>
    %235 = arith.mulf %232, %182 : vector<2x20xf32>
    %236 = arith.mulf %231, %233 : vector<2x20xf32>
    %237 = arith.addf %235, %236 : vector<2x20xf32>
    %238 = math.tanh %237 : vector<2x20xf32>
    %239 = arith.mulf %234, %238 : vector<2x20xf32>
    %240 = vector.extract_strided_slice %2 {offsets = [8, 0], sizes = [2, 80], strides = [1, 1]} : vector<16x80xf32> to vector<2x80xf32>
    %cst_44 = arith.constant dense<0.000000e+00> : vector<2x80xf32>
    %241 = tpu.matmul %203, %3, %cst_44 {dimension_numbers = #tpu.dot_dimension_numbers<[1], [0], [0], [1], [0, 0, 1, 1], [], []>} : vector<2x20xf32>, vector<20x80xf32>, vector<2x80xf32> -> vector<2x80xf32>
    %242 = arith.addf %240, %241 : vector<2x80xf32>
    %243 = arith.addf %242, %9 : vector<2x80xf32>
    %244 = arith.negf %243 : vector<2x80xf32>
    %245 = math.exp %244 : vector<2x80xf32>
    %cst_45 = arith.constant 1.000000e+00 : f32
    %246 = vector.broadcast %cst_45 : f32 to vector<2x80xf32>
    %247 = arith.addf %246, %245 : vector<2x80xf32>
    %248 = arith.divf %246, %247 : vector<2x80xf32>
    %249 = math.tanh %243 : vector<2x80xf32>
    %250 = vector.extract_strided_slice %248 {offsets = [0, 0], sizes = [2, 20], strides = [1, 1]} : vector<2x80xf32> to vector<2x20xf32>
    %251 = vector.extract_strided_slice %248 {offsets = [0, 20], sizes = [2, 20], strides = [1, 1]} : vector<2x80xf32> to vector<2x20xf32>
    %252 = vector.extract_strided_slice %249 {offsets = [0, 40], sizes = [2, 20], strides = [1, 1]} : vector<2x80xf32> to vector<2x20xf32>
    %253 = vector.extract_strided_slice %248 {offsets = [0, 60], sizes = [2, 20], strides = [1, 1]} : vector<2x80xf32> to vector<2x20xf32>
    %254 = arith.mulf %251, %201 : vector<2x20xf32>
    %255 = arith.mulf %250, %252 : vector<2x20xf32>
    %256 = arith.addf %254, %255 : vector<2x20xf32>
    %257 = math.tanh %256 : vector<2x20xf32>
    %258 = arith.mulf %253, %257 : vector<2x20xf32>
    %259 = tpu.concatenate %258, %221 in 1 : vector<2x20xf32>, vector<2x20xf32> -> vector<2x40xf32>
    %cst_46 = arith.constant dense<0.000000e+00> : vector<2x80xf32>
    %260 = tpu.matmul %259, %4, %cst_46 {dimension_numbers = #tpu.dot_dimension_numbers<[1], [0], [0], [1], [0, 0, 1, 1], [], []>} : vector<2x40xf32>, vector<40x80xf32>, vector<2x80xf32> -> vector<2x80xf32>
    %261 = arith.addf %260, %12 : vector<2x80xf32>
    %262 = arith.negf %261 : vector<2x80xf32>
    %263 = math.exp %262 : vector<2x80xf32>
    %cst_47 = arith.constant 1.000000e+00 : f32
    %264 = vector.broadcast %cst_47 : f32 to vector<2x80xf32>
    %265 = arith.addf %264, %263 : vector<2x80xf32>
    %266 = arith.divf %264, %265 : vector<2x80xf32>
    %267 = math.tanh %261 : vector<2x80xf32>
    %268 = vector.extract_strided_slice %266 {offsets = [0, 0], sizes = [2, 20], strides = [1, 1]} : vector<2x80xf32> to vector<2x20xf32>
    %269 = vector.extract_strided_slice %266 {offsets = [0, 20], sizes = [2, 20], strides = [1, 1]} : vector<2x80xf32> to vector<2x20xf32>
    %270 = vector.extract_strided_slice %267 {offsets = [0, 40], sizes = [2, 20], strides = [1, 1]} : vector<2x80xf32> to vector<2x20xf32>
    %271 = vector.extract_strided_slice %266 {offsets = [0, 60], sizes = [2, 20], strides = [1, 1]} : vector<2x80xf32> to vector<2x20xf32>
    %272 = arith.mulf %269, %219 : vector<2x20xf32>
    %273 = arith.mulf %268, %270 : vector<2x20xf32>
    %274 = arith.addf %272, %273 : vector<2x20xf32>
    %275 = math.tanh %274 : vector<2x20xf32>
    %276 = arith.mulf %271, %275 : vector<2x20xf32>
    %277 = tpu.concatenate %276, %239 in 1 : vector<2x20xf32>, vector<2x20xf32> -> vector<2x40xf32>
    %cst_48 = arith.constant dense<0.000000e+00> : vector<2x80xf32>
    %278 = tpu.matmul %277, %5, %cst_48 {dimension_numbers = #tpu.dot_dimension_numbers<[1], [0], [0], [1], [0, 0, 1, 1], [], []>} : vector<2x40xf32>, vector<40x80xf32>, vector<2x80xf32> -> vector<2x80xf32>
    %279 = arith.addf %278, %15 : vector<2x80xf32>
    %280 = arith.negf %279 : vector<2x80xf32>
    %281 = math.exp %280 : vector<2x80xf32>
    %cst_49 = arith.constant 1.000000e+00 : f32
    %282 = vector.broadcast %cst_49 : f32 to vector<2x80xf32>
    %283 = arith.addf %282, %281 : vector<2x80xf32>
    %284 = arith.divf %282, %283 : vector<2x80xf32>
    %285 = math.tanh %279 : vector<2x80xf32>
    %286 = vector.extract_strided_slice %284 {offsets = [0, 0], sizes = [2, 20], strides = [1, 1]} : vector<2x80xf32> to vector<2x20xf32>
    %287 = vector.extract_strided_slice %284 {offsets = [0, 20], sizes = [2, 20], strides = [1, 1]} : vector<2x80xf32> to vector<2x20xf32>
    %288 = vector.extract_strided_slice %285 {offsets = [0, 40], sizes = [2, 20], strides = [1, 1]} : vector<2x80xf32> to vector<2x20xf32>
    %289 = vector.extract_strided_slice %284 {offsets = [0, 60], sizes = [2, 20], strides = [1, 1]} : vector<2x80xf32> to vector<2x20xf32>
    %290 = arith.mulf %287, %237 : vector<2x20xf32>
    %291 = arith.mulf %286, %288 : vector<2x20xf32>
    %292 = arith.addf %290, %291 : vector<2x20xf32>
    %293 = math.tanh %292 : vector<2x20xf32>
    %294 = arith.mulf %289, %293 : vector<2x20xf32>
    %295 = vector.extract_strided_slice %2 {offsets = [10, 0], sizes = [2, 80], strides = [1, 1]} : vector<16x80xf32> to vector<2x80xf32>
    %cst_50 = arith.constant dense<0.000000e+00> : vector<2x80xf32>
    %296 = tpu.matmul %258, %3, %cst_50 {dimension_numbers = #tpu.dot_dimension_numbers<[1], [0], [0], [1], [0, 0, 1, 1], [], []>} : vector<2x20xf32>, vector<20x80xf32>, vector<2x80xf32> -> vector<2x80xf32>
    %297 = arith.addf %295, %296 : vector<2x80xf32>
    %298 = arith.addf %297, %9 : vector<2x80xf32>
    %299 = arith.negf %298 : vector<2x80xf32>
    %300 = math.exp %299 : vector<2x80xf32>
    %cst_51 = arith.constant 1.000000e+00 : f32
    %301 = vector.broadcast %cst_51 : f32 to vector<2x80xf32>
    %302 = arith.addf %301, %300 : vector<2x80xf32>
    %303 = arith.divf %301, %302 : vector<2x80xf32>
    %304 = math.tanh %298 : vector<2x80xf32>
    %305 = vector.extract_strided_slice %303 {offsets = [0, 0], sizes = [2, 20], strides = [1, 1]} : vector<2x80xf32> to vector<2x20xf32>
    %306 = vector.extract_strided_slice %303 {offsets = [0, 20], sizes = [2, 20], strides = [1, 1]} : vector<2x80xf32> to vector<2x20xf32>
    %307 = vector.extract_strided_slice %304 {offsets = [0, 40], sizes = [2, 20], strides = [1, 1]} : vector<2x80xf32> to vector<2x20xf32>
    %308 = vector.extract_strided_slice %303 {offsets = [0, 60], sizes = [2, 20], strides = [1, 1]} : vector<2x80xf32> to vector<2x20xf32>
    %309 = arith.mulf %306, %256 : vector<2x20xf32>
    %310 = arith.mulf %305, %307 : vector<2x20xf32>
    %311 = arith.addf %309, %310 : vector<2x20xf32>
    %312 = math.tanh %311 : vector<2x20xf32>
    %313 = arith.mulf %308, %312 : vector<2x20xf32>
    %314 = tpu.concatenate %313, %276 in 1 : vector<2x20xf32>, vector<2x20xf32> -> vector<2x40xf32>
    %cst_52 = arith.constant dense<0.000000e+00> : vector<2x80xf32>
    %315 = tpu.matmul %314, %4, %cst_52 {dimension_numbers = #tpu.dot_dimension_numbers<[1], [0], [0], [1], [0, 0, 1, 1], [], []>} : vector<2x40xf32>, vector<40x80xf32>, vector<2x80xf32> -> vector<2x80xf32>
    %316 = arith.addf %315, %12 : vector<2x80xf32>
    %317 = arith.negf %316 : vector<2x80xf32>
    %318 = math.exp %317 : vector<2x80xf32>
    %cst_53 = arith.constant 1.000000e+00 : f32
    %319 = vector.broadcast %cst_53 : f32 to vector<2x80xf32>
    %320 = arith.addf %319, %318 : vector<2x80xf32>
    %321 = arith.divf %319, %320 : vector<2x80xf32>
    %322 = math.tanh %316 : vector<2x80xf32>
    %323 = vector.extract_strided_slice %321 {offsets = [0, 0], sizes = [2, 20], strides = [1, 1]} : vector<2x80xf32> to vector<2x20xf32>
    %324 = vector.extract_strided_slice %321 {offsets = [0, 20], sizes = [2, 20], strides = [1, 1]} : vector<2x80xf32> to vector<2x20xf32>
    %325 = vector.extract_strided_slice %322 {offsets = [0, 40], sizes = [2, 20], strides = [1, 1]} : vector<2x80xf32> to vector<2x20xf32>
    %326 = vector.extract_strided_slice %321 {offsets = [0, 60], sizes = [2, 20], strides = [1, 1]} : vector<2x80xf32> to vector<2x20xf32>
    %327 = arith.mulf %324, %274 : vector<2x20xf32>
    %328 = arith.mulf %323, %325 : vector<2x20xf32>
    %329 = arith.addf %327, %328 : vector<2x20xf32>
    %330 = math.tanh %329 : vector<2x20xf32>
    %331 = arith.mulf %326, %330 : vector<2x20xf32>
    %332 = tpu.concatenate %331, %294 in 1 : vector<2x20xf32>, vector<2x20xf32> -> vector<2x40xf32>
    %cst_54 = arith.constant dense<0.000000e+00> : vector<2x80xf32>
    %333 = tpu.matmul %332, %5, %cst_54 {dimension_numbers = #tpu.dot_dimension_numbers<[1], [0], [0], [1], [0, 0, 1, 1], [], []>} : vector<2x40xf32>, vector<40x80xf32>, vector<2x80xf32> -> vector<2x80xf32>
    %334 = arith.addf %333, %15 : vector<2x80xf32>
    %335 = arith.negf %334 : vector<2x80xf32>
    %336 = math.exp %335 : vector<2x80xf32>
    %cst_55 = arith.constant 1.000000e+00 : f32
    %337 = vector.broadcast %cst_55 : f32 to vector<2x80xf32>
    %338 = arith.addf %337, %336 : vector<2x80xf32>
    %339 = arith.divf %337, %338 : vector<2x80xf32>
    %340 = math.tanh %334 : vector<2x80xf32>
    %341 = vector.extract_strided_slice %339 {offsets = [0, 0], sizes = [2, 20], strides = [1, 1]} : vector<2x80xf32> to vector<2x20xf32>
    %342 = vector.extract_strided_slice %339 {offsets = [0, 20], sizes = [2, 20], strides = [1, 1]} : vector<2x80xf32> to vector<2x20xf32>
    %343 = vector.extract_strided_slice %340 {offsets = [0, 40], sizes = [2, 20], strides = [1, 1]} : vector<2x80xf32> to vector<2x20xf32>
    %344 = vector.extract_strided_slice %339 {offsets = [0, 60], sizes = [2, 20], strides = [1, 1]} : vector<2x80xf32> to vector<2x20xf32>
    %345 = arith.mulf %342, %292 : vector<2x20xf32>
    %346 = arith.mulf %341, %343 : vector<2x20xf32>
    %347 = arith.addf %345, %346 : vector<2x20xf32>
    %348 = math.tanh %347 : vector<2x20xf32>
    %349 = arith.mulf %344, %348 : vector<2x20xf32>
    %350 = vector.extract_strided_slice %2 {offsets = [12, 0], sizes = [2, 80], strides = [1, 1]} : vector<16x80xf32> to vector<2x80xf32>
    %cst_56 = arith.constant dense<0.000000e+00> : vector<2x80xf32>
    %351 = tpu.matmul %313, %3, %cst_56 {dimension_numbers = #tpu.dot_dimension_numbers<[1], [0], [0], [1], [0, 0, 1, 1], [], []>} : vector<2x20xf32>, vector<20x80xf32>, vector<2x80xf32> -> vector<2x80xf32>
    %352 = arith.addf %350, %351 : vector<2x80xf32>
    %353 = arith.addf %352, %9 : vector<2x80xf32>
    %354 = arith.negf %353 : vector<2x80xf32>
    %355 = math.exp %354 : vector<2x80xf32>
    %cst_57 = arith.constant 1.000000e+00 : f32
    %356 = vector.broadcast %cst_57 : f32 to vector<2x80xf32>
    %357 = arith.addf %356, %355 : vector<2x80xf32>
    %358 = arith.divf %356, %357 : vector<2x80xf32>
    %359 = math.tanh %353 : vector<2x80xf32>
    %360 = vector.extract_strided_slice %358 {offsets = [0, 0], sizes = [2, 20], strides = [1, 1]} : vector<2x80xf32> to vector<2x20xf32>
    %361 = vector.extract_strided_slice %358 {offsets = [0, 20], sizes = [2, 20], strides = [1, 1]} : vector<2x80xf32> to vector<2x20xf32>
    %362 = vector.extract_strided_slice %359 {offsets = [0, 40], sizes = [2, 20], strides = [1, 1]} : vector<2x80xf32> to vector<2x20xf32>
    %363 = vector.extract_strided_slice %358 {offsets = [0, 60], sizes = [2, 20], strides = [1, 1]} : vector<2x80xf32> to vector<2x20xf32>
    %364 = arith.mulf %361, %311 : vector<2x20xf32>
    %365 = arith.mulf %360, %362 : vector<2x20xf32>
    %366 = arith.addf %364, %365 : vector<2x20xf32>
    %367 = math.tanh %366 : vector<2x20xf32>
    %368 = arith.mulf %363, %367 : vector<2x20xf32>
    %369 = tpu.concatenate %368, %331 in 1 : vector<2x20xf32>, vector<2x20xf32> -> vector<2x40xf32>
    %cst_58 = arith.constant dense<0.000000e+00> : vector<2x80xf32>
    %370 = tpu.matmul %369, %4, %cst_58 {dimension_numbers = #tpu.dot_dimension_numbers<[1], [0], [0], [1], [0, 0, 1, 1], [], []>} : vector<2x40xf32>, vector<40x80xf32>, vector<2x80xf32> -> vector<2x80xf32>
    %371 = arith.addf %370, %12 : vector<2x80xf32>
    %372 = arith.negf %371 : vector<2x80xf32>
    %373 = math.exp %372 : vector<2x80xf32>
    %cst_59 = arith.constant 1.000000e+00 : f32
    %374 = vector.broadcast %cst_59 : f32 to vector<2x80xf32>
    %375 = arith.addf %374, %373 : vector<2x80xf32>
    %376 = arith.divf %374, %375 : vector<2x80xf32>
    %377 = math.tanh %371 : vector<2x80xf32>
    %378 = vector.extract_strided_slice %376 {offsets = [0, 0], sizes = [2, 20], strides = [1, 1]} : vector<2x80xf32> to vector<2x20xf32>
    %379 = vector.extract_strided_slice %376 {offsets = [0, 20], sizes = [2, 20], strides = [1, 1]} : vector<2x80xf32> to vector<2x20xf32>
    %380 = vector.extract_strided_slice %377 {offsets = [0, 40], sizes = [2, 20], strides = [1, 1]} : vector<2x80xf32> to vector<2x20xf32>
    %381 = vector.extract_strided_slice %376 {offsets = [0, 60], sizes = [2, 20], strides = [1, 1]} : vector<2x80xf32> to vector<2x20xf32>
    %382 = arith.mulf %379, %329 : vector<2x20xf32>
    %383 = arith.mulf %378, %380 : vector<2x20xf32>
    %384 = arith.addf %382, %383 : vector<2x20xf32>
    %385 = math.tanh %384 : vector<2x20xf32>
    %386 = arith.mulf %381, %385 : vector<2x20xf32>
    %387 = tpu.concatenate %386, %349 in 1 : vector<2x20xf32>, vector<2x20xf32> -> vector<2x40xf32>
    %cst_60 = arith.constant dense<0.000000e+00> : vector<2x80xf32>
    %388 = tpu.matmul %387, %5, %cst_60 {dimension_numbers = #tpu.dot_dimension_numbers<[1], [0], [0], [1], [0, 0, 1, 1], [], []>} : vector<2x40xf32>, vector<40x80xf32>, vector<2x80xf32> -> vector<2x80xf32>
    %389 = arith.addf %388, %15 : vector<2x80xf32>
    %390 = arith.negf %389 : vector<2x80xf32>
    %391 = math.exp %390 : vector<2x80xf32>
    %cst_61 = arith.constant 1.000000e+00 : f32
    %392 = vector.broadcast %cst_61 : f32 to vector<2x80xf32>
    %393 = arith.addf %392, %391 : vector<2x80xf32>
    %394 = arith.divf %392, %393 : vector<2x80xf32>
    %395 = math.tanh %389 : vector<2x80xf32>
    %396 = vector.extract_strided_slice %394 {offsets = [0, 0], sizes = [2, 20], strides = [1, 1]} : vector<2x80xf32> to vector<2x20xf32>
    %397 = vector.extract_strided_slice %394 {offsets = [0, 20], sizes = [2, 20], strides = [1, 1]} : vector<2x80xf32> to vector<2x20xf32>
    %398 = vector.extract_strided_slice %395 {offsets = [0, 40], sizes = [2, 20], strides = [1, 1]} : vector<2x80xf32> to vector<2x20xf32>
    %399 = vector.extract_strided_slice %394 {offsets = [0, 60], sizes = [2, 20], strides = [1, 1]} : vector<2x80xf32> to vector<2x20xf32>
    %400 = arith.mulf %397, %347 : vector<2x20xf32>
    %401 = arith.mulf %396, %398 : vector<2x20xf32>
    %402 = arith.addf %400, %401 : vector<2x20xf32>
    %403 = math.tanh %402 : vector<2x20xf32>
    %404 = arith.mulf %399, %403 : vector<2x20xf32>
    %405 = vector.extract_strided_slice %2 {offsets = [14, 0], sizes = [2, 80], strides = [1, 1]} : vector<16x80xf32> to vector<2x80xf32>
    %cst_62 = arith.constant dense<0.000000e+00> : vector<2x80xf32>
    %406 = tpu.matmul %368, %3, %cst_62 {dimension_numbers = #tpu.dot_dimension_numbers<[1], [0], [0], [1], [0, 0, 1, 1], [], []>} : vector<2x20xf32>, vector<20x80xf32>, vector<2x80xf32> -> vector<2x80xf32>
    %407 = arith.addf %405, %406 : vector<2x80xf32>
    %408 = arith.addf %407, %9 : vector<2x80xf32>
    %409 = arith.negf %408 : vector<2x80xf32>
    %410 = math.exp %409 : vector<2x80xf32>
    %cst_63 = arith.constant 1.000000e+00 : f32
    %411 = vector.broadcast %cst_63 : f32 to vector<2x80xf32>
    %412 = arith.addf %411, %410 : vector<2x80xf32>
    %413 = arith.divf %411, %412 : vector<2x80xf32>
    %414 = math.tanh %408 : vector<2x80xf32>
    %415 = vector.extract_strided_slice %413 {offsets = [0, 0], sizes = [2, 20], strides = [1, 1]} : vector<2x80xf32> to vector<2x20xf32>
    %416 = vector.extract_strided_slice %413 {offsets = [0, 20], sizes = [2, 20], strides = [1, 1]} : vector<2x80xf32> to vector<2x20xf32>
    %417 = vector.extract_strided_slice %414 {offsets = [0, 40], sizes = [2, 20], strides = [1, 1]} : vector<2x80xf32> to vector<2x20xf32>
    %418 = vector.extract_strided_slice %413 {offsets = [0, 60], sizes = [2, 20], strides = [1, 1]} : vector<2x80xf32> to vector<2x20xf32>
    %419 = arith.mulf %416, %366 : vector<2x20xf32>
    %420 = arith.mulf %415, %417 : vector<2x20xf32>
    %421 = arith.addf %419, %420 : vector<2x20xf32>
    %422 = math.tanh %421 : vector<2x20xf32>
    %423 = arith.mulf %418, %422 : vector<2x20xf32>
    %424 = tpu.concatenate %423, %386 in 1 : vector<2x20xf32>, vector<2x20xf32> -> vector<2x40xf32>
    %cst_64 = arith.constant dense<0.000000e+00> : vector<2x80xf32>
    %425 = tpu.matmul %424, %4, %cst_64 {dimension_numbers = #tpu.dot_dimension_numbers<[1], [0], [0], [1], [0, 0, 1, 1], [], []>} : vector<2x40xf32>, vector<40x80xf32>, vector<2x80xf32> -> vector<2x80xf32>
    %426 = arith.addf %425, %12 : vector<2x80xf32>
    %427 = arith.negf %426 : vector<2x80xf32>
    %428 = math.exp %427 : vector<2x80xf32>
    %cst_65 = arith.constant 1.000000e+00 : f32
    %429 = vector.broadcast %cst_65 : f32 to vector<2x80xf32>
    %430 = arith.addf %429, %428 : vector<2x80xf32>
    %431 = arith.divf %429, %430 : vector<2x80xf32>
    %432 = math.tanh %426 : vector<2x80xf32>
    %433 = vector.extract_strided_slice %431 {offsets = [0, 0], sizes = [2, 20], strides = [1, 1]} : vector<2x80xf32> to vector<2x20xf32>
    %434 = vector.extract_strided_slice %431 {offsets = [0, 20], sizes = [2, 20], strides = [1, 1]} : vector<2x80xf32> to vector<2x20xf32>
    %435 = vector.extract_strided_slice %432 {offsets = [0, 40], sizes = [2, 20], strides = [1, 1]} : vector<2x80xf32> to vector<2x20xf32>
    %436 = vector.extract_strided_slice %431 {offsets = [0, 60], sizes = [2, 20], strides = [1, 1]} : vector<2x80xf32> to vector<2x20xf32>
    %437 = arith.mulf %434, %384 : vector<2x20xf32>
    %438 = arith.mulf %433, %435 : vector<2x20xf32>
    %439 = arith.addf %437, %438 : vector<2x20xf32>
    %440 = math.tanh %439 : vector<2x20xf32>
    %441 = arith.mulf %436, %440 : vector<2x20xf32>
    %442 = tpu.concatenate %441, %404 in 1 : vector<2x20xf32>, vector<2x20xf32> -> vector<2x40xf32>
    %cst_66 = arith.constant dense<0.000000e+00> : vector<2x80xf32>
    %443 = tpu.matmul %442, %5, %cst_66 {dimension_numbers = #tpu.dot_dimension_numbers<[1], [0], [0], [1], [0, 0, 1, 1], [], []>} : vector<2x40xf32>, vector<40x80xf32>, vector<2x80xf32> -> vector<2x80xf32>
    %444 = arith.addf %443, %15 : vector<2x80xf32>
    %445 = arith.negf %444 : vector<2x80xf32>
    %446 = math.exp %445 : vector<2x80xf32>
    %cst_67 = arith.constant 1.000000e+00 : f32
    %447 = vector.broadcast %cst_67 : f32 to vector<2x80xf32>
    %448 = arith.addf %447, %446 : vector<2x80xf32>
    %449 = arith.divf %447, %448 : vector<2x80xf32>
    %450 = math.tanh %444 : vector<2x80xf32>
    %451 = vector.extract_strided_slice %449 {offsets = [0, 0], sizes = [2, 20], strides = [1, 1]} : vector<2x80xf32> to vector<2x20xf32>
    %452 = vector.extract_strided_slice %449 {offsets = [0, 20], sizes = [2, 20], strides = [1, 1]} : vector<2x80xf32> to vector<2x20xf32>
    %453 = vector.extract_strided_slice %450 {offsets = [0, 40], sizes = [2, 20], strides = [1, 1]} : vector<2x80xf32> to vector<2x20xf32>
    %454 = vector.extract_strided_slice %449 {offsets = [0, 60], sizes = [2, 20], strides = [1, 1]} : vector<2x80xf32> to vector<2x20xf32>
    %455 = arith.mulf %452, %402 : vector<2x20xf32>
    %456 = arith.mulf %451, %453 : vector<2x20xf32>
    %457 = arith.addf %455, %456 : vector<2x20xf32>
    %458 = math.tanh %457 : vector<2x20xf32>
    %459 = arith.mulf %454, %458 : vector<2x20xf32>
    %cst_68 = arith.constant dense<0.000000e+00> : vector<2x10xf32>
    %460 = tpu.matmul %459, %6, %cst_68 {dimension_numbers = #tpu.dot_dimension_numbers<[1], [0], [0], [1], [0, 0, 1, 1], [], []>} : vector<2x20xf32>, vector<20x10xf32>, vector<2x10xf32> -> vector<2x10xf32>
    %461 = arith.addf %460, %18 : vector<2x10xf32>
    %c0_69 = arith.constant 0 : index
    %c0_70 = arith.constant 0 : index
    %462 = vector.load %arg10[%c0_69, %c0_70] : memref<2x10xf32, #tpu.memory_space<vmem>>, vector<2x10xf32>
    tpu.vector_store %arg10[%c0_69, %c0_70], %461 {strides = array<i32>} : memref<2x10xf32, #tpu.memory_space<vmem>>, vector<2x10xf32>,
    return
  }
}

</mosaic_0001>

<llo_original>
// kernel: tpu_custom_call.1
$region0: #{tpu_custom_call.1}
  #allocation0 [shape = 'u32[]', space=smem, size = 0x4, offset = 0x4, fixed_abs, tag = 'smem constant byte address 0x4 - core index']
  #allocation1 [shape = 'u32[144,128]{1,0:T(1,128)}', space=vmem, size = 0x12000, scoped, tag = 'internal scratch']
  %s0 = inlined_call_operand.hbm [shape: f32[16,10], index: 0, kind: input, shape index: {}]
  %s1 = inlined_call_operand.hbm [shape: f32[10,80], index: 1, kind: input, shape index: {}]
  %s2 = inlined_call_operand.hbm [shape: f32[20,80], index: 2, kind: input, shape index: {}]
  %s3 = inlined_call_operand.vmem [shape: f32[1,80], index: 3, kind: input, shape index: {}]
  %s4 = inlined_call_operand.vmem [shape: f32[40,80], index: 4, kind: input, shape index: {}]
  %s5 = inlined_call_operand.vmem [shape: f32[1,80], index: 5, kind: input, shape index: {}]
  %s6 = inlined_call_operand.hbm [shape: f32[40,80], index: 6, kind: input, shape index: {}]
  %s7 = inlined_call_operand.vmem [shape: f32[1,80], index: 7, kind: input, shape index: {}]
  %s8 = inlined_call_operand.vmem [shape: f32[20,10], index: 8, kind: input, shape index: {}]
  %s9 = inlined_call_operand.vmem [shape: f32[1,10], index: 9, kind: input, shape index: {}]
  %s10 = inlined_call_operand.hbm [shape: f32[2,10], index: 10, kind: output, shape index: {}]
  %s11 = sld [smem:[#allocation0]]
  $region66: #{tpu_custom_call.1} parent=0
    _
  %s13 = ssub.s32 1, %s11
  %s14 = scalar_select 0, %s13, %s11
  $region1: #{tpu_custom_call.1} parent=0
    #allocation2 [shape = 'u8[8192]{0}', space=vmem, size = 0x2000, scoped, tag = 'input window, operand 0, single buffered']
    #allocation3 [shape = 's32[1]{0}', space=sflag, size = 0x4, scoped, tag = 'scoped memory for tpu_custom_call.1']
    #allocation4 [shape = 's32[1]{0}', space=sflag, size = 0x4, scoped, tag = 'scoped memory for tpu_custom_call.1']
    #allocation5 [shape = 'u8[8192]{0}', space=vmem, size = 0x2000, scoped, tag = 'input window, operand 1, single buffered']
    #allocation6 [shape = 's32[1]{0}', space=sflag, size = 0x4, scoped, tag = 'scoped memory for tpu_custom_call.1']
    #allocation7 [shape = 'u8[12288]{0}', space=vmem, size = 0x3000, scoped, tag = 'input window, operand 2, single buffered']
    #allocation8 [shape = 'u8[20480]{0}', space=vmem, size = 0x5000, scoped, tag = 'input window, operand 6, single buffered']
    #allocation9 [shape = 's32[1]{0}', space=sflag, size = 0x4, scoped, tag = 'scoped memory for tpu_custom_call.1']
    #allocation10 [shape = 'u8[1024]{0}', space=vmem, size = 0x400, scoped, tag = 'output window, operand 0, single buffered']
    %15 = vsyncpa [#allocation3], 0
    %16 = vsyncpa [#allocation6], 0
    %17 = vsyncpa [#allocation9], 0
    %18 = vsyncpa [#allocation4], 0
    // Predicated region
    $region2: #{tpu_custom_call.1} parent=1 // pred_check
      _
    $region3: #{tpu_custom_call.1} parent=1 // pred_check_branch
      %20 = sbr.rel (0) target = $region5
    $region4: #{tpu_custom_call.1} parent=1 // pred_region
      %s22 = ssub.s32 256, 256
      %23 = vsyncadd [#allocation3], %s22
      %s24 = sshll.u32 [#allocation2], 4
      %s25 = int_to_ptr.vmem [resolvable:$true] %s24
      %30 = dma.hbm_to_vmem [thread:$0]  %s0, 256, %s25, [#allocation3], 128, 128, 8
    $region5: #{tpu_custom_call.1} parent=1 // pred_fallthru
      _
    // Predicated region
    $region6: #{tpu_custom_call.1} parent=1 // pred_check
      _
    $region7: #{tpu_custom_call.1} parent=1 // pred_check_branch
      %32 = sbr.rel (0) target = $region9
    $region8: #{tpu_custom_call.1} parent=1 // pred_region
      %s34 = ssub.s32 256, 256
      %35 = vsyncadd [#allocation6], %s34
      %s36 = sshll.u32 [#allocation5], 4
      %s37 = int_to_ptr.vmem [resolvable:$true] %s36
      %42 = dma.hbm_to_vmem [thread:$0]  %s1, 256, %s37, [#allocation6], 128, 128, 8
    $region9: #{tpu_custom_call.1} parent=1 // pred_fallthru
      _
    // Predicated region
    $region10: #{tpu_custom_call.1} parent=1 // pred_check
      _
    $region11: #{tpu_custom_call.1} parent=1 // pred_check_branch
      %44 = sbr.rel (0) target = $region13
    $region12: #{tpu_custom_call.1} parent=1 // pred_region
      %s46 = ssub.s32 384, 384
      %47 = vsyncadd [#allocation6], %s46
      %s48 = sshll.u32 [#allocation7], 4
      %s49 = int_to_ptr.vmem [resolvable:$true] %s48
      %54 = dma.hbm_to_vmem [thread:$0]  %s2, 384, %s49, [#allocation6], 128, 128, 8
    $region13: #{tpu_custom_call.1} parent=1 // pred_fallthru
      _
    // Predicated region
    $region14: #{tpu_custom_call.1} parent=1 // pred_check
      _
    $region15: #{tpu_custom_call.1} parent=1 // pred_check_branch
      %56 = sbr.rel (0) target = $region17
    $region16: #{tpu_custom_call.1} parent=1 // pred_region
      _
    $region17: #{tpu_custom_call.1} parent=1 // pred_fallthru
      _
    // Predicated region
    $region18: #{tpu_custom_call.1} parent=1 // pred_check
      _
    $region19: #{tpu_custom_call.1} parent=1 // pred_check_branch
      %58 = sbr.rel (0) target = $region21
    $region20: #{tpu_custom_call.1} parent=1 // pred_region
      _
    $region21: #{tpu_custom_call.1} parent=1 // pred_fallthru
      _
    // Predicated region
    $region22: #{tpu_custom_call.1} parent=1 // pred_check
      _
    $region23: #{tpu_custom_call.1} parent=1 // pred_check_branch
      %60 = sbr.rel (0) target = $region25
    $region24: #{tpu_custom_call.1} parent=1 // pred_region
      _
    $region25: #{tpu_custom_call.1} parent=1 // pred_fallthru
      _
    // Predicated region
    $region26: #{tpu_custom_call.1} parent=1 // pred_check
      _
    $region27: #{tpu_custom_call.1} parent=1 // pred_check_branch
      %62 = sbr.rel (0) target = $region29
    $region28: #{tpu_custom_call.1} parent=1 // pred_region
      %s64 = ssub.s32 640, 640
      %65 = vsyncadd [#allocation9], %s64
      %s66 = sshll.u32 [#allocation8], 4
      %s67 = int_to_ptr.vmem [resolvable:$true] %s66
      %72 = dma.hbm_to_vmem [thread:$0]  %s6, 640, %s67, [#allocation9], 128, 128, 8
    $region29: #{tpu_custom_call.1} parent=1 // pred_fallthru
      _
    // Predicated region
    $region30: #{tpu_custom_call.1} parent=1 // pred_check
      _
    $region31: #{tpu_custom_call.1} parent=1 // pred_check_branch
      %74 = sbr.rel (0) target = $region33
    $region32: #{tpu_custom_call.1} parent=1 // pred_region
      _
    $region33: #{tpu_custom_call.1} parent=1 // pred_fallthru
      _
    // Predicated region
    $region34: #{tpu_custom_call.1} parent=1 // pred_check
      _
    $region35: #{tpu_custom_call.1} parent=1 // pred_check_branch
      %76 = sbr.rel (0) target = $region37
    $region36: #{tpu_custom_call.1} parent=1 // pred_region
      _
    $region37: #{tpu_custom_call.1} parent=1 // pred_fallthru
      _
    // Predicated region
    $region38: #{tpu_custom_call.1} parent=1 // pred_check
      _
    $region39: #{tpu_custom_call.1} parent=1 // pred_check_branch
      %78 = sbr.rel (0) target = $region41
    $region40: #{tpu_custom_call.1} parent=1 // pred_region
      _
    $region41: #{tpu_custom_call.1} parent=1 // pred_fallthru
      _
    // Predicated region
    $region42: #{tpu_custom_call.1} parent=1 // pred_check
      _
    $region43: #{tpu_custom_call.1} parent=1 // pred_check_branch
      %80 = sbr.rel (0) target = $region45
    $region44: #{tpu_custom_call.1} parent=1 // pred_region
      %81 = dma.done [#allocation3], 256
    $region45: #{tpu_custom_call.1} parent=1 // pred_fallthru
      _
    // Predicated region
    $region46: #{tpu_custom_call.1} parent=1 // pred_check
      _
    $region47: #{tpu_custom_call.1} parent=1 // pred_check_branch
      %83 = sbr.rel (0) target = $region49
    $region48: #{tpu_custom_call.1} parent=1 // pred_region
      %84 = dma.done [#allocation6], 256
    $region49: #{tpu_custom_call.1} parent=1 // pred_fallthru
      _
    // Predicated region
    $region50: #{tpu_custom_call.1} parent=1 // pred_check
      _
    $region51: #{tpu_custom_call.1} parent=1 // pred_check_branch
      %86 = sbr.rel (0) target = $region53
    $region52: #{tpu_custom_call.1} parent=1 // pred_region
      %87 = dma.done [#allocation6], 384
    $region53: #{tpu_custom_call.1} parent=1 // pred_fallthru
      _
    // Predicated region
    $region54: #{tpu_custom_call.1} parent=1 // pred_check
      _
    $region55: #{tpu_custom_call.1} parent=1 // pred_check_branch
      %89 = sbr.rel (0) target = $region57
    $region56: #{tpu_custom_call.1} parent=1 // pred_region
      %90 = dma.done [#allocation9], 640
    $region57: #{tpu_custom_call.1} parent=1 // pred_fallthru
      _
    %v91 = vld [vmem:[#allocation2] sm:$0xff]
    %v92 = vld [vmem:[#allocation2 + $0x8] sm:$0xff]
    %v93 = vld [vmem:[#allocation5] sm:$0xff]
    %v94 = vld [vmem:[#allocation5 + $0x8] sm:$0x3]
    %vm95 = vcmask 80896
    %v97 = vsel %vm95, %v91, 0
    %v100 = vsel %vm95, %v92, 0
    %vm102 = vcmask 1041408
    %v104 = vsel %vm102, %v94, 0
    %106 = vmatprep.subr.mxu0 0.0
    %107 = vmatpush1.msra.mxu0 %v93
    %108 = vmatprep.subr.mxu0 0.0
    %109 = vmatpush1.msra.mxu0 %v104
    %110 = vmatprep.subr.mxu0 0.0
    %111 = vmatpush1.msra.mxu0 0.0
    %112 = vmatprep.subr.mxu0 0.0
    %113 = vmatpush1.msra.mxu0 0.0
    %114 = vmatprep.subr.mxu0 0.0
    %115 = vmatpush1.msra.mxu0 0.0
    %116 = vmatprep.subr.mxu0 0.0
    %117 = vmatpush1.msra.mxu0 0.0
    %118 = vmatprep.subr.mxu0 0.0
    %119 = vmatpush1.msra.mxu0 0.0
    %120 = vmatprep.subr.mxu0 0.0
    %121 = vmatpush1.msra.mxu0 0.0
    %122 = vmatprep.subr.mxu0 0.0
    %123 = vmatpush1.msra.mxu0 0.0
    %124 = vmatprep.subr.mxu0 0.0
    %125 = vmatpush1.msra.mxu0 0.0
    %126 = vmatprep.subr.mxu0 0.0
    %127 = vmatpush1.msra.mxu0 0.0
    %128 = vmatprep.subr.mxu0 0.0
    %129 = vmatpush1.msra.mxu0 0.0
    %130 = vmatprep.subr.mxu0 0.0
    %131 = vmatpush1.msra.mxu0 0.0
    %132 = vmatprep.subr.mxu0 0.0
    %133 = vmatpush1.msra.mxu0 0.0
    %134 = vmatprep.subr.mxu0 0.0
    %135 = vmatpush1.msra.mxu0 0.0
    %136 = vmatprep.subr.mxu0 0.0
    %137 = vmatpush1.msra.mxu0 0.0
    %138 = vmatprep.subr.mxu0 0.0
    %139 = vmatpush1.msra.mxu0 0.0
    %140 = vmatprep.subr.mxu0 0.0
    %141 = vmatpush1.msra.mxu0 0.0
    %142 = vmatprep.subr.mxu0 0.0
    %143 = vmatpush1.msra.mxu0 0.0
    %144 = vmatprep.subr.mxu0 0.0
    %145 = vmatpush1.msra.mxu0 0.0
    %146 = vmatprep.subr.mxu0 0.0
    %147 = vmatpush1.msra.mxu0 0.0
    %148 = vmatprep.subr.mxu0 0.0
    %149 = vmatpush1.msra.mxu0 0.0
    %150 = vmatprep.subr.mxu0 0.0
    %151 = vmatpush1.msra.mxu0 0.0
    %152 = vmatprep.subr.mxu0 0.0
    %153 = vmatpush1.msra.mxu0 0.0
    %154 = vmatprep.subr.mxu0 0.0
    %155 = vmatpush1.msra.mxu0 0.0
    %156 = vmatprep.subr.mxu0 0.0
    %157 = vmatpush1.msra.mxu0 0.0
    %158 = vmatprep.subr.mxu0 0.0
    %159 = vmatpush1.msra.mxu0 0.0
    %160 = vmatprep.subr.mxu0 0.0
    %161 = vmatpush1.msra.mxu0 0.0
    %162 = vmatprep.subr.mxu0 0.0
    %163 = vmatpush1.msra.mxu0 0.0
    %164 = vmatprep.subr.mxu0 0.0
    %165 = vmatpush1.msra.mxu0 0.0
    %166 = vmatprep.subr.mxu0 0.0
    %167 = vmatpush1.msra.mxu0 0.0
    %168 = vmatprep.subr.mxu0 0.0
    %169 = vmatpush1.msra.mxu0 0.0
    %170 = vmatprep.mubr.f32.mxu0 0.0
    %171 = vmatmul.mubr.f32.gmra.mrb[0].mxu0 %v97
    %v172 = vpop.f32.mrb[0].mxu0
    %v173 = vadd.f32 0.0, %v172
    %v174 = vpop.f32.mrb[0].mxu0
    %175 = vmatprep.mubr.f32.mxu0 0.0
    %176 = vmatmul.mubr.f32.gmra.mrb[0].mxu0 %v100
    %v177 = vpop.f32.mrb[0].mxu0
    %v178 = vadd.f32 0.0, %v177
    %v179 = vpop.f32.mrb[0].mxu0
    %180 = vdwg.mxu0
    %v181 = vld [vmem:[#allocation7] sm:$0xff]
    %v182 = vld [vmem:[#allocation7 + $0x8] sm:$0xff]
    %v183 = vld [vmem:[#allocation7 + $0x10] sm:$0xf]
    %v184 = vld [vmem:[%s4] sm:$0xff]
    %v185 = vld [vmem:[%s4 + $0x8] sm:$0xff]
    %v186 = vld [vmem:[%s4 + $0x10] sm:$0xff]
    %v187 = vld [vmem:[%s4 + $0x18] sm:$0xff]
    %v188 = vld [vmem:[%s4 + $0x20] sm:$0xff]
    %v189 = vld [vmem:[#allocation8] sm:$0xff]
    %v190 = vld [vmem:[#allocation8 + $0x8] sm:$0xff]
    %v191 = vld [vmem:[#allocation8 + $0x10] sm:$0xff]
    %v192 = vld [vmem:[#allocation8 + $0x18] sm:$0xff]
    %v193 = vld [vmem:[#allocation8 + $0x20] sm:$0xff]
    %v194 = vld [vmem:[%s8] sm:$0xff]
    %v195 = vld [vmem:[%s8 + $0x8] sm:$0xff]
    %v196 = vld [vmem:[%s8 + $0x10] sm:$0xf]
    %v197 = vld [vmem:[%s3] sm:$0x1]
    %v199 = vlaneseq
    %v200 = vshrl.u32 %v199, 7
    %v201 = vsub.s32 0, %v200
    %v202 = vrot.slane %v197, %v201
    %v204 = vld [vmem:[%s5] sm:$0x1]
    %v206 = vlaneseq
    %v207 = vshrl.u32 %v206, 7
    %v208 = vsub.s32 0, %v207
    %v209 = vrot.slane %v204, %v208
    %v211 = vld [vmem:[%s7] sm:$0x1]
    %v213 = vlaneseq
    %v214 = vshrl.u32 %v213, 7
    %v215 = vsub.s32 0, %v214
    %v216 = vrot.slane %v211, %v215
    %v218 = vld [vmem:[%s9] sm:$0x1]
    %v220 = vlaneseq
    %v221 = vshrl.u32 %v220, 7
    %v222 = vsub.s32 0, %v221
    %v223 = vrot.slane %v218, %v222
    %vm225 = vcmask 162816
    %v227 = vsel %vm225, 0.0, 0
    %vm229 = vcmask 1043456
    %v231 = vsel %vm229, %v183, 0
    %233 = vmatprep.subr.mxu0 0.0
    %234 = vmatpush1.msra.mxu0 %v181
    %235 = vmatprep.subr.mxu0 0.0
    %236 = vmatpush1.msra.mxu0 %v182
    %237 = vmatprep.subr.mxu0 0.0
    %238 = vmatpush1.msra.mxu0 %v231
    %239 = vmatprep.subr.mxu0 0.0
    %240 = vmatpush1.msra.mxu0 0.0
    %241 = vmatprep.subr.mxu0 0.0
    %242 = vmatpush1.msra.mxu0 0.0
    %243 = vmatprep.subr.mxu0 0.0
    %244 = vmatpush1.msra.mxu0 0.0
    %245 = vmatprep.subr.mxu0 0.0
    %246 = vmatpush1.msra.mxu0 0.0
    %247 = vmatprep.subr.mxu0 0.0
    %248 = vmatpush1.msra.mxu0 0.0
    %249 = vmatprep.subr.mxu0 0.0
    %250 = vmatpush1.msra.mxu0 0.0
    %251 = vmatprep.subr.mxu0 0.0
    %252 = vmatpush1.msra.mxu0 0.0
    %253 = vmatprep.subr.mxu0 0.0
    %254 = vmatpush1.msra.mxu0 0.0
    %255 = vmatprep.subr.mxu0 0.0
    %256 = vmatpush1.msra.mxu0 0.0
    %257 = vmatprep.subr.mxu0 0.0
    %258 = vmatpush1.msra.mxu0 0.0
    %259 = vmatprep.subr.mxu0 0.0
    %260 = vmatpush1.msra.mxu0 0.0
    %261 = vmatprep.subr.mxu0 0.0
    %262 = vmatpush1.msra.mxu0 0.0
    %263 = vmatprep.subr.mxu0 0.0
    %264 = vmatpush1.msra.mxu0 0.0
    %265 = vmatprep.subr.mxu0 0.0
    %266 = vmatpush1.msra.mxu0 0.0
    %267 = vmatprep.subr.mxu0 0.0
    %268 = vmatpush1.msra.mxu0 0.0
    %269 = vmatprep.subr.mxu0 0.0
    %270 = vmatpush1.msra.mxu0 0.0
    %271 = vmatprep.subr.mxu0 0.0
    %272 = vmatpush1.msra.mxu0 0.0
    %273 = vmatprep.subr.mxu0 0.0
    %274 = vmatpush1.msra.mxu0 0.0
    %275 = vmatprep.subr.mxu0 0.0
    %276 = vmatpush1.msra.mxu0 0.0
    %277 = vmatprep.subr.mxu0 0.0
    %278 = vmatpush1.msra.mxu0 0.0
    %279 = vmatprep.subr.mxu0 0.0
    %280 = vmatpush1.msra.mxu0 0.0
    %281 = vmatprep.subr.mxu0 0.0
    %282 = vmatpush1.msra.mxu0 0.0
    %283 = vmatprep.subr.mxu0 0.0
    %284 = vmatpush1.msra.mxu0 0.0
    %285 = vmatprep.subr.mxu0 0.0
    %286 = vmatpush1.msra.mxu0 0.0
    %287 = vmatprep.subr.mxu0 0.0
    %288 = vmatpush1.msra.mxu0 0.0
    %289 = vmatprep.subr.mxu0 0.0
    %290 = vmatpush1.msra.mxu0 0.0
    %291 = vmatprep.subr.mxu0 0.0
    %292 = vmatpush1.msra.mxu0 0.0
    %293 = vmatprep.subr.mxu0 0.0
    %294 = vmatpush1.msra.mxu0 0.0
    %295 = vmatprep.subr.mxu0 0.0
    %296 = vmatpush1.msra.mxu0 0.0
    %297 = vmatprep.mubr.f32.mxu0 0.0
    %298 = vmatmul.mubr.f32.gmra.mrb[0].mxu0 %v227
    %v299 = vpop.f32.mrb[0].mxu0
    %v300 = vadd.f32 0.0, %v299
    %v301 = vpop.f32.mrb[0].mxu0
    %302 = vdwg.mxu0
    %v303 = vadd.f32 %v173, %v300
    %v304 = vadd.f32 %v303, %v202
    %v305 = vxor.u32 %v304, 2147483648
    %v306 = vmul.f32 %v305, 1.442695
    %v307 = vpow.pop %v306
    %v308 = vadd.f32 %v307, 1.0
    %v309 = vrcp.pop %v308
    %v310 = vmul.f32 1.0, %v309
    %v311 = vtanh.pop %v304
    %v312 = vmul.f32 %v310, 0.0
    %314 = vrot.lane.b32.xlu0 %v311, 88
    %v315 = vpop.permute.xlu0 %314
    %v317 = vmul.f32 %v310, %v315
    %319 = vrot.lane.b32.xlu0 %v317, 20
    %v320 = vpop.permute.xlu0 %319
    %v322 = vadd.f32 %v312, %v320
    %v323 = vtanh.pop %v322
    %325 = vrot.lane.b32.xlu0 %v323, 40
    %v326 = vpop.permute.xlu0 %325
    %v328 = vmul.f32 %v310, %v326
    %330 = vrot.lane.b32.xlu0 %v328, 68
    %v331 = vpop.permute.xlu0 %330
    %v333 = vsel %vm225, %v331, 0.0
    %vm334 = vcmask 326656
    %v336 = vsel %vm334, %v333, 0
    %338 = vmatprep.subr.mxu0 0.0
    %339 = vmatpush1.msra.mxu0 %v184
    %340 = vmatprep.subr.mxu0 0.0
    %341 = vmatpush1.msra.mxu0 %v185
    %342 = vmatprep.subr.mxu0 0.0
    %343 = vmatpush1.msra.mxu0 %v186
    %344 = vmatprep.subr.mxu0 0.0
    %345 = vmatpush1.msra.mxu0 %v187
    %346 = vmatprep.subr.mxu0 0.0
    %347 = vmatpush1.msra.mxu0 %v188
    %348 = vmatprep.subr.mxu0 0.0
    %349 = vmatpush1.msra.mxu0 0.0
    %350 = vmatprep.subr.mxu0 0.0
    %351 = vmatpush1.msra.mxu0 0.0
    %352 = vmatprep.subr.mxu0 0.0
    %353 = vmatpush1.msra.mxu0 0.0
    %354 = vmatprep.subr.mxu0 0.0
    %355 = vmatpush1.msra.mxu0 0.0
    %356 = vmatprep.subr.mxu0 0.0
    %357 = vmatpush1.msra.mxu0 0.0
    %358 = vmatprep.subr.mxu0 0.0
    %359 = vmatpush1.msra.mxu0 0.0
    %360 = vmatprep.subr.mxu0 0.0
    %361 = vmatpush1.msra.mxu0 0.0
    %362 = vmatprep.subr.mxu0 0.0
    %363 = vmatpush1.msra.mxu0 0.0
    %364 = vmatprep.subr.mxu0 0.0
    %365 = vmatpush1.msra.mxu0 0.0
    %366 = vmatprep.subr.mxu0 0.0
    %367 = vmatpush1.msra.mxu0 0.0
    %368 = vmatprep.subr.mxu0 0.0
    %369 = vmatpush1.msra.mxu0 0.0
    %370 = vmatprep.subr.mxu0 0.0
    %371 = vmatpush1.msra.mxu0 0.0
    %372 = vmatprep.subr.mxu0 0.0
    %373 = vmatpush1.msra.mxu0 0.0
    %374 = vmatprep.subr.mxu0 0.0
    %375 = vmatpush1.msra.mxu0 0.0
    %376 = vmatprep.subr.mxu0 0.0
    %377 = vmatpush1.msra.mxu0 0.0
    %378 = vmatprep.subr.mxu0 0.0
    %379 = vmatpush1.msra.mxu0 0.0
    %380 = vmatprep.subr.mxu0 0.0
    %381 = vmatpush1.msra.mxu0 0.0
    %382 = vmatprep.subr.mxu0 0.0
    %383 = vmatpush1.msra.mxu0 0.0
    %384 = vmatprep.subr.mxu0 0.0
    %385 = vmatpush1.msra.mxu0 0.0
    %386 = vmatprep.subr.mxu0 0.0
    %387 = vmatpush1.msra.mxu0 0.0
    %388 = vmatprep.subr.mxu0 0.0
    %389 = vmatpush1.msra.mxu0 0.0
    %390 = vmatprep.subr.mxu0 0.0
    %391 = vmatpush1.msra.mxu0 0.0
    %392 = vmatprep.subr.mxu0 0.0
    %393 = vmatpush1.msra.mxu0 0.0
    %394 = vmatprep.subr.mxu0 0.0
    %395 = vmatpush1.msra.mxu0 0.0
    %396 = vmatprep.subr.mxu0 0.0
    %397 = vmatpush1.msra.mxu0 0.0
    %398 = vmatprep.subr.mxu0 0.0
    %399 = vmatpush1.msra.mxu0 0.0
    %400 = vmatprep.subr.mxu0 0.0
    %401 = vmatpush1.msra.mxu0 0.0
    %402 = vmatprep.mubr.f32.mxu0 0.0
    %403 = vmatmul.mubr.f32.gmra.mrb[0].mxu0 %v336
    %v404 = vpop.f32.mrb[0].mxu0
    %v405 = vadd.f32 %v209, %v404
    %v406 = vpop.f32.mrb[0].mxu0
    %407 = vdwg.mxu0
    %v408 = vxor.u32 %v405, 2147483648
    %v409 = vmul.f32 %v408, 1.442695
    %v410 = vpow.pop %v409
    %v411 = vadd.f32 %v410, 1.0
    %v412 = vrcp.pop %v411
    %v413 = vmul.f32 1.0, %v412
    %v414 = vtanh.pop %v405
    %v415 = vmul.f32 %v413, 0.0
    %417 = vrot.lane.b32.xlu0 %v414, 88
    %v418 = vpop.permute.xlu0 %417
    %v420 = vmul.f32 %v413, %v418
    %422 = vrot.lane.b32.xlu0 %v420, 20
    %v423 = vpop.permute.xlu0 %422
    %v425 = vadd.f32 %v415, %v423
    %v426 = vtanh.pop %v425
    %428 = vrot.lane.b32.xlu0 %v426, 40
    %v429 = vpop.permute.xlu0 %428
    %v431 = vmul.f32 %v413, %v429
    %433 = vrot.lane.b32.xlu0 %v431, 68
    %v434 = vpop.permute.xlu0 %433
    %v436 = vsel %vm225, %v434, 0.0
    %v438 = vsel %vm334, %v436, 0
    %440 = vmatprep.subr.mxu0 0.0
    %441 = vmatpush1.msra.mxu0 %v189
    %442 = vmatprep.subr.mxu0 0.0
    %443 = vmatpush1.msra.mxu0 %v190
    %444 = vmatprep.subr.mxu0 0.0
    %445 = vmatpush1.msra.mxu0 %v191
    %446 = vmatprep.subr.mxu0 0.0
    %447 = vmatpush1.msra.mxu0 %v192
    %448 = vmatprep.subr.mxu0 0.0
    %449 = vmatpush1.msra.mxu0 %v193
    %450 = vmatprep.subr.mxu0 0.0
    %451 = vmatpush1.msra.mxu0 0.0
    %452 = vmatprep.subr.mxu0 0.0
    %453 = vmatpush1.msra.mxu0 0.0
    %454 = vmatprep.subr.mxu0 0.0
    %455 = vmatpush1.msra.mxu0 0.0
    %456 = vmatprep.subr.mxu0 0.0
    %457 = vmatpush1.msra.mxu0 0.0
    %458 = vmatprep.subr.mxu0 0.0
    %459 = vmatpush1.msra.mxu0 0.0
    %460 = vmatprep.subr.mxu0 0.0
    %461 = vmatpush1.msra.mxu0 0.0
    %462 = vmatprep.subr.mxu0 0.0
    %463 = vmatpush1.msra.mxu0 0.0
    %464 = vmatprep.subr.mxu0 0.0
    %465 = vmatpush1.msra.mxu0 0.0
    %466 = vmatprep.subr.mxu0 0.0
    %467 = vmatpush1.msra.mxu0 0.0
    %468 = vmatprep.subr.mxu0 0.0
    %469 = vmatpush1.msra.mxu0 0.0
    %470 = vmatprep.subr.mxu0 0.0
    %471 = vmatpush1.msra.mxu0 0.0
    %472 = vmatprep.subr.mxu0 0.0
    %473 = vmatpush1.msra.mxu0 0.0
    %474 = vmatprep.subr.mxu0 0.0
    %475 = vmatpush1.msra.mxu0 0.0
    %476 = vmatprep.subr.mxu0 0.0
    %477 = vmatpush1.msra.mxu0 0.0
    %478 = vmatprep.subr.mxu0 0.0
    %479 = vmatpush1.msra.mxu0 0.0
    %480 = vmatprep.subr.mxu0 0.0
    %481 = vmatpush1.msra.mxu0 0.0
    %482 = vmatprep.subr.mxu0 0.0
    %483 = vmatpush1.msra.mxu0 0.0
    %484 = vmatprep.subr.mxu0 0.0
    %485 = vmatpush1.msra.mxu0 0.0
    %486 = vmatprep.subr.mxu0 0.0
    %487 = vmatpush1.msra.mxu0 0.0
    %488 = vmatprep.subr.mxu0 0.0
    %489 = vmatpush1.msra.mxu0 0.0
    %490 = vmatprep.subr.mxu0 0.0
    %491 = vmatpush1.msra.mxu0 0.0
    %492 = vmatprep.subr.mxu0 0.0
    %493 = vmatpush1.msra.mxu0 0.0
    %494 = vmatprep.subr.mxu0 0.0
    %495 = vmatpush1.msra.mxu0 0.0
    %496 = vmatprep.subr.mxu0 0.0
    %497 = vmatpush1.msra.mxu0 0.0
    %498 = vmatprep.subr.mxu0 0.0
    %499 = vmatpush1.msra.mxu0 0.0
    %500 = vmatprep.subr.mxu0 0.0
    %501 = vmatpush1.msra.mxu0 0.0
    %502 = vmatprep.subr.mxu0 0.0
    %503 = vmatpush1.msra.mxu0 0.0
    %504 = vmatprep.mubr.f32.mxu0 0.0
    %505 = vmatmul.mubr.f32.gmra.mrb[0].mxu0 %v438
    %v506 = vpop.f32.mrb[0].mxu0
    %v507 = vadd.f32 %v216, %v506
    %v508 = vpop.f32.mrb[0].mxu0
    %509 = vdwg.mxu0
    %v510 = vxor.u32 %v507, 2147483648
    %v511 = vmul.f32 %v510, 1.442695
    %v512 = vpow.pop %v511
    %v513 = vadd.f32 %v512, 1.0
    %v514 = vrcp.pop %v513
    %v515 = vmul.f32 1.0, %v514
    %v516 = vtanh.pop %v507
    %v517 = vmul.f32 %v515, 0.0
    %519 = vrot.lane.b32.xlu0 %v516, 88
    %v520 = vpop.permute.xlu0 %519
    %v522 = vmul.f32 %v515, %v520
    %524 = vrot.lane.b32.xlu0 %v522, 20
    %v525 = vpop.permute.xlu0 %524
    %v527 = vadd.f32 %v517, %v525
    %v528 = vtanh.pop %v527
    %530 = vrot.lane.b32.xlu0 %v528, 40
    %v531 = vpop.permute.xlu0 %530
    %v533 = vmul.f32 %v515, %v531
    %v534 = vsel %vm225, %v331, 0
    %536 = vmatprep.subr.mxu0 0.0
    %537 = vmatpush1.msra.mxu0 %v181
    %538 = vmatprep.subr.mxu0 0.0
    %539 = vmatpush1.msra.mxu0 %v182
    %540 = vmatprep.subr.mxu0 0.0
    %541 = vmatpush1.msra.mxu0 %v231
    %542 = vmatprep.subr.mxu0 0.0
    %543 = vmatpush1.msra.mxu0 0.0
    %544 = vmatprep.subr.mxu0 0.0
    %545 = vmatpush1.msra.mxu0 0.0
    %546 = vmatprep.subr.mxu0 0.0
    %547 = vmatpush1.msra.mxu0 0.0
    %548 = vmatprep.subr.mxu0 0.0
    %549 = vmatpush1.msra.mxu0 0.0
    %550 = vmatprep.subr.mxu0 0.0
    %551 = vmatpush1.msra.mxu0 0.0
    %552 = vmatprep.subr.mxu0 0.0
    %553 = vmatpush1.msra.mxu0 0.0
    %554 = vmatprep.subr.mxu0 0.0
    %555 = vmatpush1.msra.mxu0 0.0
    %556 = vmatprep.subr.mxu0 0.0
    %557 = vmatpush1.msra.mxu0 0.0
    %558 = vmatprep.subr.mxu0 0.0
    %559 = vmatpush1.msra.mxu0 0.0
    %560 = vmatprep.subr.mxu0 0.0
    %561 = vmatpush1.msra.mxu0 0.0
    %562 = vmatprep.subr.mxu0 0.0
    %563 = vmatpush1.msra.mxu0 0.0
    %564 = vmatprep.subr.mxu0 0.0
    %565 = vmatpush1.msra.mxu0 0.0
    %566 = vmatprep.subr.mxu0 0.0
    %567 = vmatpush1.msra.mxu0 0.0
    %568 = vmatprep.subr.mxu0 0.0
    %569 = vmatpush1.msra.mxu0 0.0
    %570 = vmatprep.subr.mxu0 0.0
    %571 = vmatpush1.msra.mxu0 0.0
    %572 = vmatprep.subr.mxu0 0.0
    %573 = vmatpush1.msra.mxu0 0.0
    %574 = vmatprep.subr.mxu0 0.0
    %575 = vmatpush1.msra.mxu0 0.0
    %576 = vmatprep.subr.mxu0 0.0
    %577 = vmatpush1.msra.mxu0 0.0
    %578 = vmatprep.subr.mxu0 0.0
    %579 = vmatpush1.msra.mxu0 0.0
    %580 = vmatprep.subr.mxu0 0.0
    %581 = vmatpush1.msra.mxu0 0.0
    %582 = vmatprep.subr.mxu0 0.0
    %583 = vmatpush1.msra.mxu0 0.0
    %584 = vmatprep.subr.mxu0 0.0
    %585 = vmatpush1.msra.mxu0 0.0
    %586 = vmatprep.subr.mxu0 0.0
    %587 = vmatpush1.msra.mxu0 0.0
    %588 = vmatprep.subr.mxu0 0.0
    %589 = vmatpush1.msra.mxu0 0.0
    %590 = vmatprep.subr.mxu0 0.0
    %591 = vmatpush1.msra.mxu0 0.0
    %592 = vmatprep.subr.mxu0 0.0
    %593 = vmatpush1.msra.mxu0 0.0
    %594 = vmatprep.subr.mxu0 0.0
    %595 = vmatpush1.msra.mxu0 0.0
    %596 = vmatprep.subr.mxu0 0.0
    %597 = vmatpush1.msra.mxu0 0.0
    %598 = vmatprep.subr.mxu0 0.0
    %599 = vmatpush1.msra.mxu0 0.0
    %600 = vmatprep.mubr.f32.mxu0 0.0
    %601 = vmatmul.mubr.f32.gmra.mrb[0].mxu0 %v534
    %v602 = vpop.f32.mrb[0].mxu0
    %v603 = vadd.f32 0.0, %v602
    %v604 = vpop.f32.mrb[0].mxu0
    %605 = vdwg.mxu0
    %v607 = vrot.slane %v603, 6
    %v609 = vadd.f32 %v173, %v607
    %v610 = vadd.f32 %v609, %v202
    %v611 = vxor.u32 %v610, 2147483648
    %v612 = vmul.f32 %v611, 1.442695
    %v613 = vpow.pop %v612
    %v614 = vadd.f32 %v613, 1.0
    %v615 = vrcp.pop %v614
    %v616 = vmul.f32 1.0, %v615
    %v617 = vtanh.pop %v610
    %v619 = vrot.slane %v322, 6
    %v621 = vmul.f32 %v616, %v619
    %623 = vrot.lane.b32.xlu0 %v617, 88
    %v624 = vpop.permute.xlu0 %623
    %v626 = vmul.f32 %v616, %v624
    %628 = vrot.lane.b32.xlu0 %v626, 20
    %v629 = vpop.permute.xlu0 %628
    %v631 = vadd.f32 %v621, %v629
    %v632 = vtanh.pop %v631
    %634 = vrot.lane.b32.xlu0 %v632, 40
    %v635 = vpop.permute.xlu0 %634
    %v637 = vmul.f32 %v616, %v635
    %639 = vrot.lane.b32.xlu0 %v637, 68
    %v640 = vpop.permute.xlu0 %639
    %v642 = vrot.slane %v431, 6
    %643 = vrot.lane.b32.xlu0 %v642, 88
    %v644 = vpop.permute.xlu0 %643
    %v646 = vsel %vm225, %v640, %v644
    %v648 = vrot.slane %v646, 2
    %v649 = vsel %vm334, %v648, 0
    %651 = vmatprep.subr.mxu0 0.0
    %652 = vmatpush1.msra.mxu0 %v184
    %653 = vmatprep.subr.mxu0 0.0
    %654 = vmatpush1.msra.mxu0 %v185
    %655 = vmatprep.subr.mxu0 0.0
    %656 = vmatpush1.msra.mxu0 %v186
    %657 = vmatprep.subr.mxu0 0.0
    %658 = vmatpush1.msra.mxu0 %v187
    %659 = vmatprep.subr.mxu0 0.0
    %660 = vmatpush1.msra.mxu0 %v188
    %661 = vmatprep.subr.mxu0 0.0
    %662 = vmatpush1.msra.mxu0 0.0
    %663 = vmatprep.subr.mxu0 0.0
    %664 = vmatpush1.msra.mxu0 0.0
    %665 = vmatprep.subr.mxu0 0.0
    %666 = vmatpush1.msra.mxu0 0.0
    %667 = vmatprep.subr.mxu0 0.0
    %668 = vmatpush1.msra.mxu0 0.0
    %669 = vmatprep.subr.mxu0 0.0
    %670 = vmatpush1.msra.mxu0 0.0
    %671 = vmatprep.subr.mxu0 0.0
    %672 = vmatpush1.msra.mxu0 0.0
    %673 = vmatprep.subr.mxu0 0.0
    %674 = vmatpush1.msra.mxu0 0.0
    %675 = vmatprep.subr.mxu0 0.0
    %676 = vmatpush1.msra.mxu0 0.0
    %677 = vmatprep.subr.mxu0 0.0
    %678 = vmatpush1.msra.mxu0 0.0
    %679 = vmatprep.subr.mxu0 0.0
    %680 = vmatpush1.msra.mxu0 0.0
    %681 = vmatprep.subr.mxu0 0.0
    %682 = vmatpush1.msra.mxu0 0.0
    %683 = vmatprep.subr.mxu0 0.0
    %684 = vmatpush1.msra.mxu0 0.0
    %685 = vmatprep.subr.mxu0 0.0
    %686 = vmatpush1.msra.mxu0 0.0
    %687 = vmatprep.subr.mxu0 0.0
    %688 = vmatpush1.msra.mxu0 0.0
    %689 = vmatprep.subr.mxu0 0.0
    %690 = vmatpush1.msra.mxu0 0.0
    %691 = vmatprep.subr.mxu0 0.0
    %692 = vmatpush1.msra.mxu0 0.0
    %693 = vmatprep.subr.mxu0 0.0
    %694 = vmatpush1.msra.mxu0 0.0
    %695 = vmatprep.subr.mxu0 0.0
    %696 = vmatpush1.msra.mxu0 0.0
    %697 = vmatprep.subr.mxu0 0.0
    %698 = vmatpush1.msra.mxu0 0.0
    %699 = vmatprep.subr.mxu0 0.0
    %700 = vmatpush1.msra.mxu0 0.0
    %701 = vmatprep.subr.mxu0 0.0
    %702 = vmatpush1.msra.mxu0 0.0
    %703 = vmatprep.subr.mxu0 0.0
    %704 = vmatpush1.msra.mxu0 0.0
    %705 = vmatprep.subr.mxu0 0.0
    %706 = vmatpush1.msra.mxu0 0.0
    %707 = vmatprep.subr.mxu0 0.0
    %708 = vmatpush1.msra.mxu0 0.0
    %709 = vmatprep.subr.mxu0 0.0
    %710 = vmatpush1.msra.mxu0 0.0
    %711 = vmatprep.subr.mxu0 0.0
    %712 = vmatpush1.msra.mxu0 0.0
    %713 = vmatprep.subr.mxu0 0.0
    %714 = vmatpush1.msra.mxu0 0.0
    %715 = vmatprep.mubr.f32.mxu0 0.0
    %716 = vmatmul.mubr.f32.gmra.mrb[0].mxu0 %v649
    %v717 = vpop.f32.mrb[0].mxu0
    %v718 = vadd.f32 %v209, %v717
    %v719 = vpop.f32.mrb[0].mxu0
    %720 = vdwg.mxu0
    %v721 = vxor.u32 %v718, 2147483648
    %v722 = vmul.f32 %v721, 1.442695
    %v723 = vpow.pop %v722
    %v724 = vadd.f32 %v723, 1.0
    %v725 = vrcp.pop %v724
    %v726 = vmul.f32 1.0, %v725
    %v727 = vtanh.pop %v718
    %v728 = vmul.f32 %v726, %v425
    %730 = vrot.lane.b32.xlu0 %v727, 88
    %v731 = vpop.permute.xlu0 %730
    %v733 = vmul.f32 %v726, %v731
    %735 = vrot.lane.b32.xlu0 %v733, 20
    %v736 = vpop.permute.xlu0 %735
    %v738 = vadd.f32 %v728, %v736
    %v739 = vtanh.pop %v738
    %741 = vrot.lane.b32.xlu0 %v739, 40
    %v742 = vpop.permute.xlu0 %741
    %v744 = vmul.f32 %v726, %v742
    %746 = vrot.lane.b32.xlu0 %v744, 68
    %v747 = vpop.permute.xlu0 %746
    %750 = vrot.lane.b32.xlu0 %v533, 88
    %v751 = vpop.permute.xlu0 %750
    %v753 = vsel %vm225, %v747, %v751
    %v755 = vsel %vm334, %v753, 0
    %757 = vmatprep.subr.mxu0 0.0
    %758 = vmatpush1.msra.mxu0 %v189
    %759 = vmatprep.subr.mxu0 0.0
    %760 = vmatpush1.msra.mxu0 %v190
    %761 = vmatprep.subr.mxu0 0.0
    %762 = vmatpush1.msra.mxu0 %v191
    %763 = vmatprep.subr.mxu0 0.0
    %764 = vmatpush1.msra.mxu0 %v192
    %765 = vmatprep.subr.mxu0 0.0
    %766 = vmatpush1.msra.mxu0 %v193
    %767 = vmatprep.subr.mxu0 0.0
    %768 = vmatpush1.msra.mxu0 0.0
    %769 = vmatprep.subr.mxu0 0.0
    %770 = vmatpush1.msra.mxu0 0.0
    %771 = vmatprep.subr.mxu0 0.0
    %772 = vmatpush1.msra.mxu0 0.0
    %773 = vmatprep.subr.mxu0 0.0
    %774 = vmatpush1.msra.mxu0 0.0
    %775 = vmatprep.subr.mxu0 0.0
    %776 = vmatpush1.msra.mxu0 0.0
    %777 = vmatprep.subr.mxu0 0.0
    %778 = vmatpush1.msra.mxu0 0.0
    %779 = vmatprep.subr.mxu0 0.0
    %780 = vmatpush1.msra.mxu0 0.0
    %781 = vmatprep.subr.mxu0 0.0
    %782 = vmatpush1.msra.mxu0 0.0
    %783 = vmatprep.subr.mxu0 0.0
    %784 = vmatpush1.msra.mxu0 0.0
    %785 = vmatprep.subr.mxu0 0.0
    %786 = vmatpush1.msra.mxu0 0.0
    %787 = vmatprep.subr.mxu0 0.0
    %788 = vmatpush1.msra.mxu0 0.0
    %789 = vmatprep.subr.mxu0 0.0
    %790 = vmatpush1.msra.mxu0 0.0
    %791 = vmatprep.subr.mxu0 0.0
    %792 = vmatpush1.msra.mxu0 0.0
    %793 = vmatprep.subr.mxu0 0.0
    %794 = vmatpush1.msra.mxu0 0.0
    %795 = vmatprep.subr.mxu0 0.0
    %796 = vmatpush1.msra.mxu0 0.0
    %797 = vmatprep.subr.mxu0 0.0
    %798 = vmatpush1.msra.mxu0 0.0
    %799 = vmatprep.subr.mxu0 0.0
    %800 = vmatpush1.msra.mxu0 0.0
    %801 = vmatprep.subr.mxu0 0.0
    %802 = vmatpush1.msra.mxu0 0.0
    %803 = vmatprep.subr.mxu0 0.0
    %804 = vmatpush1.msra.mxu0 0.0
    %805 = vmatprep.subr.mxu0 0.0
    %806 = vmatpush1.msra.mxu0 0.0
    %807 = vmatprep.subr.mxu0 0.0
    %808 = vmatpush1.msra.mxu0 0.0
    %809 = vmatprep.subr.mxu0 0.0
    %810 = vmatpush1.msra.mxu0 0.0
    %811 = vmatprep.subr.mxu0 0.0
    %812 = vmatpush1.msra.mxu0 0.0
    %813 = vmatprep.subr.mxu0 0.0
    %814 = vmatpush1.msra.mxu0 0.0
    %815 = vmatprep.subr.mxu0 0.0
    %816 = vmatpush1.msra.mxu0 0.0
    %817 = vmatprep.subr.mxu0 0.0
    %818 = vmatpush1.msra.mxu0 0.0
    %819 = vmatprep.subr.mxu0 0.0
    %820 = vmatpush1.msra.mxu0 0.0
    %821 = vmatprep.mubr.f32.mxu0 0.0
    %822 = vmatmul.mubr.f32.gmra.mrb[0].mxu0 %v755
    %v823 = vpop.f32.mrb[0].mxu0
    %v824 = vadd.f32 %v216, %v823
    %v825 = vpop.f32.mrb[0].mxu0
    %826 = vdwg.mxu0
    %v827 = vxor.u32 %v824, 2147483648
    %v828 = vmul.f32 %v827, 1.442695
    %v829 = vpow.pop %v828
    %v830 = vadd.f32 %v829, 1.0
    %v831 = vrcp.pop %v830
    %v832 = vmul.f32 1.0, %v831
    %v833 = vtanh.pop %v824
    %v834 = vmul.f32 %v832, %v527
    %836 = vrot.lane.b32.xlu0 %v833, 88
    %v837 = vpop.permute.xlu0 %836
    %v839 = vmul.f32 %v832, %v837
    %841 = vrot.lane.b32.xlu0 %v839, 20
    %v842 = vpop.permute.xlu0 %841
    %v844 = vadd.f32 %v834, %v842
    %v845 = vtanh.pop %v844
    %847 = vrot.lane.b32.xlu0 %v845, 40
    %v848 = vpop.permute.xlu0 %847
    %v850 = vmul.f32 %v832, %v848
    %v851 = vrot.slane %v637, 2
    %852 = vrot.lane.b32.xlu0 %v851, 68
    %v853 = vpop.permute.xlu0 %852
    %v854 = vsel %vm225, %v853, 0
    %856 = vmatprep.subr.mxu0 0.0
    %857 = vmatpush1.msra.mxu0 %v181
    %858 = vmatprep.subr.mxu0 0.0
    %859 = vmatpush1.msra.mxu0 %v182
    %860 = vmatprep.subr.mxu0 0.0
    %861 = vmatpush1.msra.mxu0 %v231
    %862 = vmatprep.subr.mxu0 0.0
    %863 = vmatpush1.msra.mxu0 0.0
    %864 = vmatprep.subr.mxu0 0.0
    %865 = vmatpush1.msra.mxu0 0.0
    %866 = vmatprep.subr.mxu0 0.0
    %867 = vmatpush1.msra.mxu0 0.0
    %868 = vmatprep.subr.mxu0 0.0
    %869 = vmatpush1.msra.mxu0 0.0
    %870 = vmatprep.subr.mxu0 0.0
    %871 = vmatpush1.msra.mxu0 0.0
    %872 = vmatprep.subr.mxu0 0.0
    %873 = vmatpush1.msra.mxu0 0.0
    %874 = vmatprep.subr.mxu0 0.0
    %875 = vmatpush1.msra.mxu0 0.0
    %876 = vmatprep.subr.mxu0 0.0
    %877 = vmatpush1.msra.mxu0 0.0
    %878 = vmatprep.subr.mxu0 0.0
    %879 = vmatpush1.msra.mxu0 0.0
    %880 = vmatprep.subr.mxu0 0.0
    %881 = vmatpush1.msra.mxu0 0.0
    %882 = vmatprep.subr.mxu0 0.0
    %883 = vmatpush1.msra.mxu0 0.0
    %884 = vmatprep.subr.mxu0 0.0
    %885 = vmatpush1.msra.mxu0 0.0
    %886 = vmatprep.subr.mxu0 0.0
    %887 = vmatpush1.msra.mxu0 0.0
    %888 = vmatprep.subr.mxu0 0.0
    %889 = vmatpush1.msra.mxu0 0.0
    %890 = vmatprep.subr.mxu0 0.0
    %891 = vmatpush1.msra.mxu0 0.0
    %892 = vmatprep.subr.mxu0 0.0
    %893 = vmatpush1.msra.mxu0 0.0
    %894 = vmatprep.subr.mxu0 0.0
    %895 = vmatpush1.msra.mxu0 0.0
    %896 = vmatprep.subr.mxu0 0.0
    %897 = vmatpush1.msra.mxu0 0.0
    %898 = vmatprep.subr.mxu0 0.0
    %899 = vmatpush1.msra.mxu0 0.0
    %900 = vmatprep.subr.mxu0 0.0
    %901 = vmatpush1.msra.mxu0 0.0
    %902 = vmatprep.subr.mxu0 0.0
    %903 = vmatpush1.msra.mxu0 0.0
    %904 = vmatprep.subr.mxu0 0.0
    %905 = vmatpush1.msra.mxu0 0.0
    %906 = vmatprep.subr.mxu0 0.0
    %907 = vmatpush1.msra.mxu0 0.0
    %908 = vmatprep.subr.mxu0 0.0
    %909 = vmatpush1.msra.mxu0 0.0
    %910 = vmatprep.subr.mxu0 0.0
    %911 = vmatpush1.msra.mxu0 0.0
    %912 = vmatprep.subr.mxu0 0.0
    %913 = vmatpush1.msra.mxu0 0.0
    %914 = vmatprep.subr.mxu0 0.0
    %915 = vmatpush1.msra.mxu0 0.0
    %916 = vmatprep.subr.mxu0 0.0
    %917 = vmatpush1.msra.mxu0 0.0
    %918 = vmatprep.subr.mxu0 0.0
    %919 = vmatpush1.msra.mxu0 0.0
    %920 = vmatprep.mubr.f32.mxu0 0.0
    %921 = vmatmul.mubr.f32.gmra.mrb[0].mxu0 %v854
    %v922 = vpop.f32.mrb[0].mxu0
    %v923 = vadd.f32 0.0, %v922
    %v924 = vpop.f32.mrb[0].mxu0
    %925 = vdwg.mxu0
    %v927 = vrot.slane %v923, 4
    %v929 = vadd.f32 %v173, %v927
    %v930 = vadd.f32 %v929, %v202
    %v931 = vxor.u32 %v930, 2147483648
    %v932 = vmul.f32 %v931, 1.442695
    %v933 = vpow.pop %v932
    %v934 = vadd.f32 %v933, 1.0
    %v935 = vrcp.pop %v934
    %v936 = vmul.f32 1.0, %v935
    %v937 = vtanh.pop %v930
    %v939 = vrot.slane %v631, 6
    %v941 = vmul.f32 %v936, %v939
    %943 = vrot.lane.b32.xlu0 %v937, 88
    %v944 = vpop.permute.xlu0 %943
    %v946 = vmul.f32 %v936, %v944
    %948 = vrot.lane.b32.xlu0 %v946, 20
    %v949 = vpop.permute.xlu0 %948
    %v951 = vadd.f32 %v941, %v949
    %v952 = vtanh.pop %v951
    %954 = vrot.lane.b32.xlu0 %v952, 40
    %v955 = vpop.permute.xlu0 %954
    %v957 = vmul.f32 %v936, %v955
    %959 = vrot.lane.b32.xlu0 %v957, 68
    %v960 = vpop.permute.xlu0 %959
    %v962 = vrot.slane %v744, 4
    %963 = vrot.lane.b32.xlu0 %v962, 88
    %v964 = vpop.permute.xlu0 %963
    %v966 = vsel %vm225, %v960, %v964
    %v968 = vrot.slane %v966, 4
    %v969 = vsel %vm334, %v968, 0
    %971 = vmatprep.subr.mxu0 0.0
    %972 = vmatpush1.msra.mxu0 %v184
    %973 = vmatprep.subr.mxu0 0.0
    %974 = vmatpush1.msra.mxu0 %v185
    %975 = vmatprep.subr.mxu0 0.0
    %976 = vmatpush1.msra.mxu0 %v186
    %977 = vmatprep.subr.mxu0 0.0
    %978 = vmatpush1.msra.mxu0 %v187
    %979 = vmatprep.subr.mxu0 0.0
    %980 = vmatpush1.msra.mxu0 %v188
    %981 = vmatprep.subr.mxu0 0.0
    %982 = vmatpush1.msra.mxu0 0.0
    %983 = vmatprep.subr.mxu0 0.0
    %984 = vmatpush1.msra.mxu0 0.0
    %985 = vmatprep.subr.mxu0 0.0
    %986 = vmatpush1.msra.mxu0 0.0
    %987 = vmatprep.subr.mxu0 0.0
    %988 = vmatpush1.msra.mxu0 0.0
    %989 = vmatprep.subr.mxu0 0.0
    %990 = vmatpush1.msra.mxu0 0.0
    %991 = vmatprep.subr.mxu0 0.0
    %992 = vmatpush1.msra.mxu0 0.0
    %993 = vmatprep.subr.mxu0 0.0
    %994 = vmatpush1.msra.mxu0 0.0
    %995 = vmatprep.subr.mxu0 0.0
    %996 = vmatpush1.msra.mxu0 0.0
    %997 = vmatprep.subr.mxu0 0.0
    %998 = vmatpush1.msra.mxu0 0.0
    %999 = vmatprep.subr.mxu0 0.0
    %1000 = vmatpush1.msra.mxu0 0.0
    %1001 = vmatprep.subr.mxu0 0.0
    %1002 = vmatpush1.msra.mxu0 0.0
    %1003 = vmatprep.subr.mxu0 0.0
    %1004 = vmatpush1.msra.mxu0 0.0
    %1005 = vmatprep.subr.mxu0 0.0
    %1006 = vmatpush1.msra.mxu0 0.0
    %1007 = vmatprep.subr.mxu0 0.0
    %1008 = vmatpush1.msra.mxu0 0.0
    %1009 = vmatprep.subr.mxu0 0.0
    %1010 = vmatpush1.msra.mxu0 0.0
    %1011 = vmatprep.subr.mxu0 0.0
    %1012 = vmatpush1.msra.mxu0 0.0
    %1013 = vmatprep.subr.mxu0 0.0
    %1014 = vmatpush1.msra.mxu0 0.0
    %1015 = vmatprep.subr.mxu0 0.0
    %1016 = vmatpush1.msra.mxu0 0.0
    %1017 = vmatprep.subr.mxu0 0.0
    %1018 = vmatpush1.msra.mxu0 0.0
    %1019 = vmatprep.subr.mxu0 0.0
    %1020 = vmatpush1.msra.mxu0 0.0
    %1021 = vmatprep.subr.mxu0 0.0
    %1022 = vmatpush1.msra.mxu0 0.0
    %1023 = vmatprep.subr.mxu0 0.0
    %1024 = vmatpush1.msra.mxu0 0.0
    %1025 = vmatprep.subr.mxu0 0.0
    %1026 = vmatpush1.msra.mxu0 0.0
    %1027 = vmatprep.subr.mxu0 0.0
    %1028 = vmatpush1.msra.mxu0 0.0
    %1029 = vmatprep.subr.mxu0 0.0
    %1030 = vmatpush1.msra.mxu0 0.0
    %1031 = vmatprep.subr.mxu0 0.0
    %1032 = vmatpush1.msra.mxu0 0.0
    %1033 = vmatprep.subr.mxu0 0.0
    %1034 = vmatpush1.msra.mxu0 0.0
    %1035 = vmatprep.mubr.f32.mxu0 0.0
    %1036 = vmatmul.mubr.f32.gmra.mrb[0].mxu0 %v969
    %v1037 = vpop.f32.mrb[0].mxu0
    %v1038 = vadd.f32 %v209, %v1037
    %v1039 = vpop.f32.mrb[0].mxu0
    %1040 = vdwg.mxu0
    %v1041 = vxor.u32 %v1038, 2147483648
    %v1042 = vmul.f32 %v1041, 1.442695
    %v1043 = vpow.pop %v1042
    %v1044 = vadd.f32 %v1043, 1.0
    %v1045 = vrcp.pop %v1044
    %v1046 = vmul.f32 1.0, %v1045
    %v1047 = vtanh.pop %v1038
    %v1048 = vmul.f32 %v1046, %v738
    %1050 = vrot.lane.b32.xlu0 %v1047, 88
    %v1051 = vpop.permute.xlu0 %1050
    %v1053 = vmul.f32 %v1046, %v1051
    %1055 = vrot.lane.b32.xlu0 %v1053, 20
    %v1056 = vpop.permute.xlu0 %1055
    %v1058 = vadd.f32 %v1048, %v1056
    %v1059 = vtanh.pop %v1058
    %1061 = vrot.lane.b32.xlu0 %v1059, 40
    %v1062 = vpop.permute.xlu0 %1061
    %v1064 = vmul.f32 %v1046, %v1062
    %1066 = vrot.lane.b32.xlu0 %v1064, 68
    %v1067 = vpop.permute.xlu0 %1066
    %1070 = vrot.lane.b32.xlu0 %v850, 88
    %v1071 = vpop.permute.xlu0 %1070
    %v1073 = vsel %vm225, %v1067, %v1071
    %v1075 = vsel %vm334, %v1073, 0
    %1077 = vmatprep.subr.mxu0 0.0
    %1078 = vmatpush1.msra.mxu0 %v189
    %1079 = vmatprep.subr.mxu0 0.0
    %1080 = vmatpush1.msra.mxu0 %v190
    %1081 = vmatprep.subr.mxu0 0.0
    %1082 = vmatpush1.msra.mxu0 %v191
    %1083 = vmatprep.subr.mxu0 0.0
    %1084 = vmatpush1.msra.mxu0 %v192
    %1085 = vmatprep.subr.mxu0 0.0
    %1086 = vmatpush1.msra.mxu0 %v193
    %1087 = vmatprep.subr.mxu0 0.0
    %1088 = vmatpush1.msra.mxu0 0.0
    %1089 = vmatprep.subr.mxu0 0.0
    %1090 = vmatpush1.msra.mxu0 0.0
    %1091 = vmatprep.subr.mxu0 0.0
    %1092 = vmatpush1.msra.mxu0 0.0
    %1093 = vmatprep.subr.mxu0 0.0
    %1094 = vmatpush1.msra.mxu0 0.0
    %1095 = vmatprep.subr.mxu0 0.0
    %1096 = vmatpush1.msra.mxu0 0.0
    %1097 = vmatprep.subr.mxu0 0.0
    %1098 = vmatpush1.msra.mxu0 0.0
    %1099 = vmatprep.subr.mxu0 0.0
    %1100 = vmatpush1.msra.mxu0 0.0
    %1101 = vmatprep.subr.mxu0 0.0
    %1102 = vmatpush1.msra.mxu0 0.0
    %1103 = vmatprep.subr.mxu0 0.0
    %1104 = vmatpush1.msra.mxu0 0.0
    %1105 = vmatprep.subr.mxu0 0.0
    %1106 = vmatpush1.msra.mxu0 0.0
    %1107 = vmatprep.subr.mxu0 0.0
    %1108 = vmatpush1.msra.mxu0 0.0
    %1109 = vmatprep.subr.mxu0 0.0
    %1110 = vmatpush1.msra.mxu0 0.0
    %1111 = vmatprep.subr.mxu0 0.0
    %1112 = vmatpush1.msra.mxu0 0.0
    %1113 = vmatprep.subr.mxu0 0.0
    %1114 = vmatpush1.msra.mxu0 0.0
    %1115 = vmatprep.subr.mxu0 0.0
    %1116 = vmatpush1.msra.mxu0 0.0
    %1117 = vmatprep.subr.mxu0 0.0
    %1118 = vmatpush1.msra.mxu0 0.0
    %1119 = vmatprep.subr.mxu0 0.0
    %1120 = vmatpush1.msra.mxu0 0.0
    %1121 = vmatprep.subr.mxu0 0.0
    %1122 = vmatpush1.msra.mxu0 0.0
    %1123 = vmatprep.subr.mxu0 0.0
    %1124 = vmatpush1.msra.mxu0 0.0
    %1125 = vmatprep.subr.mxu0 0.0
    %1126 = vmatpush1.msra.mxu0 0.0
    %1127 = vmatprep.subr.mxu0 0.0
    %1128 = vmatpush1.msra.mxu0 0.0
    %1129 = vmatprep.subr.mxu0 0.0
    %1130 = vmatpush1.msra.mxu0 0.0
    %1131 = vmatprep.subr.mxu0 0.0
    %1132 = vmatpush1.msra.mxu0 0.0
    %1133 = vmatprep.subr.mxu0 0.0
    %1134 = vmatpush1.msra.mxu0 0.0
    %1135 = vmatprep.subr.mxu0 0.0
    %1136 = vmatpush1.msra.mxu0 0.0
    %1137 = vmatprep.subr.mxu0 0.0
    %1138 = vmatpush1.msra.mxu0 0.0
    %1139 = vmatprep.subr.mxu0 0.0
    %1140 = vmatpush1.msra.mxu0 0.0
    %1141 = vmatprep.mubr.f32.mxu0 0.0
    %1142 = vmatmul.mubr.f32.gmra.mrb[0].mxu0 %v1075
    %v1143 = vpop.f32.mrb[0].mxu0
    %v1144 = vadd.f32 %v216, %v1143
    %v1145 = vpop.f32.mrb[0].mxu0
    %1146 = vdwg.mxu0
    %v1147 = vxor.u32 %v1144, 2147483648
    %v1148 = vmul.f32 %v1147, 1.442695
    %v1149 = vpow.pop %v1148
    %v1150 = vadd.f32 %v1149, 1.0
    %v1151 = vrcp.pop %v1150
    %v1152 = vmul.f32 1.0, %v1151
    %v1153 = vtanh.pop %v1144
    %v1154 = vmul.f32 %v1152, %v844
    %1156 = vrot.lane.b32.xlu0 %v1153, 88
    %v1157 = vpop.permute.xlu0 %1156
    %v1159 = vmul.f32 %v1152, %v1157
    %1161 = vrot.lane.b32.xlu0 %v1159, 20
    %v1162 = vpop.permute.xlu0 %1161
    %v1164 = vadd.f32 %v1154, %v1162
    %v1165 = vtanh.pop %v1164
    %1167 = vrot.lane.b32.xlu0 %v1165, 40
    %v1168 = vpop.permute.xlu0 %1167
    %v1170 = vmul.f32 %v1152, %v1168
    %v1171 = vrot.slane %v957, 4
    %1172 = vrot.lane.b32.xlu0 %v1171, 68
    %v1173 = vpop.permute.xlu0 %1172
    %v1174 = vsel %vm225, %v1173, 0
    %1176 = vmatprep.subr.mxu0 0.0
    %1177 = vmatpush1.msra.mxu0 %v181
    %1178 = vmatprep.subr.mxu0 0.0
    %1179 = vmatpush1.msra.mxu0 %v182
    %1180 = vmatprep.subr.mxu0 0.0
    %1181 = vmatpush1.msra.mxu0 %v231
    %1182 = vmatprep.subr.mxu0 0.0
    %1183 = vmatpush1.msra.mxu0 0.0
    %1184 = vmatprep.subr.mxu0 0.0
    %1185 = vmatpush1.msra.mxu0 0.0
    %1186 = vmatprep.subr.mxu0 0.0
    %1187 = vmatpush1.msra.mxu0 0.0
    %1188 = vmatprep.subr.mxu0 0.0
    %1189 = vmatpush1.msra.mxu0 0.0
    %1190 = vmatprep.subr.mxu0 0.0
    %1191 = vmatpush1.msra.mxu0 0.0
    %1192 = vmatprep.subr.mxu0 0.0
    %1193 = vmatpush1.msra.mxu0 0.0
    %1194 = vmatprep.subr.mxu0 0.0
    %1195 = vmatpush1.msra.mxu0 0.0
    %1196 = vmatprep.subr.mxu0 0.0
    %1197 = vmatpush1.msra.mxu0 0.0
    %1198 = vmatprep.subr.mxu0 0.0
    %1199 = vmatpush1.msra.mxu0 0.0
    %1200 = vmatprep.subr.mxu0 0.0
    %1201 = vmatpush1.msra.mxu0 0.0
    %1202 = vmatprep.subr.mxu0 0.0
    %1203 = vmatpush1.msra.mxu0 0.0
    %1204 = vmatprep.subr.mxu0 0.0
    %1205 = vmatpush1.msra.mxu0 0.0
    %1206 = vmatprep.subr.mxu0 0.0
    %1207 = vmatpush1.msra.mxu0 0.0
    %1208 = vmatprep.subr.mxu0 0.0
    %1209 = vmatpush1.msra.mxu0 0.0
    %1210 = vmatprep.subr.mxu0 0.0
    %1211 = vmatpush1.msra.mxu0 0.0
    %1212 = vmatprep.subr.mxu0 0.0
    %1213 = vmatpush1.msra.mxu0 0.0
    %1214 = vmatprep.subr.mxu0 0.0
    %1215 = vmatpush1.msra.mxu0 0.0
    %1216 = vmatprep.subr.mxu0 0.0
    %1217 = vmatpush1.msra.mxu0 0.0
    %1218 = vmatprep.subr.mxu0 0.0
    %1219 = vmatpush1.msra.mxu0 0.0
    %1220 = vmatprep.subr.mxu0 0.0
    %1221 = vmatpush1.msra.mxu0 0.0
    %1222 = vmatprep.subr.mxu0 0.0
    %1223 = vmatpush1.msra.mxu0 0.0
    %1224 = vmatprep.subr.mxu0 0.0
    %1225 = vmatpush1.msra.mxu0 0.0
    %1226 = vmatprep.subr.mxu0 0.0
    %1227 = vmatpush1.msra.mxu0 0.0
    %1228 = vmatprep.subr.mxu0 0.0
    %1229 = vmatpush1.msra.mxu0 0.0
    %1230 = vmatprep.subr.mxu0 0.0
    %1231 = vmatpush1.msra.mxu0 0.0
    %1232 = vmatprep.subr.mxu0 0.0
    %1233 = vmatpush1.msra.mxu0 0.0
    %1234 = vmatprep.subr.mxu0 0.0
    %1235 = vmatpush1.msra.mxu0 0.0
    %1236 = vmatprep.subr.mxu0 0.0
    %1237 = vmatpush1.msra.mxu0 0.0
    %1238 = vmatprep.subr.mxu0 0.0
    %1239 = vmatpush1.msra.mxu0 0.0
    %1240 = vmatprep.mubr.f32.mxu0 0.0
    %1241 = vmatmul.mubr.f32.gmra.mrb[0].mxu0 %v1174
    %v1242 = vpop.f32.mrb[0].mxu0
    %v1243 = vadd.f32 0.0, %v1242
    %v1244 = vpop.f32.mrb[0].mxu0
    %1245 = vdwg.mxu0
    %v1247 = vrot.slane %v1243, 2
    %v1249 = vadd.f32 %v173, %v1247
    %v1250 = vadd.f32 %v1249, %v202
    %v1251 = vxor.u32 %v1250, 2147483648
    %v1252 = vmul.f32 %v1251, 1.442695
    %v1253 = vpow.pop %v1252
    %v1254 = vadd.f32 %v1253, 1.0
    %v1255 = vrcp.pop %v1254
    %v1256 = vmul.f32 1.0, %v1255
    %v1257 = vtanh.pop %v1250
    %v1259 = vrot.slane %v951, 6
    %v1261 = vmul.f32 %v1256, %v1259
    %1263 = vrot.lane.b32.xlu0 %v1257, 88
    %v1264 = vpop.permute.xlu0 %1263
    %v1266 = vmul.f32 %v1256, %v1264
    %1268 = vrot.lane.b32.xlu0 %v1266, 20
    %v1269 = vpop.permute.xlu0 %1268
    %v1271 = vadd.f32 %v1261, %v1269
    %v1272 = vtanh.pop %v1271
    %1274 = vrot.lane.b32.xlu0 %v1272, 40
    %v1275 = vpop.permute.xlu0 %1274
    %v1277 = vmul.f32 %v1256, %v1275
    %1279 = vrot.lane.b32.xlu0 %v1277, 68
    %v1280 = vpop.permute.xlu0 %1279
    %v1282 = vrot.slane %v1064, 2
    %1283 = vrot.lane.b32.xlu0 %v1282, 88
    %v1284 = vpop.permute.xlu0 %1283
    %v1286 = vsel %vm225, %v1280, %v1284
    %v1288 = vrot.slane %v1286, 6
    %v1289 = vsel %vm334, %v1288, 0
    %1291 = vmatprep.subr.mxu0 0.0
    %1292 = vmatpush1.msra.mxu0 %v184
    %1293 = vmatprep.subr.mxu0 0.0
    %1294 = vmatpush1.msra.mxu0 %v185
    %1295 = vmatprep.subr.mxu0 0.0
    %1296 = vmatpush1.msra.mxu0 %v186
    %1297 = vmatprep.subr.mxu0 0.0
    %1298 = vmatpush1.msra.mxu0 %v187
    %1299 = vmatprep.subr.mxu0 0.0
    %1300 = vmatpush1.msra.mxu0 %v188
    %1301 = vmatprep.subr.mxu0 0.0
    %1302 = vmatpush1.msra.mxu0 0.0
    %1303 = vmatprep.subr.mxu0 0.0
    %1304 = vmatpush1.msra.mxu0 0.0
    %1305 = vmatprep.subr.mxu0 0.0
    %1306 = vmatpush1.msra.mxu0 0.0
    %1307 = vmatprep.subr.mxu0 0.0
    %1308 = vmatpush1.msra.mxu0 0.0
    %1309 = vmatprep.subr.mxu0 0.0
    %1310 = vmatpush1.msra.mxu0 0.0
    %1311 = vmatprep.subr.mxu0 0.0
    %1312 = vmatpush1.msra.mxu0 0.0
    %1313 = vmatprep.subr.mxu0 0.0
    %1314 = vmatpush1.msra.mxu0 0.0
    %1315 = vmatprep.subr.mxu0 0.0
    %1316 = vmatpush1.msra.mxu0 0.0
    %1317 = vmatprep.subr.mxu0 0.0
    %1318 = vmatpush1.msra.mxu0 0.0
    %1319 = vmatprep.subr.mxu0 0.0
    %1320 = vmatpush1.msra.mxu0 0.0
    %1321 = vmatprep.subr.mxu0 0.0
    %1322 = vmatpush1.msra.mxu0 0.0
    %1323 = vmatprep.subr.mxu0 0.0
    %1324 = vmatpush1.msra.mxu0 0.0
    %1325 = vmatprep.subr.mxu0 0.0
    %1326 = vmatpush1.msra.mxu0 0.0
    %1327 = vmatprep.subr.mxu0 0.0
    %1328 = vmatpush1.msra.mxu0 0.0
    %1329 = vmatprep.subr.mxu0 0.0
    %1330 = vmatpush1.msra.mxu0 0.0
    %1331 = vmatprep.subr.mxu0 0.0
    %1332 = vmatpush1.msra.mxu0 0.0
    %1333 = vmatprep.subr.mxu0 0.0
    %1334 = vmatpush1.msra.mxu0 0.0
    %1335 = vmatprep.subr.mxu0 0.0
    %1336 = vmatpush1.msra.mxu0 0.0
    %1337 = vmatprep.subr.mxu0 0.0
    %1338 = vmatpush1.msra.mxu0 0.0
    %1339 = vmatprep.subr.mxu0 0.0
    %1340 = vmatpush1.msra.mxu0 0.0
    %1341 = vmatprep.subr.mxu0 0.0
    %1342 = vmatpush1.msra.mxu0 0.0
    %1343 = vmatprep.subr.mxu0 0.0
    %1344 = vmatpush1.msra.mxu0 0.0
    %1345 = vmatprep.subr.mxu0 0.0
    %1346 = vmatpush1.msra.mxu0 0.0
    %1347 = vmatprep.subr.mxu0 0.0
    %1348 = vmatpush1.msra.mxu0 0.0
    %1349 = vmatprep.subr.mxu0 0.0
    %1350 = vmatpush1.msra.mxu0 0.0
    %1351 = vmatprep.subr.mxu0 0.0
    %1352 = vmatpush1.msra.mxu0 0.0
    %1353 = vmatprep.subr.mxu0 0.0
    %1354 = vmatpush1.msra.mxu0 0.0
    %1355 = vmatprep.mubr.f32.mxu0 0.0
    %1356 = vmatmul.mubr.f32.gmra.mrb[0].mxu0 %v1289
    %v1357 = vpop.f32.mrb[0].mxu0
    %v1358 = vadd.f32 %v209, %v1357
    %v1359 = vpop.f32.mrb[0].mxu0
    %1360 = vdwg.mxu0
    %v1361 = vxor.u32 %v1358, 2147483648
    %v1362 = vmul.f32 %v1361, 1.442695
    %v1363 = vpow.pop %v1362
    %v1364 = vadd.f32 %v1363, 1.0
    %v1365 = vrcp.pop %v1364
    %v1366 = vmul.f32 1.0, %v1365
    %v1367 = vtanh.pop %v1358
    %v1368 = vmul.f32 %v1366, %v1058
    %1370 = vrot.lane.b32.xlu0 %v1367, 88
    %v1371 = vpop.permute.xlu0 %1370
    %v1373 = vmul.f32 %v1366, %v1371
    %1375 = vrot.lane.b32.xlu0 %v1373, 20
    %v1376 = vpop.permute.xlu0 %1375
    %v1378 = vadd.f32 %v1368, %v1376
    %v1379 = vtanh.pop %v1378
    %1381 = vrot.lane.b32.xlu0 %v1379, 40
    %v1382 = vpop.permute.xlu0 %1381
    %v1384 = vmul.f32 %v1366, %v1382
    %1386 = vrot.lane.b32.xlu0 %v1384, 68
    %v1387 = vpop.permute.xlu0 %1386
    %1390 = vrot.lane.b32.xlu0 %v1170, 88
    %v1391 = vpop.permute.xlu0 %1390
    %v1393 = vsel %vm225, %v1387, %v1391
    %v1395 = vsel %vm334, %v1393, 0
    %1397 = vmatprep.subr.mxu0 0.0
    %1398 = vmatpush1.msra.mxu0 %v189
    %1399 = vmatprep.subr.mxu0 0.0
    %1400 = vmatpush1.msra.mxu0 %v190
    %1401 = vmatprep.subr.mxu0 0.0
    %1402 = vmatpush1.msra.mxu0 %v191
    %1403 = vmatprep.subr.mxu0 0.0
    %1404 = vmatpush1.msra.mxu0 %v192
    %1405 = vmatprep.subr.mxu0 0.0
    %1406 = vmatpush1.msra.mxu0 %v193
    %1407 = vmatprep.subr.mxu0 0.0
    %1408 = vmatpush1.msra.mxu0 0.0
    %1409 = vmatprep.subr.mxu0 0.0
    %1410 = vmatpush1.msra.mxu0 0.0
    %1411 = vmatprep.subr.mxu0 0.0
    %1412 = vmatpush1.msra.mxu0 0.0
    %1413 = vmatprep.subr.mxu0 0.0
    %1414 = vmatpush1.msra.mxu0 0.0
    %1415 = vmatprep.subr.mxu0 0.0
    %1416 = vmatpush1.msra.mxu0 0.0
    %1417 = vmatprep.subr.mxu0 0.0
    %1418 = vmatpush1.msra.mxu0 0.0
    %1419 = vmatprep.subr.mxu0 0.0
    %1420 = vmatpush1.msra.mxu0 0.0
    %1421 = vmatprep.subr.mxu0 0.0
    %1422 = vmatpush1.msra.mxu0 0.0
    %1423 = vmatprep.subr.mxu0 0.0
    %1424 = vmatpush1.msra.mxu0 0.0
    %1425 = vmatprep.subr.mxu0 0.0
    %1426 = vmatpush1.msra.mxu0 0.0
    %1427 = vmatprep.subr.mxu0 0.0
    %1428 = vmatpush1.msra.mxu0 0.0
    %1429 = vmatprep.subr.mxu0 0.0
    %1430 = vmatpush1.msra.mxu0 0.0
    %1431 = vmatprep.subr.mxu0 0.0
    %1432 = vmatpush1.msra.mxu0 0.0
    %1433 = vmatprep.subr.mxu0 0.0
    %1434 = vmatpush1.msra.mxu0 0.0
    %1435 = vmatprep.subr.mxu0 0.0
    %1436 = vmatpush1.msra.mxu0 0.0
    %1437 = vmatprep.subr.mxu0 0.0
    %1438 = vmatpush1.msra.mxu0 0.0
    %1439 = vmatprep.subr.mxu0 0.0
    %1440 = vmatpush1.msra.mxu0 0.0
    %1441 = vmatprep.subr.mxu0 0.0
    %1442 = vmatpush1.msra.mxu0 0.0
    %1443 = vmatprep.subr.mxu0 0.0
    %1444 = vmatpush1.msra.mxu0 0.0
    %1445 = vmatprep.subr.mxu0 0.0
    %1446 = vmatpush1.msra.mxu0 0.0
    %1447 = vmatprep.subr.mxu0 0.0
    %1448 = vmatpush1.msra.mxu0 0.0
    %1449 = vmatprep.subr.mxu0 0.0
    %1450 = vmatpush1.msra.mxu0 0.0
    %1451 = vmatprep.subr.mxu0 0.0
    %1452 = vmatpush1.msra.mxu0 0.0
    %1453 = vmatprep.subr.mxu0 0.0
    %1454 = vmatpush1.msra.mxu0 0.0
    %1455 = vmatprep.subr.mxu0 0.0
    %1456 = vmatpush1.msra.mxu0 0.0
    %1457 = vmatprep.subr.mxu0 0.0
    %1458 = vmatpush1.msra.mxu0 0.0
    %1459 = vmatprep.subr.mxu0 0.0
    %1460 = vmatpush1.msra.mxu0 0.0
    %1461 = vmatprep.mubr.f32.mxu0 0.0
    %1462 = vmatmul.mubr.f32.gmra.mrb[0].mxu0 %v1395
    %v1463 = vpop.f32.mrb[0].mxu0
    %v1464 = vadd.f32 %v216, %v1463
    %v1465 = vpop.f32.mrb[0].mxu0
    %1466 = vdwg.mxu0
    %v1467 = vxor.u32 %v1464, 2147483648
    %v1468 = vmul.f32 %v1467, 1.442695
    %v1469 = vpow.pop %v1468
    %v1470 = vadd.f32 %v1469, 1.0
    %v1471 = vrcp.pop %v1470
    %v1472 = vmul.f32 1.0, %v1471
    %v1473 = vtanh.pop %v1464
    %v1474 = vmul.f32 %v1472, %v1164
    %1476 = vrot.lane.b32.xlu0 %v1473, 88
    %v1477 = vpop.permute.xlu0 %1476
    %v1479 = vmul.f32 %v1472, %v1477
    %1481 = vrot.lane.b32.xlu0 %v1479, 20
    %v1482 = vpop.permute.xlu0 %1481
    %v1484 = vadd.f32 %v1474, %v1482
    %v1485 = vtanh.pop %v1484
    %1487 = vrot.lane.b32.xlu0 %v1485, 40
    %v1488 = vpop.permute.xlu0 %1487
    %v1490 = vmul.f32 %v1472, %v1488
    %v1491 = vrot.slane %v1277, 6
    %1492 = vrot.lane.b32.xlu0 %v1491, 68
    %v1493 = vpop.permute.xlu0 %1492
    %v1494 = vsel %vm225, %v1493, 0
    %1496 = vmatprep.subr.mxu0 0.0
    %1497 = vmatpush1.msra.mxu0 %v181
    %1498 = vmatprep.subr.mxu0 0.0
    %1499 = vmatpush1.msra.mxu0 %v182
    %1500 = vmatprep.subr.mxu0 0.0
    %1501 = vmatpush1.msra.mxu0 %v231
    %1502 = vmatprep.subr.mxu0 0.0
    %1503 = vmatpush1.msra.mxu0 0.0
    %1504 = vmatprep.subr.mxu0 0.0
    %1505 = vmatpush1.msra.mxu0 0.0
    %1506 = vmatprep.subr.mxu0 0.0
    %1507 = vmatpush1.msra.mxu0 0.0
    %1508 = vmatprep.subr.mxu0 0.0
    %1509 = vmatpush1.msra.mxu0 0.0
    %1510 = vmatprep.subr.mxu0 0.0
    %1511 = vmatpush1.msra.mxu0 0.0
    %1512 = vmatprep.subr.mxu0 0.0
    %1513 = vmatpush1.msra.mxu0 0.0
    %1514 = vmatprep.subr.mxu0 0.0
    %1515 = vmatpush1.msra.mxu0 0.0
    %1516 = vmatprep.subr.mxu0 0.0
    %1517 = vmatpush1.msra.mxu0 0.0
    %1518 = vmatprep.subr.mxu0 0.0
    %1519 = vmatpush1.msra.mxu0 0.0
    %1520 = vmatprep.subr.mxu0 0.0
    %1521 = vmatpush1.msra.mxu0 0.0
    %1522 = vmatprep.subr.mxu0 0.0
    %1523 = vmatpush1.msra.mxu0 0.0
    %1524 = vmatprep.subr.mxu0 0.0
    %1525 = vmatpush1.msra.mxu0 0.0
    %1526 = vmatprep.subr.mxu0 0.0
    %1527 = vmatpush1.msra.mxu0 0.0
    %1528 = vmatprep.subr.mxu0 0.0
    %1529 = vmatpush1.msra.mxu0 0.0
    %1530 = vmatprep.subr.mxu0 0.0
    %1531 = vmatpush1.msra.mxu0 0.0
    %1532 = vmatprep.subr.mxu0 0.0
    %1533 = vmatpush1.msra.mxu0 0.0
    %1534 = vmatprep.subr.mxu0 0.0
    %1535 = vmatpush1.msra.mxu0 0.0
    %1536 = vmatprep.subr.mxu0 0.0
    %1537 = vmatpush1.msra.mxu0 0.0
    %1538 = vmatprep.subr.mxu0 0.0
    %1539 = vmatpush1.msra.mxu0 0.0
    %1540 = vmatprep.subr.mxu0 0.0
    %1541 = vmatpush1.msra.mxu0 0.0
    %1542 = vmatprep.subr.mxu0 0.0
    %1543 = vmatpush1.msra.mxu0 0.0
    %1544 = vmatprep.subr.mxu0 0.0
    %1545 = vmatpush1.msra.mxu0 0.0
    %1546 = vmatprep.subr.mxu0 0.0
    %1547 = vmatpush1.msra.mxu0 0.0
    %1548 = vmatprep.subr.mxu0 0.0
    %1549 = vmatpush1.msra.mxu0 0.0
    %1550 = vmatprep.subr.mxu0 0.0
    %1551 = vmatpush1.msra.mxu0 0.0
    %1552 = vmatprep.subr.mxu0 0.0
    %1553 = vmatpush1.msra.mxu0 0.0
    %1554 = vmatprep.subr.mxu0 0.0
    %1555 = vmatpush1.msra.mxu0 0.0
    %1556 = vmatprep.subr.mxu0 0.0
    %1557 = vmatpush1.msra.mxu0 0.0
    %1558 = vmatprep.subr.mxu0 0.0
    %1559 = vmatpush1.msra.mxu0 0.0
    %1560 = vmatprep.mubr.f32.mxu0 0.0
    %1561 = vmatmul.mubr.f32.gmra.mrb[0].mxu0 %v1494
    %v1562 = vpop.f32.mrb[0].mxu0
    %v1563 = vadd.f32 0.0, %v1562
    %v1564 = vpop.f32.mrb[0].mxu0
    %1565 = vdwg.mxu0
    %v1566 = vadd.f32 %v178, %v1563
    %v1567 = vadd.f32 %v1566, %v202
    %v1568 = vxor.u32 %v1567, 2147483648
    %v1569 = vmul.f32 %v1568, 1.442695
    %v1570 = vpow.pop %v1569
    %v1571 = vadd.f32 %v1570, 1.0
    %v1572 = vrcp.pop %v1571
    %v1573 = vmul.f32 1.0, %v1572
    %v1574 = vtanh.pop %v1567
    %v1576 = vrot.slane %v1271, 6
    %v1578 = vmul.f32 %v1573, %v1576
    %1580 = vrot.lane.b32.xlu0 %v1574, 88
    %v1581 = vpop.permute.xlu0 %1580
    %v1583 = vmul.f32 %v1573, %v1581
    %1585 = vrot.lane.b32.xlu0 %v1583, 20
    %v1586 = vpop.permute.xlu0 %1585
    %v1588 = vadd.f32 %v1578, %v1586
    %v1589 = vtanh.pop %v1588
    %1591 = vrot.lane.b32.xlu0 %v1589, 40
    %v1592 = vpop.permute.xlu0 %1591
    %v1594 = vmul.f32 %v1573, %v1592
    %1596 = vrot.lane.b32.xlu0 %v1594, 68
    %v1597 = vpop.permute.xlu0 %1596
    %1599 = vrot.lane.b32.xlu0 %v1384, 88
    %v1600 = vpop.permute.xlu0 %1599
    %v1602 = vsel %vm225, %v1597, %v1600
    %v1604 = vsel %vm334, %v1602, 0
    %1606 = vmatprep.subr.mxu0 0.0
    %1607 = vmatpush1.msra.mxu0 %v184
    %1608 = vmatprep.subr.mxu0 0.0
    %1609 = vmatpush1.msra.mxu0 %v185
    %1610 = vmatprep.subr.mxu0 0.0
    %1611 = vmatpush1.msra.mxu0 %v186
    %1612 = vmatprep.subr.mxu0 0.0
    %1613 = vmatpush1.msra.mxu0 %v187
    %1614 = vmatprep.subr.mxu0 0.0
    %1615 = vmatpush1.msra.mxu0 %v188
    %1616 = vmatprep.subr.mxu0 0.0
    %1617 = vmatpush1.msra.mxu0 0.0
    %1618 = vmatprep.subr.mxu0 0.0
    %1619 = vmatpush1.msra.mxu0 0.0
    %1620 = vmatprep.subr.mxu0 0.0
    %1621 = vmatpush1.msra.mxu0 0.0
    %1622 = vmatprep.subr.mxu0 0.0
    %1623 = vmatpush1.msra.mxu0 0.0
    %1624 = vmatprep.subr.mxu0 0.0
    %1625 = vmatpush1.msra.mxu0 0.0
    %1626 = vmatprep.subr.mxu0 0.0
    %1627 = vmatpush1.msra.mxu0 0.0
    %1628 = vmatprep.subr.mxu0 0.0
    %1629 = vmatpush1.msra.mxu0 0.0
    %1630 = vmatprep.subr.mxu0 0.0
    %1631 = vmatpush1.msra.mxu0 0.0
    %1632 = vmatprep.subr.mxu0 0.0
    %1633 = vmatpush1.msra.mxu0 0.0
    %1634 = vmatprep.subr.mxu0 0.0
    %1635 = vmatpush1.msra.mxu0 0.0
    %1636 = vmatprep.subr.mxu0 0.0
    %1637 = vmatpush1.msra.mxu0 0.0
    %1638 = vmatprep.subr.mxu0 0.0
    %1639 = vmatpush1.msra.mxu0 0.0
    %1640 = vmatprep.subr.mxu0 0.0
    %1641 = vmatpush1.msra.mxu0 0.0
    %1642 = vmatprep.subr.mxu0 0.0
    %1643 = vmatpush1.msra.mxu0 0.0
    %1644 = vmatprep.subr.mxu0 0.0
    %1645 = vmatpush1.msra.mxu0 0.0
    %1646 = vmatprep.subr.mxu0 0.0
    %1647 = vmatpush1.msra.mxu0 0.0
    %1648 = vmatprep.subr.mxu0 0.0
    %1649 = vmatpush1.msra.mxu0 0.0
    %1650 = vmatprep.subr.mxu0 0.0
    %1651 = vmatpush1.msra.mxu0 0.0
    %1652 = vmatprep.subr.mxu0 0.0
    %1653 = vmatpush1.msra.mxu0 0.0
    %1654 = vmatprep.subr.mxu0 0.0
    %1655 = vmatpush1.msra.mxu0 0.0
    %1656 = vmatprep.subr.mxu0 0.0
    %1657 = vmatpush1.msra.mxu0 0.0
    %1658 = vmatprep.subr.mxu0 0.0
    %1659 = vmatpush1.msra.mxu0 0.0
    %1660 = vmatprep.subr.mxu0 0.0
    %1661 = vmatpush1.msra.mxu0 0.0
    %1662 = vmatprep.subr.mxu0 0.0
    %1663 = vmatpush1.msra.mxu0 0.0
    %1664 = vmatprep.subr.mxu0 0.0
    %1665 = vmatpush1.msra.mxu0 0.0
    %1666 = vmatprep.subr.mxu0 0.0
    %1667 = vmatpush1.msra.mxu0 0.0
    %1668 = vmatprep.subr.mxu0 0.0
    %1669 = vmatpush1.msra.mxu0 0.0
    %1670 = vmatprep.mubr.f32.mxu0 0.0
    %1671 = vmatmul.mubr.f32.gmra.mrb[0].mxu0 %v1604
    %v1672 = vpop.f32.mrb[0].mxu0
    %v1673 = vadd.f32 %v209, %v1672
    %v1674 = vpop.f32.mrb[0].mxu0
    %1675 = vdwg.mxu0
    %v1676 = vxor.u32 %v1673, 2147483648
    %v1677 = vmul.f32 %v1676, 1.442695
    %v1678 = vpow.pop %v1677
    %v1679 = vadd.f32 %v1678, 1.0
    %v1680 = vrcp.pop %v1679
    %v1681 = vmul.f32 1.0, %v1680
    %v1682 = vtanh.pop %v1673
    %v1683 = vmul.f32 %v1681, %v1378
    %1685 = vrot.lane.b32.xlu0 %v1682, 88
    %v1686 = vpop.permute.xlu0 %1685
    %v1688 = vmul.f32 %v1681, %v1686
    %1690 = vrot.lane.b32.xlu0 %v1688, 20
    %v1691 = vpop.permute.xlu0 %1690
    %v1693 = vadd.f32 %v1683, %v1691
    %v1694 = vtanh.pop %v1693
    %1696 = vrot.lane.b32.xlu0 %v1694, 40
    %v1697 = vpop.permute.xlu0 %1696
    %v1699 = vmul.f32 %v1681, %v1697
    %1701 = vrot.lane.b32.xlu0 %v1699, 68
    %v1702 = vpop.permute.xlu0 %1701
    %1705 = vrot.lane.b32.xlu0 %v1490, 88
    %v1706 = vpop.permute.xlu0 %1705
    %v1708 = vsel %vm225, %v1702, %v1706
    %v1710 = vsel %vm334, %v1708, 0
    %1712 = vmatprep.subr.mxu0 0.0
    %1713 = vmatpush1.msra.mxu0 %v189
    %1714 = vmatprep.subr.mxu0 0.0
    %1715 = vmatpush1.msra.mxu0 %v190
    %1716 = vmatprep.subr.mxu0 0.0
    %1717 = vmatpush1.msra.mxu0 %v191
    %1718 = vmatprep.subr.mxu0 0.0
    %1719 = vmatpush1.msra.mxu0 %v192
    %1720 = vmatprep.subr.mxu0 0.0
    %1721 = vmatpush1.msra.mxu0 %v193
    %1722 = vmatprep.subr.mxu0 0.0
    %1723 = vmatpush1.msra.mxu0 0.0
    %1724 = vmatprep.subr.mxu0 0.0
    %1725 = vmatpush1.msra.mxu0 0.0
    %1726 = vmatprep.subr.mxu0 0.0
    %1727 = vmatpush1.msra.mxu0 0.0
    %1728 = vmatprep.subr.mxu0 0.0
    %1729 = vmatpush1.msra.mxu0 0.0
    %1730 = vmatprep.subr.mxu0 0.0
    %1731 = vmatpush1.msra.mxu0 0.0
    %1732 = vmatprep.subr.mxu0 0.0
    %1733 = vmatpush1.msra.mxu0 0.0
    %1734 = vmatprep.subr.mxu0 0.0
    %1735 = vmatpush1.msra.mxu0 0.0
    %1736 = vmatprep.subr.mxu0 0.0
    %1737 = vmatpush1.msra.mxu0 0.0
    %1738 = vmatprep.subr.mxu0 0.0
    %1739 = vmatpush1.msra.mxu0 0.0
    %1740 = vmatprep.subr.mxu0 0.0
    %1741 = vmatpush1.msra.mxu0 0.0
    %1742 = vmatprep.subr.mxu0 0.0
    %1743 = vmatpush1.msra.mxu0 0.0
    %1744 = vmatprep.subr.mxu0 0.0
    %1745 = vmatpush1.msra.mxu0 0.0
    %1746 = vmatprep.subr.mxu0 0.0
    %1747 = vmatpush1.msra.mxu0 0.0
    %1748 = vmatprep.subr.mxu0 0.0
    %1749 = vmatpush1.msra.mxu0 0.0
    %1750 = vmatprep.subr.mxu0 0.0
    %1751 = vmatpush1.msra.mxu0 0.0
    %1752 = vmatprep.subr.mxu0 0.0
    %1753 = vmatpush1.msra.mxu0 0.0
    %1754 = vmatprep.subr.mxu0 0.0
    %1755 = vmatpush1.msra.mxu0 0.0
    %1756 = vmatprep.subr.mxu0 0.0
    %1757 = vmatpush1.msra.mxu0 0.0
    %1758 = vmatprep.subr.mxu0 0.0
    %1759 = vmatpush1.msra.mxu0 0.0
    %1760 = vmatprep.subr.mxu0 0.0
    %1761 = vmatpush1.msra.mxu0 0.0
    %1762 = vmatprep.subr.mxu0 0.0
    %1763 = vmatpush1.msra.mxu0 0.0
    %1764 = vmatprep.subr.mxu0 0.0
    %1765 = vmatpush1.msra.mxu0 0.0
    %1766 = vmatprep.subr.mxu0 0.0
    %1767 = vmatpush1.msra.mxu0 0.0
    %1768 = vmatprep.subr.mxu0 0.0
    %1769 = vmatpush1.msra.mxu0 0.0
    %1770 = vmatprep.subr.mxu0 0.0
    %1771 = vmatpush1.msra.mxu0 0.0
    %1772 = vmatprep.subr.mxu0 0.0
    %1773 = vmatpush1.msra.mxu0 0.0
    %1774 = vmatprep.subr.mxu0 0.0
    %1775 = vmatpush1.msra.mxu0 0.0
    %1776 = vmatprep.mubr.f32.mxu0 0.0
    %1777 = vmatmul.mubr.f32.gmra.mrb[0].mxu0 %v1710
    %v1778 = vpop.f32.mrb[0].mxu0
    %v1779 = vadd.f32 %v216, %v1778
    %v1780 = vpop.f32.mrb[0].mxu0
    %1781 = vdwg.mxu0
    %v1782 = vxor.u32 %v1779, 2147483648
    %v1783 = vmul.f32 %v1782, 1.442695
    %v1784 = vpow.pop %v1783
    %v1785 = vadd.f32 %v1784, 1.0
    %v1786 = vrcp.pop %v1785
    %v1787 = vmul.f32 1.0, %v1786
    %v1788 = vtanh.pop %v1779
    %v1789 = vmul.f32 %v1787, %v1484
    %1791 = vrot.lane.b32.xlu0 %v1788, 88
    %v1792 = vpop.permute.xlu0 %1791
    %v1794 = vmul.f32 %v1787, %v1792
    %1796 = vrot.lane.b32.xlu0 %v1794, 20
    %v1797 = vpop.permute.xlu0 %1796
    %v1799 = vadd.f32 %v1789, %v1797
    %v1800 = vtanh.pop %v1799
    %1802 = vrot.lane.b32.xlu0 %v1800, 40
    %v1803 = vpop.permute.xlu0 %1802
    %v1805 = vmul.f32 %v1787, %v1803
    %v1806 = vsel %vm225, %v1597, 0
    %1808 = vmatprep.subr.mxu0 0.0
    %1809 = vmatpush1.msra.mxu0 %v181
    %1810 = vmatprep.subr.mxu0 0.0
    %1811 = vmatpush1.msra.mxu0 %v182
    %1812 = vmatprep.subr.mxu0 0.0
    %1813 = vmatpush1.msra.mxu0 %v231
    %1814 = vmatprep.subr.mxu0 0.0
    %1815 = vmatpush1.msra.mxu0 0.0
    %1816 = vmatprep.subr.mxu0 0.0
    %1817 = vmatpush1.msra.mxu0 0.0
    %1818 = vmatprep.subr.mxu0 0.0
    %1819 = vmatpush1.msra.mxu0 0.0
    %1820 = vmatprep.subr.mxu0 0.0
    %1821 = vmatpush1.msra.mxu0 0.0
    %1822 = vmatprep.subr.mxu0 0.0
    %1823 = vmatpush1.msra.mxu0 0.0
    %1824 = vmatprep.subr.mxu0 0.0
    %1825 = vmatpush1.msra.mxu0 0.0
    %1826 = vmatprep.subr.mxu0 0.0
    %1827 = vmatpush1.msra.mxu0 0.0
    %1828 = vmatprep.subr.mxu0 0.0
    %1829 = vmatpush1.msra.mxu0 0.0
    %1830 = vmatprep.subr.mxu0 0.0
    %1831 = vmatpush1.msra.mxu0 0.0
    %1832 = vmatprep.subr.mxu0 0.0
    %1833 = vmatpush1.msra.mxu0 0.0
    %1834 = vmatprep.subr.mxu0 0.0
    %1835 = vmatpush1.msra.mxu0 0.0
    %1836 = vmatprep.subr.mxu0 0.0
    %1837 = vmatpush1.msra.mxu0 0.0
    %1838 = vmatprep.subr.mxu0 0.0
    %1839 = vmatpush1.msra.mxu0 0.0
    %1840 = vmatprep.subr.mxu0 0.0
    %1841 = vmatpush1.msra.mxu0 0.0
    %1842 = vmatprep.subr.mxu0 0.0
    %1843 = vmatpush1.msra.mxu0 0.0
    %1844 = vmatprep.subr.mxu0 0.0
    %1845 = vmatpush1.msra.mxu0 0.0
    %1846 = vmatprep.subr.mxu0 0.0
    %1847 = vmatpush1.msra.mxu0 0.0
    %1848 = vmatprep.subr.mxu0 0.0
    %1849 = vmatpush1.msra.mxu0 0.0
    %1850 = vmatprep.subr.mxu0 0.0
    %1851 = vmatpush1.msra.mxu0 0.0
    %1852 = vmatprep.subr.mxu0 0.0
    %1853 = vmatpush1.msra.mxu0 0.0
    %1854 = vmatprep.subr.mxu0 0.0
    %1855 = vmatpush1.msra.mxu0 0.0
    %1856 = vmatprep.subr.mxu0 0.0
    %1857 = vmatpush1.msra.mxu0 0.0
    %1858 = vmatprep.subr.mxu0 0.0
    %1859 = vmatpush1.msra.mxu0 0.0
    %1860 = vmatprep.subr.mxu0 0.0
    %1861 = vmatpush1.msra.mxu0 0.0
    %1862 = vmatprep.subr.mxu0 0.0
    %1863 = vmatpush1.msra.mxu0 0.0
    %1864 = vmatprep.subr.mxu0 0.0
    %1865 = vmatpush1.msra.mxu0 0.0
    %1866 = vmatprep.subr.mxu0 0.0
    %1867 = vmatpush1.msra.mxu0 0.0
    %1868 = vmatprep.subr.mxu0 0.0
    %1869 = vmatpush1.msra.mxu0 0.0
    %1870 = vmatprep.subr.mxu0 0.0
    %1871 = vmatpush1.msra.mxu0 0.0
    %1872 = vmatprep.mubr.f32.mxu0 0.0
    %1873 = vmatmul.mubr.f32.gmra.mrb[0].mxu0 %v1806
    %v1874 = vpop.f32.mrb[0].mxu0
    %v1875 = vadd.f32 0.0, %v1874
    %v1876 = vpop.f32.mrb[0].mxu0
    %1877 = vdwg.mxu0
    %v1879 = vrot.slane %v1875, 6
    %v1881 = vadd.f32 %v178, %v1879
    %v1882 = vadd.f32 %v1881, %v202
    %v1883 = vxor.u32 %v1882, 2147483648
    %v1884 = vmul.f32 %v1883, 1.442695
    %v1885 = vpow.pop %v1884
    %v1886 = vadd.f32 %v1885, 1.0
    %v1887 = vrcp.pop %v1886
    %v1888 = vmul.f32 1.0, %v1887
    %v1889 = vtanh.pop %v1882
    %v1891 = vrot.slane %v1588, 6
    %v1893 = vmul.f32 %v1888, %v1891
    %1895 = vrot.lane.b32.xlu0 %v1889, 88
    %v1896 = vpop.permute.xlu0 %1895
    %v1898 = vmul.f32 %v1888, %v1896
    %1900 = vrot.lane.b32.xlu0 %v1898, 20
    %v1901 = vpop.permute.xlu0 %1900
    %v1903 = vadd.f32 %v1893, %v1901
    %v1904 = vtanh.pop %v1903
    %1906 = vrot.lane.b32.xlu0 %v1904, 40
    %v1907 = vpop.permute.xlu0 %1906
    %v1909 = vmul.f32 %v1888, %v1907
    %1911 = vrot.lane.b32.xlu0 %v1909, 68
    %v1912 = vpop.permute.xlu0 %1911
    %v1914 = vrot.slane %v1699, 6
    %1915 = vrot.lane.b32.xlu0 %v1914, 88
    %v1916 = vpop.permute.xlu0 %1915
    %v1918 = vsel %vm225, %v1912, %v1916
    %v1920 = vrot.slane %v1918, 2
    %v1921 = vsel %vm334, %v1920, 0
    %1923 = vmatprep.subr.mxu0 0.0
    %1924 = vmatpush1.msra.mxu0 %v184
    %1925 = vmatprep.subr.mxu0 0.0
    %1926 = vmatpush1.msra.mxu0 %v185
    %1927 = vmatprep.subr.mxu0 0.0
    %1928 = vmatpush1.msra.mxu0 %v186
    %1929 = vmatprep.subr.mxu0 0.0
    %1930 = vmatpush1.msra.mxu0 %v187
    %1931 = vmatprep.subr.mxu0 0.0
    %1932 = vmatpush1.msra.mxu0 %v188
    %1933 = vmatprep.subr.mxu0 0.0
    %1934 = vmatpush1.msra.mxu0 0.0
    %1935 = vmatprep.subr.mxu0 0.0
    %1936 = vmatpush1.msra.mxu0 0.0
    %1937 = vmatprep.subr.mxu0 0.0
    %1938 = vmatpush1.msra.mxu0 0.0
    %1939 = vmatprep.subr.mxu0 0.0
    %1940 = vmatpush1.msra.mxu0 0.0
    %1941 = vmatprep.subr.mxu0 0.0
    %1942 = vmatpush1.msra.mxu0 0.0
    %1943 = vmatprep.subr.mxu0 0.0
    %1944 = vmatpush1.msra.mxu0 0.0
    %1945 = vmatprep.subr.mxu0 0.0
    %1946 = vmatpush1.msra.mxu0 0.0
    %1947 = vmatprep.subr.mxu0 0.0
    %1948 = vmatpush1.msra.mxu0 0.0
    %1949 = vmatprep.subr.mxu0 0.0
    %1950 = vmatpush1.msra.mxu0 0.0
    %1951 = vmatprep.subr.mxu0 0.0
    %1952 = vmatpush1.msra.mxu0 0.0
    %1953 = vmatprep.subr.mxu0 0.0
    %1954 = vmatpush1.msra.mxu0 0.0
    %1955 = vmatprep.subr.mxu0 0.0
    %1956 = vmatpush1.msra.mxu0 0.0
    %1957 = vmatprep.subr.mxu0 0.0
    %1958 = vmatpush1.msra.mxu0 0.0
    %1959 = vmatprep.subr.mxu0 0.0
    %1960 = vmatpush1.msra.mxu0 0.0
    %1961 = vmatprep.subr.mxu0 0.0
    %1962 = vmatpush1.msra.mxu0 0.0
    %1963 = vmatprep.subr.mxu0 0.0
    %1964 = vmatpush1.msra.mxu0 0.0
    %1965 = vmatprep.subr.mxu0 0.0
    %1966 = vmatpush1.msra.mxu0 0.0
    %1967 = vmatprep.subr.mxu0 0.0
    %1968 = vmatpush1.msra.mxu0 0.0
    %1969 = vmatprep.subr.mxu0 0.0
    %1970 = vmatpush1.msra.mxu0 0.0
    %1971 = vmatprep.subr.mxu0 0.0
    %1972 = vmatpush1.msra.mxu0 0.0
    %1973 = vmatprep.subr.mxu0 0.0
    %1974 = vmatpush1.msra.mxu0 0.0
    %1975 = vmatprep.subr.mxu0 0.0
    %1976 = vmatpush1.msra.mxu0 0.0
    %1977 = vmatprep.subr.mxu0 0.0
    %1978 = vmatpush1.msra.mxu0 0.0
    %1979 = vmatprep.subr.mxu0 0.0
    %1980 = vmatpush1.msra.mxu0 0.0
    %1981 = vmatprep.subr.mxu0 0.0
    %1982 = vmatpush1.msra.mxu0 0.0
    %1983 = vmatprep.subr.mxu0 0.0
    %1984 = vmatpush1.msra.mxu0 0.0
    %1985 = vmatprep.subr.mxu0 0.0
    %1986 = vmatpush1.msra.mxu0 0.0
    %1987 = vmatprep.mubr.f32.mxu0 0.0
    %1988 = vmatmul.mubr.f32.gmra.mrb[0].mxu0 %v1921
    %v1989 = vpop.f32.mrb[0].mxu0
    %v1990 = vadd.f32 %v209, %v1989
    %v1991 = vpop.f32.mrb[0].mxu0
    %1992 = vdwg.mxu0
    %v1993 = vxor.u32 %v1990, 2147483648
    %v1994 = vmul.f32 %v1993, 1.442695
    %v1995 = vpow.pop %v1994
    %v1996 = vadd.f32 %v1995, 1.0
    %v1997 = vrcp.pop %v1996
    %v1998 = vmul.f32 1.0, %v1997
    %v1999 = vtanh.pop %v1990
    %v2000 = vmul.f32 %v1998, %v1693
    %2002 = vrot.lane.b32.xlu0 %v1999, 88
    %v2003 = vpop.permute.xlu0 %2002
    %v2005 = vmul.f32 %v1998, %v2003
    %2007 = vrot.lane.b32.xlu0 %v2005, 20
    %v2008 = vpop.permute.xlu0 %2007
    %v2010 = vadd.f32 %v2000, %v2008
    %v2011 = vtanh.pop %v2010
    %2013 = vrot.lane.b32.xlu0 %v2011, 40
    %v2014 = vpop.permute.xlu0 %2013
    %v2016 = vmul.f32 %v1998, %v2014
    %2018 = vrot.lane.b32.xlu0 %v2016, 68
    %v2019 = vpop.permute.xlu0 %2018
    %2022 = vrot.lane.b32.xlu0 %v1805, 88
    %v2023 = vpop.permute.xlu0 %2022
    %v2025 = vsel %vm225, %v2019, %v2023
    %v2027 = vsel %vm334, %v2025, 0
    %2029 = vmatprep.subr.mxu0 0.0
    %2030 = vmatpush1.msra.mxu0 %v189
    %2031 = vmatprep.subr.mxu0 0.0
    %2032 = vmatpush1.msra.mxu0 %v190
    %2033 = vmatprep.subr.mxu0 0.0
    %2034 = vmatpush1.msra.mxu0 %v191
    %2035 = vmatprep.subr.mxu0 0.0
    %2036 = vmatpush1.msra.mxu0 %v192
    %2037 = vmatprep.subr.mxu0 0.0
    %2038 = vmatpush1.msra.mxu0 %v193
    %2039 = vmatprep.subr.mxu0 0.0
    %2040 = vmatpush1.msra.mxu0 0.0
    %2041 = vmatprep.subr.mxu0 0.0
    %2042 = vmatpush1.msra.mxu0 0.0
    %2043 = vmatprep.subr.mxu0 0.0
    %2044 = vmatpush1.msra.mxu0 0.0
    %2045 = vmatprep.subr.mxu0 0.0
    %2046 = vmatpush1.msra.mxu0 0.0
    %2047 = vmatprep.subr.mxu0 0.0
    %2048 = vmatpush1.msra.mxu0 0.0
    %2049 = vmatprep.subr.mxu0 0.0
    %2050 = vmatpush1.msra.mxu0 0.0
    %2051 = vmatprep.subr.mxu0 0.0
    %2052 = vmatpush1.msra.mxu0 0.0
    %2053 = vmatprep.subr.mxu0 0.0
    %2054 = vmatpush1.msra.mxu0 0.0
    %2055 = vmatprep.subr.mxu0 0.0
    %2056 = vmatpush1.msra.mxu0 0.0
    %2057 = vmatprep.subr.mxu0 0.0
    %2058 = vmatpush1.msra.mxu0 0.0
    %2059 = vmatprep.subr.mxu0 0.0
    %2060 = vmatpush1.msra.mxu0 0.0
    %2061 = vmatprep.subr.mxu0 0.0
    %2062 = vmatpush1.msra.mxu0 0.0
    %2063 = vmatprep.subr.mxu0 0.0
    %2064 = vmatpush1.msra.mxu0 0.0
    %2065 = vmatprep.subr.mxu0 0.0
    %2066 = vmatpush1.msra.mxu0 0.0
    %2067 = vmatprep.subr.mxu0 0.0
    %2068 = vmatpush1.msra.mxu0 0.0
    %2069 = vmatprep.subr.mxu0 0.0
    %2070 = vmatpush1.msra.mxu0 0.0
    %2071 = vmatprep.subr.mxu0 0.0
    %2072 = vmatpush1.msra.mxu0 0.0
    %2073 = vmatprep.subr.mxu0 0.0
    %2074 = vmatpush1.msra.mxu0 0.0
    %2075 = vmatprep.subr.mxu0 0.0
    %2076 = vmatpush1.msra.mxu0 0.0
    %2077 = vmatprep.subr.mxu0 0.0
    %2078 = vmatpush1.msra.mxu0 0.0
    %2079 = vmatprep.subr.mxu0 0.0
    %2080 = vmatpush1.msra.mxu0 0.0
    %2081 = vmatprep.subr.mxu0 0.0
    %2082 = vmatpush1.msra.mxu0 0.0
    %2083 = vmatprep.subr.mxu0 0.0
    %2084 = vmatpush1.msra.mxu0 0.0
    %2085 = vmatprep.subr.mxu0 0.0
    %2086 = vmatpush1.msra.mxu0 0.0
    %2087 = vmatprep.subr.mxu0 0.0
    %2088 = vmatpush1.msra.mxu0 0.0
    %2089 = vmatprep.subr.mxu0 0.0
    %2090 = vmatpush1.msra.mxu0 0.0
    %2091 = vmatprep.subr.mxu0 0.0
    %2092 = vmatpush1.msra.mxu0 0.0
    %2093 = vmatprep.mubr.f32.mxu0 0.0
    %2094 = vmatmul.mubr.f32.gmra.mrb[0].mxu0 %v2027
    %v2095 = vpop.f32.mrb[0].mxu0
    %v2096 = vadd.f32 %v216, %v2095
    %v2097 = vpop.f32.mrb[0].mxu0
    %2098 = vdwg.mxu0
    %v2099 = vxor.u32 %v2096, 2147483648
    %v2100 = vmul.f32 %v2099, 1.442695
    %v2101 = vpow.pop %v2100
    %v2102 = vadd.f32 %v2101, 1.0
    %v2103 = vrcp.pop %v2102
    %v2104 = vmul.f32 1.0, %v2103
    %v2105 = vtanh.pop %v2096
    %v2106 = vmul.f32 %v2104, %v1799
    %2108 = vrot.lane.b32.xlu0 %v2105, 88
    %v2109 = vpop.permute.xlu0 %2108
    %v2111 = vmul.f32 %v2104, %v2109
    %2113 = vrot.lane.b32.xlu0 %v2111, 20
    %v2114 = vpop.permute.xlu0 %2113
    %v2116 = vadd.f32 %v2106, %v2114
    %v2117 = vtanh.pop %v2116
    %2119 = vrot.lane.b32.xlu0 %v2117, 40
    %v2120 = vpop.permute.xlu0 %2119
    %v2122 = vmul.f32 %v2104, %v2120
    %v2123 = vrot.slane %v1909, 2
    %2124 = vrot.lane.b32.xlu0 %v2123, 68
    %v2125 = vpop.permute.xlu0 %2124
    %v2126 = vsel %vm225, %v2125, 0
    %2128 = vmatprep.subr.mxu0 0.0
    %2129 = vmatpush1.msra.mxu0 %v181
    %2130 = vmatprep.subr.mxu0 0.0
    %2131 = vmatpush1.msra.mxu0 %v182
    %2132 = vmatprep.subr.mxu0 0.0
    %2133 = vmatpush1.msra.mxu0 %v231
    %2134 = vmatprep.subr.mxu0 0.0
    %2135 = vmatpush1.msra.mxu0 0.0
    %2136 = vmatprep.subr.mxu0 0.0
    %2137 = vmatpush1.msra.mxu0 0.0
    %2138 = vmatprep.subr.mxu0 0.0
    %2139 = vmatpush1.msra.mxu0 0.0
    %2140 = vmatprep.subr.mxu0 0.0
    %2141 = vmatpush1.msra.mxu0 0.0
    %2142 = vmatprep.subr.mxu0 0.0
    %2143 = vmatpush1.msra.mxu0 0.0
    %2144 = vmatprep.subr.mxu0 0.0
    %2145 = vmatpush1.msra.mxu0 0.0
    %2146 = vmatprep.subr.mxu0 0.0
    %2147 = vmatpush1.msra.mxu0 0.0
    %2148 = vmatprep.subr.mxu0 0.0
    %2149 = vmatpush1.msra.mxu0 0.0
    %2150 = vmatprep.subr.mxu0 0.0
    %2151 = vmatpush1.msra.mxu0 0.0
    %2152 = vmatprep.subr.mxu0 0.0
    %2153 = vmatpush1.msra.mxu0 0.0
    %2154 = vmatprep.subr.mxu0 0.0
    %2155 = vmatpush1.msra.mxu0 0.0
    %2156 = vmatprep.subr.mxu0 0.0
    %2157 = vmatpush1.msra.mxu0 0.0
    %2158 = vmatprep.subr.mxu0 0.0
    %2159 = vmatpush1.msra.mxu0 0.0
    %2160 = vmatprep.subr.mxu0 0.0
    %2161 = vmatpush1.msra.mxu0 0.0
    %2162 = vmatprep.subr.mxu0 0.0
    %2163 = vmatpush1.msra.mxu0 0.0
    %2164 = vmatprep.subr.mxu0 0.0
    %2165 = vmatpush1.msra.mxu0 0.0
    %2166 = vmatprep.subr.mxu0 0.0
    %2167 = vmatpush1.msra.mxu0 0.0
    %2168 = vmatprep.subr.mxu0 0.0
    %2169 = vmatpush1.msra.mxu0 0.0
    %2170 = vmatprep.subr.mxu0 0.0
    %2171 = vmatpush1.msra.mxu0 0.0
    %2172 = vmatprep.subr.mxu0 0.0
    %2173 = vmatpush1.msra.mxu0 0.0
    %2174 = vmatprep.subr.mxu0 0.0
    %2175 = vmatpush1.msra.mxu0 0.0
    %2176 = vmatprep.subr.mxu0 0.0
    %2177 = vmatpush1.msra.mxu0 0.0
    %2178 = vmatprep.subr.mxu0 0.0
    %2179 = vmatpush1.msra.mxu0 0.0
    %2180 = vmatprep.subr.mxu0 0.0
    %2181 = vmatpush1.msra.mxu0 0.0
    %2182 = vmatprep.subr.mxu0 0.0
    %2183 = vmatpush1.msra.mxu0 0.0
    %2184 = vmatprep.subr.mxu0 0.0
    %2185 = vmatpush1.msra.mxu0 0.0
    %2186 = vmatprep.subr.mxu0 0.0
    %2187 = vmatpush1.msra.mxu0 0.0
    %2188 = vmatprep.subr.mxu0 0.0
    %2189 = vmatpush1.msra.mxu0 0.0
    %2190 = vmatprep.subr.mxu0 0.0
    %2191 = vmatpush1.msra.mxu0 0.0
    %2192 = vmatprep.mubr.f32.mxu0 0.0
    %2193 = vmatmul.mubr.f32.gmra.mrb[0].mxu0 %v2126
    %v2194 = vpop.f32.mrb[0].mxu0
    %v2195 = vadd.f32 0.0, %v2194
    %v2196 = vpop.f32.mrb[0].mxu0
    %2197 = vdwg.mxu0
    %v2199 = vrot.slane %v2195, 4
    %v2201 = vadd.f32 %v178, %v2199
    %v2202 = vadd.f32 %v2201, %v202
    %v2203 = vxor.u32 %v2202, 2147483648
    %v2204 = vmul.f32 %v2203, 1.442695
    %v2205 = vpow.pop %v2204
    %v2206 = vadd.f32 %v2205, 1.0
    %v2207 = vrcp.pop %v2206
    %v2208 = vmul.f32 1.0, %v2207
    %v2209 = vtanh.pop %v2202
    %v2211 = vrot.slane %v1903, 6
    %v2213 = vmul.f32 %v2208, %v2211
    %2215 = vrot.lane.b32.xlu0 %v2209, 88
    %v2216 = vpop.permute.xlu0 %2215
    %v2218 = vmul.f32 %v2208, %v2216
    %2220 = vrot.lane.b32.xlu0 %v2218, 20
    %v2221 = vpop.permute.xlu0 %2220
    %v2223 = vadd.f32 %v2213, %v2221
    %v2224 = vtanh.pop %v2223
    %2226 = vrot.lane.b32.xlu0 %v2224, 40
    %v2227 = vpop.permute.xlu0 %2226
    %v2229 = vmul.f32 %v2208, %v2227
    %2231 = vrot.lane.b32.xlu0 %v2229, 68
    %v2232 = vpop.permute.xlu0 %2231
    %v2234 = vrot.slane %v2016, 4
    %2235 = vrot.lane.b32.xlu0 %v2234, 88
    %v2236 = vpop.permute.xlu0 %2235
    %v2238 = vsel %vm225, %v2232, %v2236
    %v2240 = vrot.slane %v2238, 4
    %v2241 = vsel %vm334, %v2240, 0
    %2243 = vmatprep.subr.mxu0 0.0
    %2244 = vmatpush1.msra.mxu0 %v184
    %2245 = vmatprep.subr.mxu0 0.0
    %2246 = vmatpush1.msra.mxu0 %v185
    %2247 = vmatprep.subr.mxu0 0.0
    %2248 = vmatpush1.msra.mxu0 %v186
    %2249 = vmatprep.subr.mxu0 0.0
    %2250 = vmatpush1.msra.mxu0 %v187
    %2251 = vmatprep.subr.mxu0 0.0
    %2252 = vmatpush1.msra.mxu0 %v188
    %2253 = vmatprep.subr.mxu0 0.0
    %2254 = vmatpush1.msra.mxu0 0.0
    %2255 = vmatprep.subr.mxu0 0.0
    %2256 = vmatpush1.msra.mxu0 0.0
    %2257 = vmatprep.subr.mxu0 0.0
    %2258 = vmatpush1.msra.mxu0 0.0
    %2259 = vmatprep.subr.mxu0 0.0
    %2260 = vmatpush1.msra.mxu0 0.0
    %2261 = vmatprep.subr.mxu0 0.0
    %2262 = vmatpush1.msra.mxu0 0.0
    %2263 = vmatprep.subr.mxu0 0.0
    %2264 = vmatpush1.msra.mxu0 0.0
    %2265 = vmatprep.subr.mxu0 0.0
    %2266 = vmatpush1.msra.mxu0 0.0
    %2267 = vmatprep.subr.mxu0 0.0
    %2268 = vmatpush1.msra.mxu0 0.0
    %2269 = vmatprep.subr.mxu0 0.0
    %2270 = vmatpush1.msra.mxu0 0.0
    %2271 = vmatprep.subr.mxu0 0.0
    %2272 = vmatpush1.msra.mxu0 0.0
    %2273 = vmatprep.subr.mxu0 0.0
    %2274 = vmatpush1.msra.mxu0 0.0
    %2275 = vmatprep.subr.mxu0 0.0
    %2276 = vmatpush1.msra.mxu0 0.0
    %2277 = vmatprep.subr.mxu0 0.0
    %2278 = vmatpush1.msra.mxu0 0.0
    %2279 = vmatprep.subr.mxu0 0.0
    %2280 = vmatpush1.msra.mxu0 0.0
    %2281 = vmatprep.subr.mxu0 0.0
    %2282 = vmatpush1.msra.mxu0 0.0
    %2283 = vmatprep.subr.mxu0 0.0
    %2284 = vmatpush1.msra.mxu0 0.0
    %2285 = vmatprep.subr.mxu0 0.0
    %2286 = vmatpush1.msra.mxu0 0.0
    %2287 = vmatprep.subr.mxu0 0.0
    %2288 = vmatpush1.msra.mxu0 0.0
    %2289 = vmatprep.subr.mxu0 0.0
    %2290 = vmatpush1.msra.mxu0 0.0
    %2291 = vmatprep.subr.mxu0 0.0
    %2292 = vmatpush1.msra.mxu0 0.0
    %2293 = vmatprep.subr.mxu0 0.0
    %2294 = vmatpush1.msra.mxu0 0.0
    %2295 = vmatprep.subr.mxu0 0.0
    %2296 = vmatpush1.msra.mxu0 0.0
    %2297 = vmatprep.subr.mxu0 0.0
    %2298 = vmatpush1.msra.mxu0 0.0
    %2299 = vmatprep.subr.mxu0 0.0
    %2300 = vmatpush1.msra.mxu0 0.0
    %2301 = vmatprep.subr.mxu0 0.0
    %2302 = vmatpush1.msra.mxu0 0.0
    %2303 = vmatprep.subr.mxu0 0.0
    %2304 = vmatpush1.msra.mxu0 0.0
    %2305 = vmatprep.subr.mxu0 0.0
    %2306 = vmatpush1.msra.mxu0 0.0
    %2307 = vmatprep.mubr.f32.mxu0 0.0
    %2308 = vmatmul.mubr.f32.gmra.mrb[0].mxu0 %v2241
    %v2309 = vpop.f32.mrb[0].mxu0
    %v2310 = vadd.f32 %v209, %v2309
    %v2311 = vpop.f32.mrb[0].mxu0
    %2312 = vdwg.mxu0
    %v2313 = vxor.u32 %v2310, 2147483648
    %v2314 = vmul.f32 %v2313, 1.442695
    %v2315 = vpow.pop %v2314
    %v2316 = vadd.f32 %v2315, 1.0
    %v2317 = vrcp.pop %v2316
    %v2318 = vmul.f32 1.0, %v2317
    %v2319 = vtanh.pop %v2310
    %v2320 = vmul.f32 %v2318, %v2010
    %2322 = vrot.lane.b32.xlu0 %v2319, 88
    %v2323 = vpop.permute.xlu0 %2322
    %v2325 = vmul.f32 %v2318, %v2323
    %2327 = vrot.lane.b32.xlu0 %v2325, 20
    %v2328 = vpop.permute.xlu0 %2327
    %v2330 = vadd.f32 %v2320, %v2328
    %v2331 = vtanh.pop %v2330
    %2333 = vrot.lane.b32.xlu0 %v2331, 40
    %v2334 = vpop.permute.xlu0 %2333
    %v2336 = vmul.f32 %v2318, %v2334
    %2338 = vrot.lane.b32.xlu0 %v2336, 68
    %v2339 = vpop.permute.xlu0 %2338
    %2342 = vrot.lane.b32.xlu0 %v2122, 88
    %v2343 = vpop.permute.xlu0 %2342
    %v2345 = vsel %vm225, %v2339, %v2343
    %v2347 = vsel %vm334, %v2345, 0
    %2349 = vmatprep.subr.mxu0 0.0
    %2350 = vmatpush1.msra.mxu0 %v189
    %2351 = vmatprep.subr.mxu0 0.0
    %2352 = vmatpush1.msra.mxu0 %v190
    %2353 = vmatprep.subr.mxu0 0.0
    %2354 = vmatpush1.msra.mxu0 %v191
    %2355 = vmatprep.subr.mxu0 0.0
    %2356 = vmatpush1.msra.mxu0 %v192
    %2357 = vmatprep.subr.mxu0 0.0
    %2358 = vmatpush1.msra.mxu0 %v193
    %2359 = vmatprep.subr.mxu0 0.0
    %2360 = vmatpush1.msra.mxu0 0.0
    %2361 = vmatprep.subr.mxu0 0.0
    %2362 = vmatpush1.msra.mxu0 0.0
    %2363 = vmatprep.subr.mxu0 0.0
    %2364 = vmatpush1.msra.mxu0 0.0
    %2365 = vmatprep.subr.mxu0 0.0
    %2366 = vmatpush1.msra.mxu0 0.0
    %2367 = vmatprep.subr.mxu0 0.0
    %2368 = vmatpush1.msra.mxu0 0.0
    %2369 = vmatprep.subr.mxu0 0.0
    %2370 = vmatpush1.msra.mxu0 0.0
    %2371 = vmatprep.subr.mxu0 0.0
    %2372 = vmatpush1.msra.mxu0 0.0
    %2373 = vmatprep.subr.mxu0 0.0
    %2374 = vmatpush1.msra.mxu0 0.0
    %2375 = vmatprep.subr.mxu0 0.0
    %2376 = vmatpush1.msra.mxu0 0.0
    %2377 = vmatprep.subr.mxu0 0.0
    %2378 = vmatpush1.msra.mxu0 0.0
    %2379 = vmatprep.subr.mxu0 0.0
    %2380 = vmatpush1.msra.mxu0 0.0
    %2381 = vmatprep.subr.mxu0 0.0
    %2382 = vmatpush1.msra.mxu0 0.0
    %2383 = vmatprep.subr.mxu0 0.0
    %2384 = vmatpush1.msra.mxu0 0.0
    %2385 = vmatprep.subr.mxu0 0.0
    %2386 = vmatpush1.msra.mxu0 0.0
    %2387 = vmatprep.subr.mxu0 0.0
    %2388 = vmatpush1.msra.mxu0 0.0
    %2389 = vmatprep.subr.mxu0 0.0
    %2390 = vmatpush1.msra.mxu0 0.0
    %2391 = vmatprep.subr.mxu0 0.0
    %2392 = vmatpush1.msra.mxu0 0.0
    %2393 = vmatprep.subr.mxu0 0.0
    %2394 = vmatpush1.msra.mxu0 0.0
    %2395 = vmatprep.subr.mxu0 0.0
    %2396 = vmatpush1.msra.mxu0 0.0
    %2397 = vmatprep.subr.mxu0 0.0
    %2398 = vmatpush1.msra.mxu0 0.0
    %2399 = vmatprep.subr.mxu0 0.0
    %2400 = vmatpush1.msra.mxu0 0.0
    %2401 = vmatprep.subr.mxu0 0.0
    %2402 = vmatpush1.msra.mxu0 0.0
    %2403 = vmatprep.subr.mxu0 0.0
    %2404 = vmatpush1.msra.mxu0 0.0
    %2405 = vmatprep.subr.mxu0 0.0
    %2406 = vmatpush1.msra.mxu0 0.0
    %2407 = vmatprep.subr.mxu0 0.0
    %2408 = vmatpush1.msra.mxu0 0.0
    %2409 = vmatprep.subr.mxu0 0.0
    %2410 = vmatpush1.msra.mxu0 0.0
    %2411 = vmatprep.subr.mxu0 0.0
    %2412 = vmatpush1.msra.mxu0 0.0
    %2413 = vmatprep.mubr.f32.mxu0 0.0
    %2414 = vmatmul.mubr.f32.gmra.mrb[0].mxu0 %v2347
    %v2415 = vpop.f32.mrb[0].mxu0
    %v2416 = vadd.f32 %v216, %v2415
    %v2417 = vpop.f32.mrb[0].mxu0
    %2418 = vdwg.mxu0
    %v2419 = vxor.u32 %v2416, 2147483648
    %v2420 = vmul.f32 %v2419, 1.442695
    %v2421 = vpow.pop %v2420
    %v2422 = vadd.f32 %v2421, 1.0
    %v2423 = vrcp.pop %v2422
    %v2424 = vmul.f32 1.0, %v2423
    %v2425 = vtanh.pop %v2416
    %v2426 = vmul.f32 %v2424, %v2116
    %2428 = vrot.lane.b32.xlu0 %v2425, 88
    %v2429 = vpop.permute.xlu0 %2428
    %v2431 = vmul.f32 %v2424, %v2429
    %2433 = vrot.lane.b32.xlu0 %v2431, 20
    %v2434 = vpop.permute.xlu0 %2433
    %v2436 = vadd.f32 %v2426, %v2434
    %v2437 = vtanh.pop %v2436
    %2439 = vrot.lane.b32.xlu0 %v2437, 40
    %v2440 = vpop.permute.xlu0 %2439
    %v2442 = vmul.f32 %v2424, %v2440
    %v2443 = vrot.slane %v2229, 4
    %2444 = vrot.lane.b32.xlu0 %v2443, 68
    %v2445 = vpop.permute.xlu0 %2444
    %v2446 = vsel %vm225, %v2445, 0
    %2448 = vmatprep.subr.mxu0 0.0
    %2449 = vmatpush1.msra.mxu0 %v181
    %2450 = vmatprep.subr.mxu0 0.0
    %2451 = vmatpush1.msra.mxu0 %v182
    %2452 = vmatprep.subr.mxu0 0.0
    %2453 = vmatpush1.msra.mxu0 %v231
    %2454 = vmatprep.subr.mxu0 0.0
    %2455 = vmatpush1.msra.mxu0 0.0
    %2456 = vmatprep.subr.mxu0 0.0
    %2457 = vmatpush1.msra.mxu0 0.0
    %2458 = vmatprep.subr.mxu0 0.0
    %2459 = vmatpush1.msra.mxu0 0.0
    %2460 = vmatprep.subr.mxu0 0.0
    %2461 = vmatpush1.msra.mxu0 0.0
    %2462 = vmatprep.subr.mxu0 0.0
    %2463 = vmatpush1.msra.mxu0 0.0
    %2464 = vmatprep.subr.mxu0 0.0
    %2465 = vmatpush1.msra.mxu0 0.0
    %2466 = vmatprep.subr.mxu0 0.0
    %2467 = vmatpush1.msra.mxu0 0.0
    %2468 = vmatprep.subr.mxu0 0.0
    %2469 = vmatpush1.msra.mxu0 0.0
    %2470 = vmatprep.subr.mxu0 0.0
    %2471 = vmatpush1.msra.mxu0 0.0
    %2472 = vmatprep.subr.mxu0 0.0
    %2473 = vmatpush1.msra.mxu0 0.0
    %2474 = vmatprep.subr.mxu0 0.0
    %2475 = vmatpush1.msra.mxu0 0.0
    %2476 = vmatprep.subr.mxu0 0.0
    %2477 = vmatpush1.msra.mxu0 0.0
    %2478 = vmatprep.subr.mxu0 0.0
    %2479 = vmatpush1.msra.mxu0 0.0
    %2480 = vmatprep.subr.mxu0 0.0
    %2481 = vmatpush1.msra.mxu0 0.0
    %2482 = vmatprep.subr.mxu0 0.0
    %2483 = vmatpush1.msra.mxu0 0.0
    %2484 = vmatprep.subr.mxu0 0.0
    %2485 = vmatpush1.msra.mxu0 0.0
    %2486 = vmatprep.subr.mxu0 0.0
    %2487 = vmatpush1.msra.mxu0 0.0
    %2488 = vmatprep.subr.mxu0 0.0
    %2489 = vmatpush1.msra.mxu0 0.0
    %2490 = vmatprep.subr.mxu0 0.0
    %2491 = vmatpush1.msra.mxu0 0.0
    %2492 = vmatprep.subr.mxu0 0.0
    %2493 = vmatpush1.msra.mxu0 0.0
    %2494 = vmatprep.subr.mxu0 0.0
    %2495 = vmatpush1.msra.mxu0 0.0
    %2496 = vmatprep.subr.mxu0 0.0
    %2497 = vmatpush1.msra.mxu0 0.0
    %2498 = vmatprep.subr.mxu0 0.0
    %2499 = vmatpush1.msra.mxu0 0.0
    %2500 = vmatprep.subr.mxu0 0.0
    %2501 = vmatpush1.msra.mxu0 0.0
    %2502 = vmatprep.subr.mxu0 0.0
    %2503 = vmatpush1.msra.mxu0 0.0
    %2504 = vmatprep.subr.mxu0 0.0
    %2505 = vmatpush1.msra.mxu0 0.0
    %2506 = vmatprep.subr.mxu0 0.0
    %2507 = vmatpush1.msra.mxu0 0.0
    %2508 = vmatprep.subr.mxu0 0.0
    %2509 = vmatpush1.msra.mxu0 0.0
    %2510 = vmatprep.subr.mxu0 0.0
    %2511 = vmatpush1.msra.mxu0 0.0
    %2512 = vmatprep.mubr.f32.mxu0 0.0
    %2513 = vmatmul.mubr.f32.gmra.mrb[0].mxu0 %v2446
    %v2514 = vpop.f32.mrb[0].mxu0
    %v2515 = vadd.f32 0.0, %v2514
    %v2516 = vpop.f32.mrb[0].mxu0
    %2517 = vdwg.mxu0
    %v2519 = vrot.slane %v2515, 2
    %v2521 = vadd.f32 %v178, %v2519
    %v2522 = vadd.f32 %v2521, %v202
    %v2523 = vxor.u32 %v2522, 2147483648
    %v2524 = vmul.f32 %v2523, 1.442695
    %v2525 = vpow.pop %v2524
    %v2526 = vadd.f32 %v2525, 1.0
    %v2527 = vrcp.pop %v2526
    %v2528 = vmul.f32 1.0, %v2527
    %v2529 = vtanh.pop %v2522
    %v2531 = vrot.slane %v2223, 6
    %v2533 = vmul.f32 %v2528, %v2531
    %2535 = vrot.lane.b32.xlu0 %v2529, 88
    %v2536 = vpop.permute.xlu0 %2535
    %v2538 = vmul.f32 %v2528, %v2536
    %2540 = vrot.lane.b32.xlu0 %v2538, 20
    %v2541 = vpop.permute.xlu0 %2540
    %v2543 = vadd.f32 %v2533, %v2541
    %v2544 = vtanh.pop %v2543
    %2546 = vrot.lane.b32.xlu0 %v2544, 40
    %v2547 = vpop.permute.xlu0 %2546
    %v2549 = vmul.f32 %v2528, %v2547
    %2551 = vrot.lane.b32.xlu0 %v2549, 68
    %v2552 = vpop.permute.xlu0 %2551
    %v2554 = vrot.slane %v2336, 2
    %2555 = vrot.lane.b32.xlu0 %v2554, 88
    %v2556 = vpop.permute.xlu0 %2555
    %v2558 = vsel %vm225, %v2552, %v2556
    %v2560 = vrot.slane %v2558, 6
    %v2561 = vsel %vm334, %v2560, 0
    %2563 = vmatprep.subr.mxu0 0.0
    %2564 = vmatpush1.msra.mxu0 %v184
    %2565 = vmatprep.subr.mxu0 0.0
    %2566 = vmatpush1.msra.mxu0 %v185
    %2567 = vmatprep.subr.mxu0 0.0
    %2568 = vmatpush1.msra.mxu0 %v186
    %2569 = vmatprep.subr.mxu0 0.0
    %2570 = vmatpush1.msra.mxu0 %v187
    %2571 = vmatprep.subr.mxu0 0.0
    %2572 = vmatpush1.msra.mxu0 %v188
    %2573 = vmatprep.subr.mxu0 0.0
    %2574 = vmatpush1.msra.mxu0 0.0
    %2575 = vmatprep.subr.mxu0 0.0
    %2576 = vmatpush1.msra.mxu0 0.0
    %2577 = vmatprep.subr.mxu0 0.0
    %2578 = vmatpush1.msra.mxu0 0.0
    %2579 = vmatprep.subr.mxu0 0.0
    %2580 = vmatpush1.msra.mxu0 0.0
    %2581 = vmatprep.subr.mxu0 0.0
    %2582 = vmatpush1.msra.mxu0 0.0
    %2583 = vmatprep.subr.mxu0 0.0
    %2584 = vmatpush1.msra.mxu0 0.0
    %2585 = vmatprep.subr.mxu0 0.0
    %2586 = vmatpush1.msra.mxu0 0.0
    %2587 = vmatprep.subr.mxu0 0.0
    %2588 = vmatpush1.msra.mxu0 0.0
    %2589 = vmatprep.subr.mxu0 0.0
    %2590 = vmatpush1.msra.mxu0 0.0
    %2591 = vmatprep.subr.mxu0 0.0
    %2592 = vmatpush1.msra.mxu0 0.0
    %2593 = vmatprep.subr.mxu0 0.0
    %2594 = vmatpush1.msra.mxu0 0.0
    %2595 = vmatprep.subr.mxu0 0.0
    %2596 = vmatpush1.msra.mxu0 0.0
    %2597 = vmatprep.subr.mxu0 0.0
    %2598 = vmatpush1.msra.mxu0 0.0
    %2599 = vmatprep.subr.mxu0 0.0
    %2600 = vmatpush1.msra.mxu0 0.0
    %2601 = vmatprep.subr.mxu0 0.0
    %2602 = vmatpush1.msra.mxu0 0.0
    %2603 = vmatprep.subr.mxu0 0.0
    %2604 = vmatpush1.msra.mxu0 0.0
    %2605 = vmatprep.subr.mxu0 0.0
    %2606 = vmatpush1.msra.mxu0 0.0
    %2607 = vmatprep.subr.mxu0 0.0
    %2608 = vmatpush1.msra.mxu0 0.0
    %2609 = vmatprep.subr.mxu0 0.0
    %2610 = vmatpush1.msra.mxu0 0.0
    %2611 = vmatprep.subr.mxu0 0.0
    %2612 = vmatpush1.msra.mxu0 0.0
    %2613 = vmatprep.subr.mxu0 0.0
    %2614 = vmatpush1.msra.mxu0 0.0
    %2615 = vmatprep.subr.mxu0 0.0
    %2616 = vmatpush1.msra.mxu0 0.0
    %2617 = vmatprep.subr.mxu0 0.0
    %2618 = vmatpush1.msra.mxu0 0.0
    %2619 = vmatprep.subr.mxu0 0.0
    %2620 = vmatpush1.msra.mxu0 0.0
    %2621 = vmatprep.subr.mxu0 0.0
    %2622 = vmatpush1.msra.mxu0 0.0
    %2623 = vmatprep.subr.mxu0 0.0
    %2624 = vmatpush1.msra.mxu0 0.0
    %2625 = vmatprep.subr.mxu0 0.0
    %2626 = vmatpush1.msra.mxu0 0.0
    %2627 = vmatprep.mubr.f32.mxu0 0.0
    %2628 = vmatmul.mubr.f32.gmra.mrb[0].mxu0 %v2561
    %v2629 = vpop.f32.mrb[0].mxu0
    %v2630 = vadd.f32 %v209, %v2629
    %v2631 = vpop.f32.mrb[0].mxu0
    %2632 = vdwg.mxu0
    %v2633 = vxor.u32 %v2630, 2147483648
    %v2634 = vmul.f32 %v2633, 1.442695
    %v2635 = vpow.pop %v2634
    %v2636 = vadd.f32 %v2635, 1.0
    %v2637 = vrcp.pop %v2636
    %v2638 = vmul.f32 1.0, %v2637
    %v2639 = vtanh.pop %v2630
    %v2640 = vmul.f32 %v2638, %v2330
    %2642 = vrot.lane.b32.xlu0 %v2639, 88
    %v2643 = vpop.permute.xlu0 %2642
    %v2645 = vmul.f32 %v2638, %v2643
    %2647 = vrot.lane.b32.xlu0 %v2645, 20
    %v2648 = vpop.permute.xlu0 %2647
    %v2650 = vadd.f32 %v2640, %v2648
    %v2651 = vtanh.pop %v2650
    %2653 = vrot.lane.b32.xlu0 %v2651, 40
    %v2654 = vpop.permute.xlu0 %2653
    %v2656 = vmul.f32 %v2638, %v2654
    %2658 = vrot.lane.b32.xlu0 %v2656, 68
    %v2659 = vpop.permute.xlu0 %2658
    %2662 = vrot.lane.b32.xlu0 %v2442, 88
    %v2663 = vpop.permute.xlu0 %2662
    %v2665 = vsel %vm225, %v2659, %v2663
    %v2667 = vsel %vm334, %v2665, 0
    %2669 = vmatprep.subr.mxu0 0.0
    %2670 = vmatpush1.msra.mxu0 %v189
    %2671 = vmatprep.subr.mxu0 0.0
    %2672 = vmatpush1.msra.mxu0 %v190
    %2673 = vmatprep.subr.mxu0 0.0
    %2674 = vmatpush1.msra.mxu0 %v191
    %2675 = vmatprep.subr.mxu0 0.0
    %2676 = vmatpush1.msra.mxu0 %v192
    %2677 = vmatprep.subr.mxu0 0.0
    %2678 = vmatpush1.msra.mxu0 %v193
    %2679 = vmatprep.subr.mxu0 0.0
    %2680 = vmatpush1.msra.mxu0 0.0
    %2681 = vmatprep.subr.mxu0 0.0
    %2682 = vmatpush1.msra.mxu0 0.0
    %2683 = vmatprep.subr.mxu0 0.0
    %2684 = vmatpush1.msra.mxu0 0.0
    %2685 = vmatprep.subr.mxu0 0.0
    %2686 = vmatpush1.msra.mxu0 0.0
    %2687 = vmatprep.subr.mxu0 0.0
    %2688 = vmatpush1.msra.mxu0 0.0
    %2689 = vmatprep.subr.mxu0 0.0
    %2690 = vmatpush1.msra.mxu0 0.0
    %2691 = vmatprep.subr.mxu0 0.0
    %2692 = vmatpush1.msra.mxu0 0.0
    %2693 = vmatprep.subr.mxu0 0.0
    %2694 = vmatpush1.msra.mxu0 0.0
    %2695 = vmatprep.subr.mxu0 0.0
    %2696 = vmatpush1.msra.mxu0 0.0
    %2697 = vmatprep.subr.mxu0 0.0
    %2698 = vmatpush1.msra.mxu0 0.0
    %2699 = vmatprep.subr.mxu0 0.0
    %2700 = vmatpush1.msra.mxu0 0.0
    %2701 = vmatprep.subr.mxu0 0.0
    %2702 = vmatpush1.msra.mxu0 0.0
    %2703 = vmatprep.subr.mxu0 0.0
    %2704 = vmatpush1.msra.mxu0 0.0
    %2705 = vmatprep.subr.mxu0 0.0
    %2706 = vmatpush1.msra.mxu0 0.0
    %2707 = vmatprep.subr.mxu0 0.0
    %2708 = vmatpush1.msra.mxu0 0.0
    %2709 = vmatprep.subr.mxu0 0.0
    %2710 = vmatpush1.msra.mxu0 0.0
    %2711 = vmatprep.subr.mxu0 0.0
    %2712 = vmatpush1.msra.mxu0 0.0
    %2713 = vmatprep.subr.mxu0 0.0
    %2714 = vmatpush1.msra.mxu0 0.0
    %2715 = vmatprep.subr.mxu0 0.0
    %2716 = vmatpush1.msra.mxu0 0.0
    %2717 = vmatprep.subr.mxu0 0.0
    %2718 = vmatpush1.msra.mxu0 0.0
    %2719 = vmatprep.subr.mxu0 0.0
    %2720 = vmatpush1.msra.mxu0 0.0
    %2721 = vmatprep.subr.mxu0 0.0
    %2722 = vmatpush1.msra.mxu0 0.0
    %2723 = vmatprep.subr.mxu0 0.0
    %2724 = vmatpush1.msra.mxu0 0.0
    %2725 = vmatprep.subr.mxu0 0.0
    %2726 = vmatpush1.msra.mxu0 0.0
    %2727 = vmatprep.subr.mxu0 0.0
    %2728 = vmatpush1.msra.mxu0 0.0
    %2729 = vmatprep.subr.mxu0 0.0
    %2730 = vmatpush1.msra.mxu0 0.0
    %2731 = vmatprep.subr.mxu0 0.0
    %2732 = vmatpush1.msra.mxu0 0.0
    %2733 = vmatprep.mubr.f32.mxu0 0.0
    %2734 = vmatmul.mubr.f32.gmra.mrb[0].mxu0 %v2667
    %v2735 = vpop.f32.mrb[0].mxu0
    %v2736 = vadd.f32 %v216, %v2735
    %v2737 = vpop.f32.mrb[0].mxu0
    %2738 = vdwg.mxu0
    %v2739 = vxor.u32 %v2736, 2147483648
    %v2740 = vmul.f32 %v2739, 1.442695
    %v2741 = vpow.pop %v2740
    %v2742 = vadd.f32 %v2741, 1.0
    %v2743 = vrcp.pop %v2742
    %v2744 = vmul.f32 1.0, %v2743
    %v2745 = vtanh.pop %v2736
    %v2746 = vmul.f32 %v2744, %v2436
    %2748 = vrot.lane.b32.xlu0 %v2745, 88
    %v2749 = vpop.permute.xlu0 %2748
    %v2751 = vmul.f32 %v2744, %v2749
    %2753 = vrot.lane.b32.xlu0 %v2751, 20
    %v2754 = vpop.permute.xlu0 %2753
    %v2756 = vadd.f32 %v2746, %v2754
    %v2757 = vtanh.pop %v2756
    %2759 = vrot.lane.b32.xlu0 %v2757, 40
    %v2760 = vpop.permute.xlu0 %2759
    %v2762 = vmul.f32 %v2744, %v2760
    %2764 = vrot.lane.b32.xlu0 %v2762, 68
    %v2765 = vpop.permute.xlu0 %2764
    %v2766 = vsel %vm225, %v2765, 0
    %v2769 = vsel %vm229, %v196, 0
    %2771 = vmatprep.subr.mxu0 0.0
    %2772 = vmatpush1.msra.mxu0 %v194
    %2773 = vmatprep.subr.mxu0 0.0
    %2774 = vmatpush1.msra.mxu0 %v195
    %2775 = vmatprep.subr.mxu0 0.0
    %2776 = vmatpush1.msra.mxu0 %v2769
    %2777 = vmatprep.subr.mxu0 0.0
    %2778 = vmatpush1.msra.mxu0 0.0
    %2779 = vmatprep.subr.mxu0 0.0
    %2780 = vmatpush1.msra.mxu0 0.0
    %2781 = vmatprep.subr.mxu0 0.0
    %2782 = vmatpush1.msra.mxu0 0.0
    %2783 = vmatprep.subr.mxu0 0.0
    %2784 = vmatpush1.msra.mxu0 0.0
    %2785 = vmatprep.subr.mxu0 0.0
    %2786 = vmatpush1.msra.mxu0 0.0
    %2787 = vmatprep.subr.mxu0 0.0
    %2788 = vmatpush1.msra.mxu0 0.0
    %2789 = vmatprep.subr.mxu0 0.0
    %2790 = vmatpush1.msra.mxu0 0.0
    %2791 = vmatprep.subr.mxu0 0.0
    %2792 = vmatpush1.msra.mxu0 0.0
    %2793 = vmatprep.subr.mxu0 0.0
    %2794 = vmatpush1.msra.mxu0 0.0
    %2795 = vmatprep.subr.mxu0 0.0
    %2796 = vmatpush1.msra.mxu0 0.0
    %2797 = vmatprep.subr.mxu0 0.0
    %2798 = vmatpush1.msra.mxu0 0.0
    %2799 = vmatprep.subr.mxu0 0.0
    %2800 = vmatpush1.msra.mxu0 0.0
    %2801 = vmatprep.subr.mxu0 0.0
    %2802 = vmatpush1.msra.mxu0 0.0
    %2803 = vmatprep.subr.mxu0 0.0
    %2804 = vmatpush1.msra.mxu0 0.0
    %2805 = vmatprep.subr.mxu0 0.0
    %2806 = vmatpush1.msra.mxu0 0.0
    %2807 = vmatprep.subr.mxu0 0.0
    %2808 = vmatpush1.msra.mxu0 0.0
    %2809 = vmatprep.subr.mxu0 0.0
    %2810 = vmatpush1.msra.mxu0 0.0
    %2811 = vmatprep.subr.mxu0 0.0
    %2812 = vmatpush1.msra.mxu0 0.0
    %2813 = vmatprep.subr.mxu0 0.0
    %2814 = vmatpush1.msra.mxu0 0.0
    %2815 = vmatprep.subr.mxu0 0.0
    %2816 = vmatpush1.msra.mxu0 0.0
    %2817 = vmatprep.subr.mxu0 0.0
    %2818 = vmatpush1.msra.mxu0 0.0
    %2819 = vmatprep.subr.mxu0 0.0
    %2820 = vmatpush1.msra.mxu0 0.0
    %2821 = vmatprep.subr.mxu0 0.0
    %2822 = vmatpush1.msra.mxu0 0.0
    %2823 = vmatprep.subr.mxu0 0.0
    %2824 = vmatpush1.msra.mxu0 0.0
    %2825 = vmatprep.subr.mxu0 0.0
    %2826 = vmatpush1.msra.mxu0 0.0
    %2827 = vmatprep.subr.mxu0 0.0
    %2828 = vmatpush1.msra.mxu0 0.0
    %2829 = vmatprep.subr.mxu0 0.0
    %2830 = vmatpush1.msra.mxu0 0.0
    %2831 = vmatprep.subr.mxu0 0.0
    %2832 = vmatpush1.msra.mxu0 0.0
    %2833 = vmatprep.subr.mxu0 0.0
    %2834 = vmatpush1.msra.mxu0 0.0
    %2835 = vmatprep.mubr.f32.mxu0 0.0
    %2836 = vmatmul.mubr.f32.gmra.mrb[0].mxu0 %v2766
    %v2837 = vpop.f32.mrb[0].mxu0
    %v2838 = vadd.f32 %v223, %v2837
    %v2839 = vpop.f32.mrb[0].mxu0
    %2840 = vdwg.mxu0
    %vm2841 = vcmask 74752
    %2842 = vst.msk [vmem:[#allocation10] sm:$0x3] %vm2841, %v2838
    // Predicated region
    $region58: #{tpu_custom_call.1} parent=1 // pred_check
      _
    $region59: #{tpu_custom_call.1} parent=1 // pred_check_branch
      %2844 = sbr.rel (0) target = $region61
    $region60: #{tpu_custom_call.1} parent=1 // pred_region
      %s2846 = ssub.s32 32, 32
      %2847 = vsyncadd [#allocation4], %s2846
      %s2849 = sshll.u32 [#allocation10], 4
      %s2850 = int_to_ptr.vmem [resolvable:$true] %s2849
      %2852 = dma.vmem_to_hbm [thread:$0]  %s2850, 32, %s10, [#allocation4]
    $region61: #{tpu_custom_call.1} parent=1 // pred_fallthru
      _
    // Predicated region
    $region62: #{tpu_custom_call.1} parent=1 // pred_check
      _
    $region63: #{tpu_custom_call.1} parent=1 // pred_check_branch
      %2854 = sbr.rel (0) target = $region65
    $region64: #{tpu_custom_call.1} parent=1 // pred_region
      %2855 = dma.done [#allocation4], 32
    $region65: #{tpu_custom_call.1} parent=1 // pred_fallthru
      _
    %2856 = vsyncpa [#allocation3], 1
    %2857 = vsyncpa [#allocation6], 1
    %2858 = vsyncpa [#allocation9], 1
    %2859 = vsyncpa [#allocation4], 1

</llo_original>
